<compile_context>
chip_gen: v5e
topology: v5e:2x2
jax: 0.10.0
libtpu: 0.0.40
codegen_flags: <defaults>
</compile_context>

<pallas_src>
import math

import jax
import jax.numpy as jnp
from jax.experimental import pallas as pl
from jax.experimental.pallas import tpu as pltpu  # noqa: F401  (TPU backend)

# ---- small ViT config (structurally identical to vit_l_16 forward) ----
PATCH = 16
IMG = 32                        # -> (32/16)^2 = 4 patches
CH = 3
HIDDEN = 128
HEADS = 4
HEAD_DIM = HIDDEN // HEADS
MLP = 256
LAYERS = 2
CLASSES = 1000
CLASSES_PAD = 1024              # lane-padded head width (multiple of 128)
EPS = 1e-6                      # torchvision ViT uses LayerNorm(eps=1e-6)

N_PATCHES = (IMG // PATCH) ** 2     # 4
SEQ = N_PATCHES + 1                 # 5 tokens (CLS + patches)
PATCH_DIM = CH * PATCH * PATCH      # 768


# ----------------------------- kernel helpers -----------------------------
def _layernorm(x, w, b):
    mu = jnp.mean(x, axis=-1, keepdims=True)
    var = jnp.mean((x - mu) ** 2, axis=-1, keepdims=True)
    return (x - mu) * jax.lax.rsqrt(var + EPS) * w + b


def _gelu_exact(x):
    # nn.GELU() default = exact (erf) gelu
    return 0.5 * x * (1.0 + jax.lax.erf(x * (1.0 / math.sqrt(2.0))))


# ----------------------------- fused Pallas kernel -----------------------------
def _vit_fused_kernel(patches_ref, base_ref, patch_w_ref,
                      ln1w_ref, ln1b_ref, qkvw_ref, qkvb_ref, ow_ref, ob_ref,
                      ln2w_ref, ln2b_ref, f1w_ref, f1b_ref, f2w_ref, f2b_ref,
                      lnw_ref, lnb_ref, hw_ref, hb_ref,
                      o_ref):
    TOK = patches_ref.shape[0]          # B * SEQ
    B = TOK // SEQ
    scale = 1.0 / math.sqrt(HEAD_DIM)

    # ---- patch embed + CLS token + positional embedding (fused) ----
    # CLS rows of `patches` are zero, so the matmul contributes 0 there;
    # `base` carries cls_token+pos[0] on CLS rows and patch_bias+pos[1:] on
    # patch rows.
    x = jnp.dot(patches_ref[...], patch_w_ref[...],
                preferred_element_type=jnp.float32) + base_ref[...]

    # ---- encoder layers: static unroll, stacked weights resident in VMEM ----
    for l in range(LAYERS):
        # pre-LN multi-head self-attention
        h = _layernorm(x, ln1w_ref[l], ln1b_ref[l])
        qkv = jnp.dot(h, qkvw_ref[l],
                      preferred_element_type=jnp.float32) + qkvb_ref[l]
        q = qkv[:, :HIDDEN]                 # 128-lane-aligned slices
        k = qkv[:, HIDDEN:2 * HIDDEN]
        v = qkv[:, 2 * HIDDEN:]

        ow_l = ow_ref[l]                    # (HIDDEN, HIDDEN)
        attn = jnp.zeros((TOK, HIDDEN), jnp.float32)
        for hd in range(HEADS):             # static, small; batched over B
            sl = slice(hd * HEAD_DIM, (hd + 1) * HEAD_DIM)
            qh = q[:, sl].reshape(B, SEQ, HEAD_DIM)
            kh = k[:, sl].reshape(B, SEQ, HEAD_DIM)
            vh = v[:, sl].reshape(B, SEQ, HEAD_DIM)
            s = jnp.einsum('bqd,bkd->bqk', qh, kh,
                           preferred_element_type=jnp.float32) * scale
            s = s - jnp.max(s, axis=-1, keepdims=True)
            e = jnp.exp(s)
            p = e * pl.reciprocal(jnp.sum(e, axis=-1, keepdims=True),
                                  approx=True)
            ctx = jnp.einsum('bqk,bkd->bqd', p, vh,
                             preferred_element_type=jnp.float32)
            # per-head output projection via row-slice of the weight:
            # avoids concatenating 32-lane contexts along the lane axis.
            attn = attn + jnp.dot(ctx.reshape(TOK, HEAD_DIM), ow_l[sl, :],
                                  preferred_element_type=jnp.float32)
        y = x + attn + ob_ref[l]

        # MLP
        h2 = _layernorm(y, ln2w_ref[l], ln2b_ref[l])
        m = jnp.dot(h2, f1w_ref[l],
                    preferred_element_type=jnp.float32) + f1b_ref[l]
        m = _gelu_exact(m)
        m = jnp.dot(m, f2w_ref[l],
                    preferred_element_type=jnp.float32) + f2b_ref[l]
        x = y + m

    # ---- final LayerNorm + classification head on CLS tokens only ----
    cls_x = jnp.concatenate([x[b * SEQ:b * SEQ + 1, :] for b in range(B)],
                            axis=0)                         # (B, HIDDEN)
    hc = _layernorm(cls_x, lnw_ref[...], lnb_ref[...])
    o_ref[...] = jnp.dot(hc, hw_ref[...],
                         preferred_element_type=jnp.float32) + hb_ref[...]


# ----------------------------- forward (glue) -----------------------------
def vit_forward(x, params):
    B, C, H, W = x.shape
    Hp, Wp = H // PATCH, W // PATCH
    N = Hp * Wp
    S = N + 1

    # patch extraction: per-patch vector ordered (c, ph, pw) — matches the
    # conv_proj weight flattening — patches row-major over the image.
    patches = x.reshape(B, C, Hp, PATCH, Wp, PATCH)
    patches = patches.transpose(0, 2, 4, 1, 3, 5).reshape(B, N, C * PATCH * PATCH)
    # prepend a zero row per image: that row becomes the CLS token after the
    # fused  patches @ W + base  inside the kernel.
    patches = jnp.pad(patches, ((0, 0), (1, 0), (0, 0))).reshape(B * S, -1)

    # additive base: cls_token + pos[0] on CLS rows, patch_bias + pos[1:] else.
    pos = params['pos_emb'][0]                               # (S, D)
    base_one = jnp.concatenate(
        [params['cls_token'][0] + pos[0:1],
         params['patch_b'] + pos[1:]], axis=0)               # (S, D)
    base = jnp.tile(base_one, (B, 1))                        # (B*S, D)

    # stack per-layer weights along a leading L axis (static index in kernel).
    layers = params['layers']

    def stk(name):
        return jnp.stack([lp[name] for lp in layers], axis=0)

    # lane-pad the 1000-class head to 1024 (unmasked stores, clean MXU tiles).
    hw = jnp.pad(params['head_w'], ((0, 0), (0, CLASSES_PAD - CLASSES)))
    hb = jnp.pad(params['head_b'], ((0, 0), (0, CLASSES_PAD - CLASSES)))

    logits_pad = pl.pallas_call(
        _vit_fused_kernel,
        out_shape=jax.ShapeDtypeStruct((B, CLASSES_PAD), jnp.float32),
    )(patches, base, params['patch_w'],
      stk('ln1w'), stk('ln1b'), stk('qkvw'), stk('qkvb'), stk('ow'), stk('ob'),
      stk('ln2w'), stk('ln2b'), stk('f1w'), stk('f1b'), stk('f2w'), stk('f2b'),
      params['ln_w'], params['ln_b'], hw, hb)

    return logits_pad[:, :CLASSES]


# ----------------------------- parameter init -----------------------------
def init_params(key):
    s = 0.02
    K = CH * PATCH * PATCH
    N = (IMG // PATCH) ** 2
    keys = jax.random.split(key, 4 + LAYERS)
    p = {
        'patch_w': jax.random.normal(keys[0], (K, HIDDEN), jnp.float32) * s,
        'patch_b': jnp.zeros((1, HIDDEN), jnp.float32),
        'cls_token': jax.random.normal(keys[1], (1, 1, HIDDEN), jnp.float32) * s,
        'pos_emb': jax.random.normal(keys[2], (1, N + 1, HIDDEN), jnp.float32) * s,
        'ln_w': jnp.ones((1, HIDDEN), jnp.float32),
        'ln_b': jnp.zeros((1, HIDDEN), jnp.float32),
        'head_w': jax.random.normal(keys[3], (HIDDEN, CLASSES), jnp.float32) * s,
        'head_b': jnp.zeros((1, CLASSES), jnp.float32),
    }
    layers = []
    for i in range(LAYERS):
        lk = jax.random.split(keys[4 + i], 4)
        layers.append(dict(
            ln1w=jnp.ones((1, HIDDEN), jnp.float32),
            ln1b=jnp.zeros((1, HIDDEN), jnp.float32),
            qkvw=jax.random.normal(lk[0], (HIDDEN, 3 * HIDDEN), jnp.float32) * s,
            qkvb=jnp.zeros((1, 3 * HIDDEN), jnp.float32),
            ow=jax.random.normal(lk[1], (HIDDEN, HIDDEN), jnp.float32) * s,
            ob=jnp.zeros((1, HIDDEN), jnp.float32),
            ln2w=jnp.ones((1, HIDDEN), jnp.float32),
            ln2b=jnp.zeros((1, HIDDEN), jnp.float32),
            f1w=jax.random.normal(lk[2], (HIDDEN, MLP), jnp.float32) * s,
            f1b=jnp.zeros((1, MLP), jnp.float32),
            f2w=jax.random.normal(lk[3], (MLP, HIDDEN), jnp.float32) * s,
            f2b=jnp.zeros((1, HIDDEN), jnp.float32),
        ))
    p['layers'] = layers
    return p


if __name__ == "__main__":
    key = jax.random.PRNGKey(0)
    kx, kp = jax.random.split(key)
    x = jax.random.normal(kx, (2, CH, IMG, IMG), jnp.float32)   # NCHW
    params = init_params(kp)

    fwd = jax.jit(vit_forward)          # one XLA program: prep + fused kernel
    logits = fwd(x, params)
    logits = jax.block_until_ready(logits)
    assert logits.shape == (2, CLASSES) and jnp.all(jnp.isfinite(logits))
    print("KERNEL_OK")
</pallas_src>

<mosaic_0001>
module attributes {stable_mosaic.version = 11 : i64} {
  func.func @_vit_fused_kernel(%arg0: memref<10x768xf32, #tpu.memory_space<vmem>>, %arg1: memref<10x128xf32, #tpu.memory_space<vmem>>, %arg2: memref<768x128xf32, #tpu.memory_space<vmem>>, %arg3: memref<2x1x128xf32, #tpu.memory_space<vmem>>, %arg4: memref<2x1x128xf32, #tpu.memory_space<vmem>>, %arg5: memref<2x128x384xf32, #tpu.memory_space<vmem>>, %arg6: memref<2x1x384xf32, #tpu.memory_space<vmem>>, %arg7: memref<2x128x128xf32, #tpu.memory_space<vmem>>, %arg8: memref<2x1x128xf32, #tpu.memory_space<vmem>>, %arg9: memref<2x1x128xf32, #tpu.memory_space<vmem>>, %arg10: memref<2x1x128xf32, #tpu.memory_space<vmem>>, %arg11: memref<2x128x256xf32, #tpu.memory_space<vmem>>, %arg12: memref<2x1x256xf32, #tpu.memory_space<vmem>>, %arg13: memref<2x256x128xf32, #tpu.memory_space<vmem>>, %arg14: memref<2x1x128xf32, #tpu.memory_space<vmem>>, %arg15: memref<1x128xf32, #tpu.memory_space<vmem>>, %arg16: memref<1x128xf32, #tpu.memory_space<vmem>>, %arg17: memref<128x1024xf32, #tpu.memory_space<vmem>>, %arg18: memref<1x1024xf32, #tpu.memory_space<vmem>>, %arg19: memref<2x1024xf32, #tpu.memory_space<vmem>>) attributes {dimension_semantics = [], scalar_prefetch = 0 : i64, scratch_operands = 0 : i64, tpu.core_type = #tpu.core_type<tc>} {
    %c0 = arith.constant 0 : index
    %c0_0 = arith.constant 0 : index
    %0 = vector.load %arg0[%c0, %c0_0] : memref<10x768xf32, #tpu.memory_space<vmem>>, vector<10x768xf32>
    %c0_1 = arith.constant 0 : index
    %c0_2 = arith.constant 0 : index
    %1 = vector.load %arg2[%c0_1, %c0_2] : memref<768x128xf32, #tpu.memory_space<vmem>>, vector<768x128xf32>
    %cst = arith.constant dense<0.000000e+00> : vector<10x128xf32>
    %2 = tpu.matmul %0, %1, %cst {dimension_numbers = #tpu.dot_dimension_numbers<[1], [0], [0], [1], [0, 0, 1, 1], [], []>} : vector<10x768xf32>, vector<768x128xf32>, vector<10x128xf32> -> vector<10x128xf32>
    %c0_3 = arith.constant 0 : index
    %c0_4 = arith.constant 0 : index
    %3 = vector.load %arg1[%c0_3, %c0_4] : memref<10x128xf32, #tpu.memory_space<vmem>>, vector<10x128xf32>
    %4 = arith.addf %2, %3 : vector<10x128xf32>
    %c0_5 = arith.constant 0 : index
    %c0_6 = arith.constant 0 : index
    %c0_7 = arith.constant 0 : index
    %5 = vector.load %arg3[%c0_5, %c0_6, %c0_7] : memref<2x1x128xf32, #tpu.memory_space<vmem>>, vector<1x1x128xf32>
    %6 = vector.shape_cast %5 : vector<1x1x128xf32> to vector<1x128xf32>
    %c0_8 = arith.constant 0 : index
    %c0_9 = arith.constant 0 : index
    %c0_10 = arith.constant 0 : index
    %7 = vector.load %arg4[%c0_8, %c0_9, %c0_10] : memref<2x1x128xf32, #tpu.memory_space<vmem>>, vector<1x1x128xf32>
    %8 = vector.shape_cast %7 : vector<1x1x128xf32> to vector<1x128xf32>
    %cst_11 = arith.constant dense<0.000000e+00> : vector<10xf32>
    %9 = vector.multi_reduction <add>, %4, %cst_11 [1] : vector<10x128xf32> to vector<10xf32>
    %10 = vector.shape_cast %9 : vector<10xf32> to vector<10x1xf32>
    %cst_12 = arith.constant 1.280000e+02 : f32
    %11 = vector.broadcast %cst_12 : f32 to vector<10x1xf32>
    %12 = arith.divf %10, %11 : vector<10x1xf32>
    %13 = vector.broadcast %12 : vector<10x1xf32> to vector<10x128xf32>
    %14 = arith.subf %4, %13 : vector<10x128xf32>
    %15 = arith.mulf %14, %14 : vector<10x128xf32>
    %cst_13 = arith.constant dense<0.000000e+00> : vector<10xf32>
    %16 = vector.multi_reduction <add>, %15, %cst_13 [1] : vector<10x128xf32> to vector<10xf32>
    %17 = vector.shape_cast %16 : vector<10xf32> to vector<10x1xf32>
    %cst_14 = arith.constant 1.280000e+02 : f32
    %18 = vector.broadcast %cst_14 : f32 to vector<10x1xf32>
    %19 = arith.divf %17, %18 : vector<10x1xf32>
    %20 = vector.broadcast %12 : vector<10x1xf32> to vector<10x128xf32>
    %21 = arith.subf %4, %20 : vector<10x128xf32>
    %cst_15 = arith.constant 9.99999997E-7 : f32
    %22 = vector.broadcast %cst_15 : f32 to vector<10x1xf32>
    %23 = arith.addf %19, %22 : vector<10x1xf32>
    %24 = math.rsqrt %23 : vector<10x1xf32>
    %25 = vector.broadcast %24 : vector<10x1xf32> to vector<10x128xf32>
    %26 = arith.mulf %21, %25 : vector<10x128xf32>
    %27 = vector.broadcast %6 : vector<1x128xf32> to vector<10x128xf32>
    %28 = arith.mulf %26, %27 : vector<10x128xf32>
    %29 = vector.broadcast %8 : vector<1x128xf32> to vector<10x128xf32>
    %30 = arith.addf %28, %29 : vector<10x128xf32>
    %c0_16 = arith.constant 0 : index
    %c0_17 = arith.constant 0 : index
    %c0_18 = arith.constant 0 : index
    %31 = vector.load %arg5[%c0_16, %c0_17, %c0_18] : memref<2x128x384xf32, #tpu.memory_space<vmem>>, vector<1x128x384xf32>
    %32 = vector.shape_cast %31 : vector<1x128x384xf32> to vector<128x384xf32>
    %cst_19 = arith.constant dense<0.000000e+00> : vector<10x384xf32>
    %33 = tpu.matmul %30, %32, %cst_19 {dimension_numbers = #tpu.dot_dimension_numbers<[1], [0], [0], [1], [0, 0, 1, 1], [], []>} : vector<10x128xf32>, vector<128x384xf32>, vector<10x384xf32> -> vector<10x384xf32>
    %c0_20 = arith.constant 0 : index
    %c0_21 = arith.constant 0 : index
    %c0_22 = arith.constant 0 : index
    %34 = vector.load %arg6[%c0_20, %c0_21, %c0_22] : memref<2x1x384xf32, #tpu.memory_space<vmem>>, vector<1x1x384xf32>
    %35 = vector.shape_cast %34 : vector<1x1x384xf32> to vector<1x384xf32>
    %36 = vector.broadcast %35 : vector<1x384xf32> to vector<10x384xf32>
    %37 = arith.addf %33, %36 : vector<10x384xf32>
    %38 = vector.extract_strided_slice %37 {offsets = [0, 0], sizes = [10, 128], strides = [1, 1]} : vector<10x384xf32> to vector<10x128xf32>
    %39 = vector.extract_strided_slice %37 {offsets = [0, 128], sizes = [10, 128], strides = [1, 1]} : vector<10x384xf32> to vector<10x128xf32>
    %40 = vector.extract_strided_slice %37 {offsets = [0, 256], sizes = [10, 128], strides = [1, 1]} : vector<10x384xf32> to vector<10x128xf32>
    %c0_23 = arith.constant 0 : index
    %c0_24 = arith.constant 0 : index
    %c0_25 = arith.constant 0 : index
    %41 = vector.load %arg7[%c0_23, %c0_24, %c0_25] : memref<2x128x128xf32, #tpu.memory_space<vmem>>, vector<1x128x128xf32>
    %42 = vector.shape_cast %41 : vector<1x128x128xf32> to vector<128x128xf32>
    %cst_26 = arith.constant 0.000000e+00 : f32
    %43 = vector.broadcast %cst_26 : f32 to vector<10x128xf32>
    %44 = vector.extract_strided_slice %38 {offsets = [0, 0], sizes = [10, 32], strides = [1, 1]} : vector<10x128xf32> to vector<10x32xf32>
    %45 = vector.shape_cast %44 : vector<10x32xf32> to vector<2x5x32xf32>
    %46 = vector.extract_strided_slice %39 {offsets = [0, 0], sizes = [10, 32], strides = [1, 1]} : vector<10x128xf32> to vector<10x32xf32>
    %47 = vector.shape_cast %46 : vector<10x32xf32> to vector<2x5x32xf32>
    %48 = vector.extract_strided_slice %40 {offsets = [0, 0], sizes = [10, 32], strides = [1, 1]} : vector<10x128xf32> to vector<10x32xf32>
    %49 = vector.shape_cast %48 : vector<10x32xf32> to vector<2x5x32xf32>
    "tpu.trace_start"() <{level = 10 : i32, message = "bqd,bkd->bqk"}> : () -> ()
    %cst_27 = arith.constant dense<0.000000e+00> : vector<2x5x5xf32>
    %50 = tpu.matmul %45, %47, %cst_27 {dimension_numbers = #tpu.dot_dimension_numbers<[2], [2], [1], [1], [0, 0, 0, 1, 1, 1], [0], [0]>} : vector<2x5x32xf32>, vector<2x5x32xf32>, vector<2x5x5xf32> -> vector<2x5x5xf32>
    "tpu.trace_stop"() : () -> ()
    %cst_28 = arith.constant 0.176776692 : f32
    %51 = vector.broadcast %cst_28 : f32 to vector<2x5x5xf32>
    %52 = arith.mulf %50, %51 : vector<2x5x5xf32>
    %cst_29 = arith.constant dense<0xFF800000> : vector<2x5xf32>
    %53 = vector.multi_reduction <maximumf>, %52, %cst_29 [2] : vector<2x5x5xf32> to vector<2x5xf32>
    %54 = vector.shape_cast %53 : vector<2x5xf32> to vector<2x5x1xf32>
    %55 = vector.broadcast %54 : vector<2x5x1xf32> to vector<2x5x5xf32>
    %56 = arith.subf %52, %55 : vector<2x5x5xf32>
    %57 = math.exp %56 : vector<2x5x5xf32>
    %cst_30 = arith.constant dense<0.000000e+00> : vector<2x5xf32>
    %58 = vector.multi_reduction <add>, %57, %cst_30 [2] : vector<2x5x5xf32> to vector<2x5xf32>
    %59 = vector.shape_cast %58 : vector<2x5xf32> to vector<2x5x1xf32>
    %60 = tpu.reciprocal %59 {approx = true} : vector<2x5x1xf32> -> vector<2x5x1xf32>
    %61 = vector.broadcast %60 : vector<2x5x1xf32> to vector<2x5x5xf32>
    %62 = arith.mulf %57, %61 : vector<2x5x5xf32>
    "tpu.trace_start"() <{level = 10 : i32, message = "bqk,bkd->bqd"}> : () -> ()
    %cst_31 = arith.constant dense<0.000000e+00> : vector<2x5x32xf32>
    %63 = tpu.matmul %62, %49, %cst_31 {dimension_numbers = #tpu.dot_dimension_numbers<[2], [1], [1], [2], [0, 0, 0, 1, 1, 2], [0], [0]>} : vector<2x5x5xf32>, vector<2x5x32xf32>, vector<2x5x32xf32> -> vector<2x5x32xf32>
    "tpu.trace_stop"() : () -> ()
    %64 = vector.shape_cast %63 : vector<2x5x32xf32> to vector<10x32xf32>
    %65 = vector.extract_strided_slice %42 {offsets = [0, 0], sizes = [32, 128], strides = [1, 1]} : vector<128x128xf32> to vector<32x128xf32>
    %cst_32 = arith.constant dense<0.000000e+00> : vector<10x128xf32>
    %66 = tpu.matmul %64, %65, %cst_32 {dimension_numbers = #tpu.dot_dimension_numbers<[1], [0], [0], [1], [0, 0, 1, 1], [], []>} : vector<10x32xf32>, vector<32x128xf32>, vector<10x128xf32> -> vector<10x128xf32>
    %67 = arith.addf %43, %66 : vector<10x128xf32>
    %68 = vector.extract_strided_slice %38 {offsets = [0, 32], sizes = [10, 32], strides = [1, 1]} : vector<10x128xf32> to vector<10x32xf32>
    %69 = vector.shape_cast %68 : vector<10x32xf32> to vector<2x5x32xf32>
    %70 = vector.extract_strided_slice %39 {offsets = [0, 32], sizes = [10, 32], strides = [1, 1]} : vector<10x128xf32> to vector<10x32xf32>
    %71 = vector.shape_cast %70 : vector<10x32xf32> to vector<2x5x32xf32>
    %72 = vector.extract_strided_slice %40 {offsets = [0, 32], sizes = [10, 32], strides = [1, 1]} : vector<10x128xf32> to vector<10x32xf32>
    %73 = vector.shape_cast %72 : vector<10x32xf32> to vector<2x5x32xf32>
    "tpu.trace_start"() <{level = 10 : i32, message = "bqd,bkd->bqk"}> : () -> ()
    %cst_33 = arith.constant dense<0.000000e+00> : vector<2x5x5xf32>
    %74 = tpu.matmul %69, %71, %cst_33 {dimension_numbers = #tpu.dot_dimension_numbers<[2], [2], [1], [1], [0, 0, 0, 1, 1, 1], [0], [0]>} : vector<2x5x32xf32>, vector<2x5x32xf32>, vector<2x5x5xf32> -> vector<2x5x5xf32>
    "tpu.trace_stop"() : () -> ()
    %cst_34 = arith.constant 0.176776692 : f32
    %75 = vector.broadcast %cst_34 : f32 to vector<2x5x5xf32>
    %76 = arith.mulf %74, %75 : vector<2x5x5xf32>
    %cst_35 = arith.constant dense<0xFF800000> : vector<2x5xf32>
    %77 = vector.multi_reduction <maximumf>, %76, %cst_35 [2] : vector<2x5x5xf32> to vector<2x5xf32>
    %78 = vector.shape_cast %77 : vector<2x5xf32> to vector<2x5x1xf32>
    %79 = vector.broadcast %78 : vector<2x5x1xf32> to vector<2x5x5xf32>
    %80 = arith.subf %76, %79 : vector<2x5x5xf32>
    %81 = math.exp %80 : vector<2x5x5xf32>
    %cst_36 = arith.constant dense<0.000000e+00> : vector<2x5xf32>
    %82 = vector.multi_reduction <add>, %81, %cst_36 [2] : vector<2x5x5xf32> to vector<2x5xf32>
    %83 = vector.shape_cast %82 : vector<2x5xf32> to vector<2x5x1xf32>
    %84 = tpu.reciprocal %83 {approx = true} : vector<2x5x1xf32> -> vector<2x5x1xf32>
    %85 = vector.broadcast %84 : vector<2x5x1xf32> to vector<2x5x5xf32>
    %86 = arith.mulf %81, %85 : vector<2x5x5xf32>
    "tpu.trace_start"() <{level = 10 : i32, message = "bqk,bkd->bqd"}> : () -> ()
    %cst_37 = arith.constant dense<0.000000e+00> : vector<2x5x32xf32>
    %87 = tpu.matmul %86, %73, %cst_37 {dimension_numbers = #tpu.dot_dimension_numbers<[2], [1], [1], [2], [0, 0, 0, 1, 1, 2], [0], [0]>} : vector<2x5x5xf32>, vector<2x5x32xf32>, vector<2x5x32xf32> -> vector<2x5x32xf32>
    "tpu.trace_stop"() : () -> ()
    %88 = vector.shape_cast %87 : vector<2x5x32xf32> to vector<10x32xf32>
    %89 = vector.extract_strided_slice %42 {offsets = [32, 0], sizes = [32, 128], strides = [1, 1]} : vector<128x128xf32> to vector<32x128xf32>
    %cst_38 = arith.constant dense<0.000000e+00> : vector<10x128xf32>
    %90 = tpu.matmul %88, %89, %cst_38 {dimension_numbers = #tpu.dot_dimension_numbers<[1], [0], [0], [1], [0, 0, 1, 1], [], []>} : vector<10x32xf32>, vector<32x128xf32>, vector<10x128xf32> -> vector<10x128xf32>
    %91 = arith.addf %67, %90 : vector<10x128xf32>
    %92 = vector.extract_strided_slice %38 {offsets = [0, 64], sizes = [10, 32], strides = [1, 1]} : vector<10x128xf32> to vector<10x32xf32>
    %93 = vector.shape_cast %92 : vector<10x32xf32> to vector<2x5x32xf32>
    %94 = vector.extract_strided_slice %39 {offsets = [0, 64], sizes = [10, 32], strides = [1, 1]} : vector<10x128xf32> to vector<10x32xf32>
    %95 = vector.shape_cast %94 : vector<10x32xf32> to vector<2x5x32xf32>
    %96 = vector.extract_strided_slice %40 {offsets = [0, 64], sizes = [10, 32], strides = [1, 1]} : vector<10x128xf32> to vector<10x32xf32>
    %97 = vector.shape_cast %96 : vector<10x32xf32> to vector<2x5x32xf32>
    "tpu.trace_start"() <{level = 10 : i32, message = "bqd,bkd->bqk"}> : () -> ()
    %cst_39 = arith.constant dense<0.000000e+00> : vector<2x5x5xf32>
    %98 = tpu.matmul %93, %95, %cst_39 {dimension_numbers = #tpu.dot_dimension_numbers<[2], [2], [1], [1], [0, 0, 0, 1, 1, 1], [0], [0]>} : vector<2x5x32xf32>, vector<2x5x32xf32>, vector<2x5x5xf32> -> vector<2x5x5xf32>
    "tpu.trace_stop"() : () -> ()
    %cst_40 = arith.constant 0.176776692 : f32
    %99 = vector.broadcast %cst_40 : f32 to vector<2x5x5xf32>
    %100 = arith.mulf %98, %99 : vector<2x5x5xf32>
    %cst_41 = arith.constant dense<0xFF800000> : vector<2x5xf32>
    %101 = vector.multi_reduction <maximumf>, %100, %cst_41 [2] : vector<2x5x5xf32> to vector<2x5xf32>
    %102 = vector.shape_cast %101 : vector<2x5xf32> to vector<2x5x1xf32>
    %103 = vector.broadcast %102 : vector<2x5x1xf32> to vector<2x5x5xf32>
    %104 = arith.subf %100, %103 : vector<2x5x5xf32>
    %105 = math.exp %104 : vector<2x5x5xf32>
    %cst_42 = arith.constant dense<0.000000e+00> : vector<2x5xf32>
    %106 = vector.multi_reduction <add>, %105, %cst_42 [2] : vector<2x5x5xf32> to vector<2x5xf32>
    %107 = vector.shape_cast %106 : vector<2x5xf32> to vector<2x5x1xf32>
    %108 = tpu.reciprocal %107 {approx = true} : vector<2x5x1xf32> -> vector<2x5x1xf32>
    %109 = vector.broadcast %108 : vector<2x5x1xf32> to vector<2x5x5xf32>
    %110 = arith.mulf %105, %109 : vector<2x5x5xf32>
    "tpu.trace_start"() <{level = 10 : i32, message = "bqk,bkd->bqd"}> : () -> ()
    %cst_43 = arith.constant dense<0.000000e+00> : vector<2x5x32xf32>
    %111 = tpu.matmul %110, %97, %cst_43 {dimension_numbers = #tpu.dot_dimension_numbers<[2], [1], [1], [2], [0, 0, 0, 1, 1, 2], [0], [0]>} : vector<2x5x5xf32>, vector<2x5x32xf32>, vector<2x5x32xf32> -> vector<2x5x32xf32>
    "tpu.trace_stop"() : () -> ()
    %112 = vector.shape_cast %111 : vector<2x5x32xf32> to vector<10x32xf32>
    %113 = vector.extract_strided_slice %42 {offsets = [64, 0], sizes = [32, 128], strides = [1, 1]} : vector<128x128xf32> to vector<32x128xf32>
    %cst_44 = arith.constant dense<0.000000e+00> : vector<10x128xf32>
    %114 = tpu.matmul %112, %113, %cst_44 {dimension_numbers = #tpu.dot_dimension_numbers<[1], [0], [0], [1], [0, 0, 1, 1], [], []>} : vector<10x32xf32>, vector<32x128xf32>, vector<10x128xf32> -> vector<10x128xf32>
    %115 = arith.addf %91, %114 : vector<10x128xf32>
    %116 = vector.extract_strided_slice %38 {offsets = [0, 96], sizes = [10, 32], strides = [1, 1]} : vector<10x128xf32> to vector<10x32xf32>
    %117 = vector.shape_cast %116 : vector<10x32xf32> to vector<2x5x32xf32>
    %118 = vector.extract_strided_slice %39 {offsets = [0, 96], sizes = [10, 32], strides = [1, 1]} : vector<10x128xf32> to vector<10x32xf32>
    %119 = vector.shape_cast %118 : vector<10x32xf32> to vector<2x5x32xf32>
    %120 = vector.extract_strided_slice %40 {offsets = [0, 96], sizes = [10, 32], strides = [1, 1]} : vector<10x128xf32> to vector<10x32xf32>
    %121 = vector.shape_cast %120 : vector<10x32xf32> to vector<2x5x32xf32>
    "tpu.trace_start"() <{level = 10 : i32, message = "bqd,bkd->bqk"}> : () -> ()
    %cst_45 = arith.constant dense<0.000000e+00> : vector<2x5x5xf32>
    %122 = tpu.matmul %117, %119, %cst_45 {dimension_numbers = #tpu.dot_dimension_numbers<[2], [2], [1], [1], [0, 0, 0, 1, 1, 1], [0], [0]>} : vector<2x5x32xf32>, vector<2x5x32xf32>, vector<2x5x5xf32> -> vector<2x5x5xf32>
    "tpu.trace_stop"() : () -> ()
    %cst_46 = arith.constant 0.176776692 : f32
    %123 = vector.broadcast %cst_46 : f32 to vector<2x5x5xf32>
    %124 = arith.mulf %122, %123 : vector<2x5x5xf32>
    %cst_47 = arith.constant dense<0xFF800000> : vector<2x5xf32>
    %125 = vector.multi_reduction <maximumf>, %124, %cst_47 [2] : vector<2x5x5xf32> to vector<2x5xf32>
    %126 = vector.shape_cast %125 : vector<2x5xf32> to vector<2x5x1xf32>
    %127 = vector.broadcast %126 : vector<2x5x1xf32> to vector<2x5x5xf32>
    %128 = arith.subf %124, %127 : vector<2x5x5xf32>
    %129 = math.exp %128 : vector<2x5x5xf32>
    %cst_48 = arith.constant dense<0.000000e+00> : vector<2x5xf32>
    %130 = vector.multi_reduction <add>, %129, %cst_48 [2] : vector<2x5x5xf32> to vector<2x5xf32>
    %131 = vector.shape_cast %130 : vector<2x5xf32> to vector<2x5x1xf32>
    %132 = tpu.reciprocal %131 {approx = true} : vector<2x5x1xf32> -> vector<2x5x1xf32>
    %133 = vector.broadcast %132 : vector<2x5x1xf32> to vector<2x5x5xf32>
    %134 = arith.mulf %129, %133 : vector<2x5x5xf32>
    "tpu.trace_start"() <{level = 10 : i32, message = "bqk,bkd->bqd"}> : () -> ()
    %cst_49 = arith.constant dense<0.000000e+00> : vector<2x5x32xf32>
    %135 = tpu.matmul %134, %121, %cst_49 {dimension_numbers = #tpu.dot_dimension_numbers<[2], [1], [1], [2], [0, 0, 0, 1, 1, 2], [0], [0]>} : vector<2x5x5xf32>, vector<2x5x32xf32>, vector<2x5x32xf32> -> vector<2x5x32xf32>
    "tpu.trace_stop"() : () -> ()
    %136 = vector.shape_cast %135 : vector<2x5x32xf32> to vector<10x32xf32>
    %137 = vector.extract_strided_slice %42 {offsets = [96, 0], sizes = [32, 128], strides = [1, 1]} : vector<128x128xf32> to vector<32x128xf32>
    %cst_50 = arith.constant dense<0.000000e+00> : vector<10x128xf32>
    %138 = tpu.matmul %136, %137, %cst_50 {dimension_numbers = #tpu.dot_dimension_numbers<[1], [0], [0], [1], [0, 0, 1, 1], [], []>} : vector<10x32xf32>, vector<32x128xf32>, vector<10x128xf32> -> vector<10x128xf32>
    %139 = arith.addf %115, %138 : vector<10x128xf32>
    %140 = arith.addf %4, %139 : vector<10x128xf32>
    %c0_51 = arith.constant 0 : index
    %c0_52 = arith.constant 0 : index
    %c0_53 = arith.constant 0 : index
    %141 = vector.load %arg8[%c0_51, %c0_52, %c0_53] : memref<2x1x128xf32, #tpu.memory_space<vmem>>, vector<1x1x128xf32>
    %142 = vector.shape_cast %141 : vector<1x1x128xf32> to vector<1x128xf32>
    %143 = vector.broadcast %142 : vector<1x128xf32> to vector<10x128xf32>
    %144 = arith.addf %140, %143 : vector<10x128xf32>
    %c0_54 = arith.constant 0 : index
    %c0_55 = arith.constant 0 : index
    %c0_56 = arith.constant 0 : index
    %145 = vector.load %arg9[%c0_54, %c0_55, %c0_56] : memref<2x1x128xf32, #tpu.memory_space<vmem>>, vector<1x1x128xf32>
    %146 = vector.shape_cast %145 : vector<1x1x128xf32> to vector<1x128xf32>
    %c0_57 = arith.constant 0 : index
    %c0_58 = arith.constant 0 : index
    %c0_59 = arith.constant 0 : index
    %147 = vector.load %arg10[%c0_57, %c0_58, %c0_59] : memref<2x1x128xf32, #tpu.memory_space<vmem>>, vector<1x1x128xf32>
    %148 = vector.shape_cast %147 : vector<1x1x128xf32> to vector<1x128xf32>
    %cst_60 = arith.constant dense<0.000000e+00> : vector<10xf32>
    %149 = vector.multi_reduction <add>, %144, %cst_60 [1] : vector<10x128xf32> to vector<10xf32>
    %150 = vector.shape_cast %149 : vector<10xf32> to vector<10x1xf32>
    %cst_61 = arith.constant 1.280000e+02 : f32
    %151 = vector.broadcast %cst_61 : f32 to vector<10x1xf32>
    %152 = arith.divf %150, %151 : vector<10x1xf32>
    %153 = vector.broadcast %152 : vector<10x1xf32> to vector<10x128xf32>
    %154 = arith.subf %144, %153 : vector<10x128xf32>
    %155 = arith.mulf %154, %154 : vector<10x128xf32>
    %cst_62 = arith.constant dense<0.000000e+00> : vector<10xf32>
    %156 = vector.multi_reduction <add>, %155, %cst_62 [1] : vector<10x128xf32> to vector<10xf32>
    %157 = vector.shape_cast %156 : vector<10xf32> to vector<10x1xf32>
    %cst_63 = arith.constant 1.280000e+02 : f32
    %158 = vector.broadcast %cst_63 : f32 to vector<10x1xf32>
    %159 = arith.divf %157, %158 : vector<10x1xf32>
    %160 = vector.broadcast %152 : vector<10x1xf32> to vector<10x128xf32>
    %161 = arith.subf %144, %160 : vector<10x128xf32>
    %cst_64 = arith.constant 9.99999997E-7 : f32
    %162 = vector.broadcast %cst_64 : f32 to vector<10x1xf32>
    %163 = arith.addf %159, %162 : vector<10x1xf32>
    %164 = math.rsqrt %163 : vector<10x1xf32>
    %165 = vector.broadcast %164 : vector<10x1xf32> to vector<10x128xf32>
    %166 = arith.mulf %161, %165 : vector<10x128xf32>
    %167 = vector.broadcast %146 : vector<1x128xf32> to vector<10x128xf32>
    %168 = arith.mulf %166, %167 : vector<10x128xf32>
    %169 = vector.broadcast %148 : vector<1x128xf32> to vector<10x128xf32>
    %170 = arith.addf %168, %169 : vector<10x128xf32>
    %c0_65 = arith.constant 0 : index
    %c0_66 = arith.constant 0 : index
    %c0_67 = arith.constant 0 : index
    %171 = vector.load %arg11[%c0_65, %c0_66, %c0_67] : memref<2x128x256xf32, #tpu.memory_space<vmem>>, vector<1x128x256xf32>
    %172 = vector.shape_cast %171 : vector<1x128x256xf32> to vector<128x256xf32>
    %cst_68 = arith.constant dense<0.000000e+00> : vector<10x256xf32>
    %173 = tpu.matmul %170, %172, %cst_68 {dimension_numbers = #tpu.dot_dimension_numbers<[1], [0], [0], [1], [0, 0, 1, 1], [], []>} : vector<10x128xf32>, vector<128x256xf32>, vector<10x256xf32> -> vector<10x256xf32>
    %c0_69 = arith.constant 0 : index
    %c0_70 = arith.constant 0 : index
    %c0_71 = arith.constant 0 : index
    %174 = vector.load %arg12[%c0_69, %c0_70, %c0_71] : memref<2x1x256xf32, #tpu.memory_space<vmem>>, vector<1x1x256xf32>
    %175 = vector.shape_cast %174 : vector<1x1x256xf32> to vector<1x256xf32>
    %176 = vector.broadcast %175 : vector<1x256xf32> to vector<10x256xf32>
    %177 = arith.addf %173, %176 : vector<10x256xf32>
    %cst_72 = arith.constant 5.000000e-01 : f32
    %178 = vector.broadcast %cst_72 : f32 to vector<10x256xf32>
    %179 = arith.mulf %178, %177 : vector<10x256xf32>
    %cst_73 = arith.constant 0.707106769 : f32
    %180 = vector.broadcast %cst_73 : f32 to vector<10x256xf32>
    %181 = arith.mulf %177, %180 : vector<10x256xf32>
    %182 = math.erf %181 : vector<10x256xf32>
    %cst_74 = arith.constant 1.000000e+00 : f32
    %183 = vector.broadcast %cst_74 : f32 to vector<10x256xf32>
    %184 = arith.addf %183, %182 : vector<10x256xf32>
    %185 = arith.mulf %179, %184 : vector<10x256xf32>
    %c0_75 = arith.constant 0 : index
    %c0_76 = arith.constant 0 : index
    %c0_77 = arith.constant 0 : index
    %186 = vector.load %arg13[%c0_75, %c0_76, %c0_77] : memref<2x256x128xf32, #tpu.memory_space<vmem>>, vector<1x256x128xf32>
    %187 = vector.shape_cast %186 : vector<1x256x128xf32> to vector<256x128xf32>
    %cst_78 = arith.constant dense<0.000000e+00> : vector<10x128xf32>
    %188 = tpu.matmul %185, %187, %cst_78 {dimension_numbers = #tpu.dot_dimension_numbers<[1], [0], [0], [1], [0, 0, 1, 1], [], []>} : vector<10x256xf32>, vector<256x128xf32>, vector<10x128xf32> -> vector<10x128xf32>
    %c0_79 = arith.constant 0 : index
    %c0_80 = arith.constant 0 : index
    %c0_81 = arith.constant 0 : index
    %189 = vector.load %arg14[%c0_79, %c0_80, %c0_81] : memref<2x1x128xf32, #tpu.memory_space<vmem>>, vector<1x1x128xf32>
    %190 = vector.shape_cast %189 : vector<1x1x128xf32> to vector<1x128xf32>
    %191 = vector.broadcast %190 : vector<1x128xf32> to vector<10x128xf32>
    %192 = arith.addf %188, %191 : vector<10x128xf32>
    %193 = arith.addf %144, %192 : vector<10x128xf32>
    %c1 = arith.constant 1 : index
    %c0_82 = arith.constant 0 : index
    %c0_83 = arith.constant 0 : index
    %194 = vector.load %arg3[%c1, %c0_82, %c0_83] : memref<2x1x128xf32, #tpu.memory_space<vmem>>, vector<1x1x128xf32>
    %195 = vector.shape_cast %194 : vector<1x1x128xf32> to vector<1x128xf32>
    %c1_84 = arith.constant 1 : index
    %c0_85 = arith.constant 0 : index
    %c0_86 = arith.constant 0 : index
    %196 = vector.load %arg4[%c1_84, %c0_85, %c0_86] : memref<2x1x128xf32, #tpu.memory_space<vmem>>, vector<1x1x128xf32>
    %197 = vector.shape_cast %196 : vector<1x1x128xf32> to vector<1x128xf32>
    %cst_87 = arith.constant dense<0.000000e+00> : vector<10xf32>
    %198 = vector.multi_reduction <add>, %193, %cst_87 [1] : vector<10x128xf32> to vector<10xf32>
    %199 = vector.shape_cast %198 : vector<10xf32> to vector<10x1xf32>
    %cst_88 = arith.constant 1.280000e+02 : f32
    %200 = vector.broadcast %cst_88 : f32 to vector<10x1xf32>
    %201 = arith.divf %199, %200 : vector<10x1xf32>
    %202 = vector.broadcast %201 : vector<10x1xf32> to vector<10x128xf32>
    %203 = arith.subf %193, %202 : vector<10x128xf32>
    %204 = arith.mulf %203, %203 : vector<10x128xf32>
    %cst_89 = arith.constant dense<0.000000e+00> : vector<10xf32>
    %205 = vector.multi_reduction <add>, %204, %cst_89 [1] : vector<10x128xf32> to vector<10xf32>
    %206 = vector.shape_cast %205 : vector<10xf32> to vector<10x1xf32>
    %cst_90 = arith.constant 1.280000e+02 : f32
    %207 = vector.broadcast %cst_90 : f32 to vector<10x1xf32>
    %208 = arith.divf %206, %207 : vector<10x1xf32>
    %209 = vector.broadcast %201 : vector<10x1xf32> to vector<10x128xf32>
    %210 = arith.subf %193, %209 : vector<10x128xf32>
    %cst_91 = arith.constant 9.99999997E-7 : f32
    %211 = vector.broadcast %cst_91 : f32 to vector<10x1xf32>
    %212 = arith.addf %208, %211 : vector<10x1xf32>
    %213 = math.rsqrt %212 : vector<10x1xf32>
    %214 = vector.broadcast %213 : vector<10x1xf32> to vector<10x128xf32>
    %215 = arith.mulf %210, %214 : vector<10x128xf32>
    %216 = vector.broadcast %195 : vector<1x128xf32> to vector<10x128xf32>
    %217 = arith.mulf %215, %216 : vector<10x128xf32>
    %218 = vector.broadcast %197 : vector<1x128xf32> to vector<10x128xf32>
    %219 = arith.addf %217, %218 : vector<10x128xf32>
    %c1_92 = arith.constant 1 : index
    %c0_93 = arith.constant 0 : index
    %c0_94 = arith.constant 0 : index
    %220 = vector.load %arg5[%c1_92, %c0_93, %c0_94] : memref<2x128x384xf32, #tpu.memory_space<vmem>>, vector<1x128x384xf32>
    %221 = vector.shape_cast %220 : vector<1x128x384xf32> to vector<128x384xf32>
    %cst_95 = arith.constant dense<0.000000e+00> : vector<10x384xf32>
    %222 = tpu.matmul %219, %221, %cst_95 {dimension_numbers = #tpu.dot_dimension_numbers<[1], [0], [0], [1], [0, 0, 1, 1], [], []>} : vector<10x128xf32>, vector<128x384xf32>, vector<10x384xf32> -> vector<10x384xf32>
    %c1_96 = arith.constant 1 : index
    %c0_97 = arith.constant 0 : index
    %c0_98 = arith.constant 0 : index
    %223 = vector.load %arg6[%c1_96, %c0_97, %c0_98] : memref<2x1x384xf32, #tpu.memory_space<vmem>>, vector<1x1x384xf32>
    %224 = vector.shape_cast %223 : vector<1x1x384xf32> to vector<1x384xf32>
    %225 = vector.broadcast %224 : vector<1x384xf32> to vector<10x384xf32>
    %226 = arith.addf %222, %225 : vector<10x384xf32>
    %227 = vector.extract_strided_slice %226 {offsets = [0, 0], sizes = [10, 128], strides = [1, 1]} : vector<10x384xf32> to vector<10x128xf32>
    %228 = vector.extract_strided_slice %226 {offsets = [0, 128], sizes = [10, 128], strides = [1, 1]} : vector<10x384xf32> to vector<10x128xf32>
    %229 = vector.extract_strided_slice %226 {offsets = [0, 256], sizes = [10, 128], strides = [1, 1]} : vector<10x384xf32> to vector<10x128xf32>
    %c1_99 = arith.constant 1 : index
    %c0_100 = arith.constant 0 : index
    %c0_101 = arith.constant 0 : index
    %230 = vector.load %arg7[%c1_99, %c0_100, %c0_101] : memref<2x128x128xf32, #tpu.memory_space<vmem>>, vector<1x128x128xf32>
    %231 = vector.shape_cast %230 : vector<1x128x128xf32> to vector<128x128xf32>
    %cst_102 = arith.constant 0.000000e+00 : f32
    %232 = vector.broadcast %cst_102 : f32 to vector<10x128xf32>
    %233 = vector.extract_strided_slice %227 {offsets = [0, 0], sizes = [10, 32], strides = [1, 1]} : vector<10x128xf32> to vector<10x32xf32>
    %234 = vector.shape_cast %233 : vector<10x32xf32> to vector<2x5x32xf32>
    %235 = vector.extract_strided_slice %228 {offsets = [0, 0], sizes = [10, 32], strides = [1, 1]} : vector<10x128xf32> to vector<10x32xf32>
    %236 = vector.shape_cast %235 : vector<10x32xf32> to vector<2x5x32xf32>
    %237 = vector.extract_strided_slice %229 {offsets = [0, 0], sizes = [10, 32], strides = [1, 1]} : vector<10x128xf32> to vector<10x32xf32>
    %238 = vector.shape_cast %237 : vector<10x32xf32> to vector<2x5x32xf32>
    "tpu.trace_start"() <{level = 10 : i32, message = "bqd,bkd->bqk"}> : () -> ()
    %cst_103 = arith.constant dense<0.000000e+00> : vector<2x5x5xf32>
    %239 = tpu.matmul %234, %236, %cst_103 {dimension_numbers = #tpu.dot_dimension_numbers<[2], [2], [1], [1], [0, 0, 0, 1, 1, 1], [0], [0]>} : vector<2x5x32xf32>, vector<2x5x32xf32>, vector<2x5x5xf32> -> vector<2x5x5xf32>
    "tpu.trace_stop"() : () -> ()
    %cst_104 = arith.constant 0.176776692 : f32
    %240 = vector.broadcast %cst_104 : f32 to vector<2x5x5xf32>
    %241 = arith.mulf %239, %240 : vector<2x5x5xf32>
    %cst_105 = arith.constant dense<0xFF800000> : vector<2x5xf32>
    %242 = vector.multi_reduction <maximumf>, %241, %cst_105 [2] : vector<2x5x5xf32> to vector<2x5xf32>
    %243 = vector.shape_cast %242 : vector<2x5xf32> to vector<2x5x1xf32>
    %244 = vector.broadcast %243 : vector<2x5x1xf32> to vector<2x5x5xf32>
    %245 = arith.subf %241, %244 : vector<2x5x5xf32>
    %246 = math.exp %245 : vector<2x5x5xf32>
    %cst_106 = arith.constant dense<0.000000e+00> : vector<2x5xf32>
    %247 = vector.multi_reduction <add>, %246, %cst_106 [2] : vector<2x5x5xf32> to vector<2x5xf32>
    %248 = vector.shape_cast %247 : vector<2x5xf32> to vector<2x5x1xf32>
    %249 = tpu.reciprocal %248 {approx = true} : vector<2x5x1xf32> -> vector<2x5x1xf32>
    %250 = vector.broadcast %249 : vector<2x5x1xf32> to vector<2x5x5xf32>
    %251 = arith.mulf %246, %250 : vector<2x5x5xf32>
    "tpu.trace_start"() <{level = 10 : i32, message = "bqk,bkd->bqd"}> : () -> ()
    %cst_107 = arith.constant dense<0.000000e+00> : vector<2x5x32xf32>
    %252 = tpu.matmul %251, %238, %cst_107 {dimension_numbers = #tpu.dot_dimension_numbers<[2], [1], [1], [2], [0, 0, 0, 1, 1, 2], [0], [0]>} : vector<2x5x5xf32>, vector<2x5x32xf32>, vector<2x5x32xf32> -> vector<2x5x32xf32>
    "tpu.trace_stop"() : () -> ()
    %253 = vector.shape_cast %252 : vector<2x5x32xf32> to vector<10x32xf32>
    %254 = vector.extract_strided_slice %231 {offsets = [0, 0], sizes = [32, 128], strides = [1, 1]} : vector<128x128xf32> to vector<32x128xf32>
    %cst_108 = arith.constant dense<0.000000e+00> : vector<10x128xf32>
    %255 = tpu.matmul %253, %254, %cst_108 {dimension_numbers = #tpu.dot_dimension_numbers<[1], [0], [0], [1], [0, 0, 1, 1], [], []>} : vector<10x32xf32>, vector<32x128xf32>, vector<10x128xf32> -> vector<10x128xf32>
    %256 = arith.addf %232, %255 : vector<10x128xf32>
    %257 = vector.extract_strided_slice %227 {offsets = [0, 32], sizes = [10, 32], strides = [1, 1]} : vector<10x128xf32> to vector<10x32xf32>
    %258 = vector.shape_cast %257 : vector<10x32xf32> to vector<2x5x32xf32>
    %259 = vector.extract_strided_slice %228 {offsets = [0, 32], sizes = [10, 32], strides = [1, 1]} : vector<10x128xf32> to vector<10x32xf32>
    %260 = vector.shape_cast %259 : vector<10x32xf32> to vector<2x5x32xf32>
    %261 = vector.extract_strided_slice %229 {offsets = [0, 32], sizes = [10, 32], strides = [1, 1]} : vector<10x128xf32> to vector<10x32xf32>
    %262 = vector.shape_cast %261 : vector<10x32xf32> to vector<2x5x32xf32>
    "tpu.trace_start"() <{level = 10 : i32, message = "bqd,bkd->bqk"}> : () -> ()
    %cst_109 = arith.constant dense<0.000000e+00> : vector<2x5x5xf32>
    %263 = tpu.matmul %258, %260, %cst_109 {dimension_numbers = #tpu.dot_dimension_numbers<[2], [2], [1], [1], [0, 0, 0, 1, 1, 1], [0], [0]>} : vector<2x5x32xf32>, vector<2x5x32xf32>, vector<2x5x5xf32> -> vector<2x5x5xf32>
    "tpu.trace_stop"() : () -> ()
    %cst_110 = arith.constant 0.176776692 : f32
    %264 = vector.broadcast %cst_110 : f32 to vector<2x5x5xf32>
    %265 = arith.mulf %263, %264 : vector<2x5x5xf32>
    %cst_111 = arith.constant dense<0xFF800000> : vector<2x5xf32>
    %266 = vector.multi_reduction <maximumf>, %265, %cst_111 [2] : vector<2x5x5xf32> to vector<2x5xf32>
    %267 = vector.shape_cast %266 : vector<2x5xf32> to vector<2x5x1xf32>
    %268 = vector.broadcast %267 : vector<2x5x1xf32> to vector<2x5x5xf32>
    %269 = arith.subf %265, %268 : vector<2x5x5xf32>
    %270 = math.exp %269 : vector<2x5x5xf32>
    %cst_112 = arith.constant dense<0.000000e+00> : vector<2x5xf32>
    %271 = vector.multi_reduction <add>, %270, %cst_112 [2] : vector<2x5x5xf32> to vector<2x5xf32>
    %272 = vector.shape_cast %271 : vector<2x5xf32> to vector<2x5x1xf32>
    %273 = tpu.reciprocal %272 {approx = true} : vector<2x5x1xf32> -> vector<2x5x1xf32>
    %274 = vector.broadcast %273 : vector<2x5x1xf32> to vector<2x5x5xf32>
    %275 = arith.mulf %270, %274 : vector<2x5x5xf32>
    "tpu.trace_start"() <{level = 10 : i32, message = "bqk,bkd->bqd"}> : () -> ()
    %cst_113 = arith.constant dense<0.000000e+00> : vector<2x5x32xf32>
    %276 = tpu.matmul %275, %262, %cst_113 {dimension_numbers = #tpu.dot_dimension_numbers<[2], [1], [1], [2], [0, 0, 0, 1, 1, 2], [0], [0]>} : vector<2x5x5xf32>, vector<2x5x32xf32>, vector<2x5x32xf32> -> vector<2x5x32xf32>
    "tpu.trace_stop"() : () -> ()
    %277 = vector.shape_cast %276 : vector<2x5x32xf32> to vector<10x32xf32>
    %278 = vector.extract_strided_slice %231 {offsets = [32, 0], sizes = [32, 128], strides = [1, 1]} : vector<128x128xf32> to vector<32x128xf32>
    %cst_114 = arith.constant dense<0.000000e+00> : vector<10x128xf32>
    %279 = tpu.matmul %277, %278, %cst_114 {dimension_numbers = #tpu.dot_dimension_numbers<[1], [0], [0], [1], [0, 0, 1, 1], [], []>} : vector<10x32xf32>, vector<32x128xf32>, vector<10x128xf32> -> vector<10x128xf32>
    %280 = arith.addf %256, %279 : vector<10x128xf32>
    %281 = vector.extract_strided_slice %227 {offsets = [0, 64], sizes = [10, 32], strides = [1, 1]} : vector<10x128xf32> to vector<10x32xf32>
    %282 = vector.shape_cast %281 : vector<10x32xf32> to vector<2x5x32xf32>
    %283 = vector.extract_strided_slice %228 {offsets = [0, 64], sizes = [10, 32], strides = [1, 1]} : vector<10x128xf32> to vector<10x32xf32>
    %284 = vector.shape_cast %283 : vector<10x32xf32> to vector<2x5x32xf32>
    %285 = vector.extract_strided_slice %229 {offsets = [0, 64], sizes = [10, 32], strides = [1, 1]} : vector<10x128xf32> to vector<10x32xf32>
    %286 = vector.shape_cast %285 : vector<10x32xf32> to vector<2x5x32xf32>
    "tpu.trace_start"() <{level = 10 : i32, message = "bqd,bkd->bqk"}> : () -> ()
    %cst_115 = arith.constant dense<0.000000e+00> : vector<2x5x5xf32>
    %287 = tpu.matmul %282, %284, %cst_115 {dimension_numbers = #tpu.dot_dimension_numbers<[2], [2], [1], [1], [0, 0, 0, 1, 1, 1], [0], [0]>} : vector<2x5x32xf32>, vector<2x5x32xf32>, vector<2x5x5xf32> -> vector<2x5x5xf32>
    "tpu.trace_stop"() : () -> ()
    %cst_116 = arith.constant 0.176776692 : f32
    %288 = vector.broadcast %cst_116 : f32 to vector<2x5x5xf32>
    %289 = arith.mulf %287, %288 : vector<2x5x5xf32>
    %cst_117 = arith.constant dense<0xFF800000> : vector<2x5xf32>
    %290 = vector.multi_reduction <maximumf>, %289, %cst_117 [2] : vector<2x5x5xf32> to vector<2x5xf32>
    %291 = vector.shape_cast %290 : vector<2x5xf32> to vector<2x5x1xf32>
    %292 = vector.broadcast %291 : vector<2x5x1xf32> to vector<2x5x5xf32>
    %293 = arith.subf %289, %292 : vector<2x5x5xf32>
    %294 = math.exp %293 : vector<2x5x5xf32>
    %cst_118 = arith.constant dense<0.000000e+00> : vector<2x5xf32>
    %295 = vector.multi_reduction <add>, %294, %cst_118 [2] : vector<2x5x5xf32> to vector<2x5xf32>
    %296 = vector.shape_cast %295 : vector<2x5xf32> to vector<2x5x1xf32>
    %297 = tpu.reciprocal %296 {approx = true} : vector<2x5x1xf32> -> vector<2x5x1xf32>
    %298 = vector.broadcast %297 : vector<2x5x1xf32> to vector<2x5x5xf32>
    %299 = arith.mulf %294, %298 : vector<2x5x5xf32>
    "tpu.trace_start"() <{level = 10 : i32, message = "bqk,bkd->bqd"}> : () -> ()
    %cst_119 = arith.constant dense<0.000000e+00> : vector<2x5x32xf32>
    %300 = tpu.matmul %299, %286, %cst_119 {dimension_numbers = #tpu.dot_dimension_numbers<[2], [1], [1], [2], [0, 0, 0, 1, 1, 2], [0], [0]>} : vector<2x5x5xf32>, vector<2x5x32xf32>, vector<2x5x32xf32> -> vector<2x5x32xf32>
    "tpu.trace_stop"() : () -> ()
    %301 = vector.shape_cast %300 : vector<2x5x32xf32> to vector<10x32xf32>
    %302 = vector.extract_strided_slice %231 {offsets = [64, 0], sizes = [32, 128], strides = [1, 1]} : vector<128x128xf32> to vector<32x128xf32>
    %cst_120 = arith.constant dense<0.000000e+00> : vector<10x128xf32>
    %303 = tpu.matmul %301, %302, %cst_120 {dimension_numbers = #tpu.dot_dimension_numbers<[1], [0], [0], [1], [0, 0, 1, 1], [], []>} : vector<10x32xf32>, vector<32x128xf32>, vector<10x128xf32> -> vector<10x128xf32>
    %304 = arith.addf %280, %303 : vector<10x128xf32>
    %305 = vector.extract_strided_slice %227 {offsets = [0, 96], sizes = [10, 32], strides = [1, 1]} : vector<10x128xf32> to vector<10x32xf32>
    %306 = vector.shape_cast %305 : vector<10x32xf32> to vector<2x5x32xf32>
    %307 = vector.extract_strided_slice %228 {offsets = [0, 96], sizes = [10, 32], strides = [1, 1]} : vector<10x128xf32> to vector<10x32xf32>
    %308 = vector.shape_cast %307 : vector<10x32xf32> to vector<2x5x32xf32>
    %309 = vector.extract_strided_slice %229 {offsets = [0, 96], sizes = [10, 32], strides = [1, 1]} : vector<10x128xf32> to vector<10x32xf32>
    %310 = vector.shape_cast %309 : vector<10x32xf32> to vector<2x5x32xf32>
    "tpu.trace_start"() <{level = 10 : i32, message = "bqd,bkd->bqk"}> : () -> ()
    %cst_121 = arith.constant dense<0.000000e+00> : vector<2x5x5xf32>
    %311 = tpu.matmul %306, %308, %cst_121 {dimension_numbers = #tpu.dot_dimension_numbers<[2], [2], [1], [1], [0, 0, 0, 1, 1, 1], [0], [0]>} : vector<2x5x32xf32>, vector<2x5x32xf32>, vector<2x5x5xf32> -> vector<2x5x5xf32>
    "tpu.trace_stop"() : () -> ()
    %cst_122 = arith.constant 0.176776692 : f32
    %312 = vector.broadcast %cst_122 : f32 to vector<2x5x5xf32>
    %313 = arith.mulf %311, %312 : vector<2x5x5xf32>
    %cst_123 = arith.constant dense<0xFF800000> : vector<2x5xf32>
    %314 = vector.multi_reduction <maximumf>, %313, %cst_123 [2] : vector<2x5x5xf32> to vector<2x5xf32>
    %315 = vector.shape_cast %314 : vector<2x5xf32> to vector<2x5x1xf32>
    %316 = vector.broadcast %315 : vector<2x5x1xf32> to vector<2x5x5xf32>
    %317 = arith.subf %313, %316 : vector<2x5x5xf32>
    %318 = math.exp %317 : vector<2x5x5xf32>
    %cst_124 = arith.constant dense<0.000000e+00> : vector<2x5xf32>
    %319 = vector.multi_reduction <add>, %318, %cst_124 [2] : vector<2x5x5xf32> to vector<2x5xf32>
    %320 = vector.shape_cast %319 : vector<2x5xf32> to vector<2x5x1xf32>
    %321 = tpu.reciprocal %320 {approx = true} : vector<2x5x1xf32> -> vector<2x5x1xf32>
    %322 = vector.broadcast %321 : vector<2x5x1xf32> to vector<2x5x5xf32>
    %323 = arith.mulf %318, %322 : vector<2x5x5xf32>
    "tpu.trace_start"() <{level = 10 : i32, message = "bqk,bkd->bqd"}> : () -> ()
    %cst_125 = arith.constant dense<0.000000e+00> : vector<2x5x32xf32>
    %324 = tpu.matmul %323, %310, %cst_125 {dimension_numbers = #tpu.dot_dimension_numbers<[2], [1], [1], [2], [0, 0, 0, 1, 1, 2], [0], [0]>} : vector<2x5x5xf32>, vector<2x5x32xf32>, vector<2x5x32xf32> -> vector<2x5x32xf32>
    "tpu.trace_stop"() : () -> ()
    %325 = vector.shape_cast %324 : vector<2x5x32xf32> to vector<10x32xf32>
    %326 = vector.extract_strided_slice %231 {offsets = [96, 0], sizes = [32, 128], strides = [1, 1]} : vector<128x128xf32> to vector<32x128xf32>
    %cst_126 = arith.constant dense<0.000000e+00> : vector<10x128xf32>
    %327 = tpu.matmul %325, %326, %cst_126 {dimension_numbers = #tpu.dot_dimension_numbers<[1], [0], [0], [1], [0, 0, 1, 1], [], []>} : vector<10x32xf32>, vector<32x128xf32>, vector<10x128xf32> -> vector<10x128xf32>
    %328 = arith.addf %304, %327 : vector<10x128xf32>
    %329 = arith.addf %193, %328 : vector<10x128xf32>
    %c1_127 = arith.constant 1 : index
    %c0_128 = arith.constant 0 : index
    %c0_129 = arith.constant 0 : index
    %330 = vector.load %arg8[%c1_127, %c0_128, %c0_129] : memref<2x1x128xf32, #tpu.memory_space<vmem>>, vector<1x1x128xf32>
    %331 = vector.shape_cast %330 : vector<1x1x128xf32> to vector<1x128xf32>
    %332 = vector.broadcast %331 : vector<1x128xf32> to vector<10x128xf32>
    %333 = arith.addf %329, %332 : vector<10x128xf32>
    %c1_130 = arith.constant 1 : index
    %c0_131 = arith.constant 0 : index
    %c0_132 = arith.constant 0 : index
    %334 = vector.load %arg9[%c1_130, %c0_131, %c0_132] : memref<2x1x128xf32, #tpu.memory_space<vmem>>, vector<1x1x128xf32>
    %335 = vector.shape_cast %334 : vector<1x1x128xf32> to vector<1x128xf32>
    %c1_133 = arith.constant 1 : index
    %c0_134 = arith.constant 0 : index
    %c0_135 = arith.constant 0 : index
    %336 = vector.load %arg10[%c1_133, %c0_134, %c0_135] : memref<2x1x128xf32, #tpu.memory_space<vmem>>, vector<1x1x128xf32>
    %337 = vector.shape_cast %336 : vector<1x1x128xf32> to vector<1x128xf32>
    %cst_136 = arith.constant dense<0.000000e+00> : vector<10xf32>
    %338 = vector.multi_reduction <add>, %333, %cst_136 [1] : vector<10x128xf32> to vector<10xf32>
    %339 = vector.shape_cast %338 : vector<10xf32> to vector<10x1xf32>
    %cst_137 = arith.constant 1.280000e+02 : f32
    %340 = vector.broadcast %cst_137 : f32 to vector<10x1xf32>
    %341 = arith.divf %339, %340 : vector<10x1xf32>
    %342 = vector.broadcast %341 : vector<10x1xf32> to vector<10x128xf32>
    %343 = arith.subf %333, %342 : vector<10x128xf32>
    %344 = arith.mulf %343, %343 : vector<10x128xf32>
    %cst_138 = arith.constant dense<0.000000e+00> : vector<10xf32>
    %345 = vector.multi_reduction <add>, %344, %cst_138 [1] : vector<10x128xf32> to vector<10xf32>
    %346 = vector.shape_cast %345 : vector<10xf32> to vector<10x1xf32>
    %cst_139 = arith.constant 1.280000e+02 : f32
    %347 = vector.broadcast %cst_139 : f32 to vector<10x1xf32>
    %348 = arith.divf %346, %347 : vector<10x1xf32>
    %349 = vector.broadcast %341 : vector<10x1xf32> to vector<10x128xf32>
    %350 = arith.subf %333, %349 : vector<10x128xf32>
    %cst_140 = arith.constant 9.99999997E-7 : f32
    %351 = vector.broadcast %cst_140 : f32 to vector<10x1xf32>
    %352 = arith.addf %348, %351 : vector<10x1xf32>
    %353 = math.rsqrt %352 : vector<10x1xf32>
    %354 = vector.broadcast %353 : vector<10x1xf32> to vector<10x128xf32>
    %355 = arith.mulf %350, %354 : vector<10x128xf32>
    %356 = vector.broadcast %335 : vector<1x128xf32> to vector<10x128xf32>
    %357 = arith.mulf %355, %356 : vector<10x128xf32>
    %358 = vector.broadcast %337 : vector<1x128xf32> to vector<10x128xf32>
    %359 = arith.addf %357, %358 : vector<10x128xf32>
    %c1_141 = arith.constant 1 : index
    %c0_142 = arith.constant 0 : index
    %c0_143 = arith.constant 0 : index
    %360 = vector.load %arg11[%c1_141, %c0_142, %c0_143] : memref<2x128x256xf32, #tpu.memory_space<vmem>>, vector<1x128x256xf32>
    %361 = vector.shape_cast %360 : vector<1x128x256xf32> to vector<128x256xf32>
    %cst_144 = arith.constant dense<0.000000e+00> : vector<10x256xf32>
    %362 = tpu.matmul %359, %361, %cst_144 {dimension_numbers = #tpu.dot_dimension_numbers<[1], [0], [0], [1], [0, 0, 1, 1], [], []>} : vector<10x128xf32>, vector<128x256xf32>, vector<10x256xf32> -> vector<10x256xf32>
    %c1_145 = arith.constant 1 : index
    %c0_146 = arith.constant 0 : index
    %c0_147 = arith.constant 0 : index
    %363 = vector.load %arg12[%c1_145, %c0_146, %c0_147] : memref<2x1x256xf32, #tpu.memory_space<vmem>>, vector<1x1x256xf32>
    %364 = vector.shape_cast %363 : vector<1x1x256xf32> to vector<1x256xf32>
    %365 = vector.broadcast %364 : vector<1x256xf32> to vector<10x256xf32>
    %366 = arith.addf %362, %365 : vector<10x256xf32>
    %cst_148 = arith.constant 5.000000e-01 : f32
    %367 = vector.broadcast %cst_148 : f32 to vector<10x256xf32>
    %368 = arith.mulf %367, %366 : vector<10x256xf32>
    %cst_149 = arith.constant 0.707106769 : f32
    %369 = vector.broadcast %cst_149 : f32 to vector<10x256xf32>
    %370 = arith.mulf %366, %369 : vector<10x256xf32>
    %371 = math.erf %370 : vector<10x256xf32>
    %cst_150 = arith.constant 1.000000e+00 : f32
    %372 = vector.broadcast %cst_150 : f32 to vector<10x256xf32>
    %373 = arith.addf %372, %371 : vector<10x256xf32>
    %374 = arith.mulf %368, %373 : vector<10x256xf32>
    %c1_151 = arith.constant 1 : index
    %c0_152 = arith.constant 0 : index
    %c0_153 = arith.constant 0 : index
    %375 = vector.load %arg13[%c1_151, %c0_152, %c0_153] : memref<2x256x128xf32, #tpu.memory_space<vmem>>, vector<1x256x128xf32>
    %376 = vector.shape_cast %375 : vector<1x256x128xf32> to vector<256x128xf32>
    %cst_154 = arith.constant dense<0.000000e+00> : vector<10x128xf32>
    %377 = tpu.matmul %374, %376, %cst_154 {dimension_numbers = #tpu.dot_dimension_numbers<[1], [0], [0], [1], [0, 0, 1, 1], [], []>} : vector<10x256xf32>, vector<256x128xf32>, vector<10x128xf32> -> vector<10x128xf32>
    %c1_155 = arith.constant 1 : index
    %c0_156 = arith.constant 0 : index
    %c0_157 = arith.constant 0 : index
    %378 = vector.load %arg14[%c1_155, %c0_156, %c0_157] : memref<2x1x128xf32, #tpu.memory_space<vmem>>, vector<1x1x128xf32>
    %379 = vector.shape_cast %378 : vector<1x1x128xf32> to vector<1x128xf32>
    %380 = vector.broadcast %379 : vector<1x128xf32> to vector<10x128xf32>
    %381 = arith.addf %377, %380 : vector<10x128xf32>
    %382 = arith.addf %333, %381 : vector<10x128xf32>
    %383 = vector.extract_strided_slice %382 {offsets = [0, 0], sizes = [1, 128], strides = [1, 1]} : vector<10x128xf32> to vector<1x128xf32>
    %384 = vector.extract_strided_slice %382 {offsets = [5, 0], sizes = [1, 128], strides = [1, 1]} : vector<10x128xf32> to vector<1x128xf32>
    %385 = tpu.concatenate %383, %384 in 0 : vector<1x128xf32>, vector<1x128xf32> -> vector<2x128xf32>
    %c0_158 = arith.constant 0 : index
    %c0_159 = arith.constant 0 : index
    %386 = vector.load %arg15[%c0_158, %c0_159] : memref<1x128xf32, #tpu.memory_space<vmem>>, vector<1x128xf32>
    %c0_160 = arith.constant 0 : index
    %c0_161 = arith.constant 0 : index
    %387 = vector.load %arg16[%c0_160, %c0_161] : memref<1x128xf32, #tpu.memory_space<vmem>>, vector<1x128xf32>
    %cst_162 = arith.constant dense<0.000000e+00> : vector<2xf32>
    %388 = vector.multi_reduction <add>, %385, %cst_162 [1] : vector<2x128xf32> to vector<2xf32>
    %389 = vector.shape_cast %388 : vector<2xf32> to vector<2x1xf32>
    %cst_163 = arith.constant 1.280000e+02 : f32
    %390 = vector.broadcast %cst_163 : f32 to vector<2x1xf32>
    %391 = arith.divf %389, %390 : vector<2x1xf32>
    %392 = vector.broadcast %391 : vector<2x1xf32> to vector<2x128xf32>
    %393 = arith.subf %385, %392 : vector<2x128xf32>
    %394 = arith.mulf %393, %393 : vector<2x128xf32>
    %cst_164 = arith.constant dense<0.000000e+00> : vector<2xf32>
    %395 = vector.multi_reduction <add>, %394, %cst_164 [1] : vector<2x128xf32> to vector<2xf32>
    %396 = vector.shape_cast %395 : vector<2xf32> to vector<2x1xf32>
    %cst_165 = arith.constant 1.280000e+02 : f32
    %397 = vector.broadcast %cst_165 : f32 to vector<2x1xf32>
    %398 = arith.divf %396, %397 : vector<2x1xf32>
    %399 = vector.broadcast %391 : vector<2x1xf32> to vector<2x128xf32>
    %400 = arith.subf %385, %399 : vector<2x128xf32>
    %cst_166 = arith.constant 9.99999997E-7 : f32
    %401 = vector.broadcast %cst_166 : f32 to vector<2x1xf32>
    %402 = arith.addf %398, %401 : vector<2x1xf32>
    %403 = math.rsqrt %402 : vector<2x1xf32>
    %404 = vector.broadcast %403 : vector<2x1xf32> to vector<2x128xf32>
    %405 = arith.mulf %400, %404 : vector<2x128xf32>
    %406 = vector.broadcast %386 : vector<1x128xf32> to vector<2x128xf32>
    %407 = arith.mulf %405, %406 : vector<2x128xf32>
    %408 = vector.broadcast %387 : vector<1x128xf32> to vector<2x128xf32>
    %409 = arith.addf %407, %408 : vector<2x128xf32>
    %c0_167 = arith.constant 0 : index
    %c0_168 = arith.constant 0 : index
    %410 = vector.load %arg17[%c0_167, %c0_168] : memref<128x1024xf32, #tpu.memory_space<vmem>>, vector<128x1024xf32>
    %cst_169 = arith.constant dense<0.000000e+00> : vector<2x1024xf32>
    %411 = tpu.matmul %409, %410, %cst_169 {dimension_numbers = #tpu.dot_dimension_numbers<[1], [0], [0], [1], [0, 0, 1, 1], [], []>} : vector<2x128xf32>, vector<128x1024xf32>, vector<2x1024xf32> -> vector<2x1024xf32>
    %c0_170 = arith.constant 0 : index
    %c0_171 = arith.constant 0 : index
    %412 = vector.load %arg18[%c0_170, %c0_171] : memref<1x1024xf32, #tpu.memory_space<vmem>>, vector<1x1024xf32>
    %413 = vector.broadcast %412 : vector<1x1024xf32> to vector<2x1024xf32>
    %414 = arith.addf %411, %413 : vector<2x1024xf32>
    %c0_172 = arith.constant 0 : index
    %c0_173 = arith.constant 0 : index
    %415 = vector.load %arg19[%c0_172, %c0_173] : memref<2x1024xf32, #tpu.memory_space<vmem>>, vector<2x1024xf32>
    tpu.vector_store %arg19[%c0_172, %c0_173], %414 {strides = array<i32>} : memref<2x1024xf32, #tpu.memory_space<vmem>>, vector<2x1024xf32>,
    return
  }
}

</mosaic_0001>

<llo_original>
// kernel: tile.9
$region0: #{tile.9}
  %s0 = inlined_call_operand.vmem [shape: f32[2,5,128], index: 0, kind: input, shape index: {}]
  %s1 = inlined_call_operand.vmem [shape: f32[10,128], index: 1, kind: output, shape index: {}]
  %v2 = vld [vmem:[%s0] sm:$0x1f]
  %3 = vst [vmem:[%s1] sm:$0x1f] %v2
  %s4 = scalar_lea.vmem %s0, 8
  %v5 = vld [vmem:[%s4] sm:$0x1f]
  %s6 = scalar_lea.vmem %s1, 5
  %7 = vst [vmem:[%s6] sm:$0x1f] %v5

// kernel: vit_forward.1
$region0: #{vit_forward.1}
  #allocation0 [shape = 'u32[]', space=smem, size = 0x4, offset = 0x4, fixed_abs, tag = 'smem constant byte address 0x4 - core index']
  #allocation1 [shape = 'u32[72,128]{1,0:T(1,128)}', space=vmem, size = 0x9000, scoped, tag = 'internal scratch']
  %s0 = inlined_call_operand.vmem [shape: f32[10,768], index: 0, kind: input, shape index: {}]
  %s1 = inlined_call_operand.vmem [shape: f32[10,128], index: 1, kind: input, shape index: {}]
  %s2 = inlined_call_operand.vmem [shape: f32[768,128], index: 2, kind: input, shape index: {}]
  %s3 = inlined_call_operand.vmem [shape: f32[2,1,128], index: 3, kind: input, shape index: {}]
  %s4 = inlined_call_operand.vmem [shape: f32[2,1,128], index: 4, kind: input, shape index: {}]
  %s5 = inlined_call_operand.vmem [shape: f32[2,128,384], index: 5, kind: input, shape index: {}]
  %s6 = inlined_call_operand.vmem [shape: f32[2,1,384], index: 6, kind: input, shape index: {}]
  %s7 = inlined_call_operand.vmem [shape: f32[2,128,128], index: 7, kind: input, shape index: {}]
  %s8 = inlined_call_operand.vmem [shape: f32[2,1,128], index: 8, kind: input, shape index: {}]
  %s9 = inlined_call_operand.vmem [shape: f32[2,1,128], index: 9, kind: input, shape index: {}]
  %s10 = inlined_call_operand.vmem [shape: f32[2,1,128], index: 10, kind: input, shape index: {}]
  %s11 = inlined_call_operand.vmem [shape: f32[2,128,256], index: 11, kind: input, shape index: {}]
  %s12 = inlined_call_operand.vmem [shape: f32[2,1,256], index: 12, kind: input, shape index: {}]
  %s13 = inlined_call_operand.vmem [shape: f32[2,256,128], index: 13, kind: input, shape index: {}]
  %s14 = inlined_call_operand.vmem [shape: f32[2,1,128], index: 14, kind: input, shape index: {}]
  %s15 = inlined_call_operand.vmem [shape: f32[1,128], index: 15, kind: input, shape index: {}]
  %s16 = inlined_call_operand.vmem [shape: f32[1,128], index: 16, kind: input, shape index: {}]
  %s17 = inlined_call_operand.vmem [shape: f32[128,1024], index: 17, kind: input, shape index: {}]
  %s18 = inlined_call_operand.vmem [shape: f32[1,1024], index: 18, kind: input, shape index: {}]
  %s19 = inlined_call_operand.hbm [shape: f32[2,1024], index: 19, kind: output, shape index: {}]
  %s20 = sld [smem:[#allocation0]]
  $region86: #{vit_forward.1} parent=0
    _
  %s22 = ssub.s32 1, %s20
  %s23 = scalar_select 0, %s22, %s20
  $region1: #{vit_forward.1} parent=0
    #allocation2 [shape = 'u8[8192]{0}', space=vmem, size = 0x2000, scoped, tag = 'output window, operand 0, single buffered']
    #allocation3 [shape = 's32[1]{0}', space=sflag, size = 0x4, scoped, tag = 'scoped memory for vit_forward.1']
    %24 = vsyncpa [#allocation3], 0
    // Predicated region
    $region2: #{vit_forward.1} parent=1 // pred_check
      _
    $region3: #{vit_forward.1} parent=1 // pred_check_branch
      %26 = sbr.rel (0) target = $region5
    $region4: #{vit_forward.1} parent=1 // pred_region
      _
    $region5: #{vit_forward.1} parent=1 // pred_fallthru
      _
    // Predicated region
    $region6: #{vit_forward.1} parent=1 // pred_check
      _
    $region7: #{vit_forward.1} parent=1 // pred_check_branch
      %28 = sbr.rel (0) target = $region9
    $region8: #{vit_forward.1} parent=1 // pred_region
      _
    $region9: #{vit_forward.1} parent=1 // pred_fallthru
      _
    // Predicated region
    $region10: #{vit_forward.1} parent=1 // pred_check
      _
    $region11: #{vit_forward.1} parent=1 // pred_check_branch
      %30 = sbr.rel (0) target = $region13
    $region12: #{vit_forward.1} parent=1 // pred_region
      _
    $region13: #{vit_forward.1} parent=1 // pred_fallthru
      _
    // Predicated region
    $region14: #{vit_forward.1} parent=1 // pred_check
      _
    $region15: #{vit_forward.1} parent=1 // pred_check_branch
      %32 = sbr.rel (0) target = $region17
    $region16: #{vit_forward.1} parent=1 // pred_region
      _
    $region17: #{vit_forward.1} parent=1 // pred_fallthru
      _
    // Predicated region
    $region18: #{vit_forward.1} parent=1 // pred_check
      _
    $region19: #{vit_forward.1} parent=1 // pred_check_branch
      %34 = sbr.rel (0) target = $region21
    $region20: #{vit_forward.1} parent=1 // pred_region
      _
    $region21: #{vit_forward.1} parent=1 // pred_fallthru
      _
    // Predicated region
    $region22: #{vit_forward.1} parent=1 // pred_check
      _
    $region23: #{vit_forward.1} parent=1 // pred_check_branch
      %36 = sbr.rel (0) target = $region25
    $region24: #{vit_forward.1} parent=1 // pred_region
      _
    $region25: #{vit_forward.1} parent=1 // pred_fallthru
      _
    // Predicated region
    $region26: #{vit_forward.1} parent=1 // pred_check
      _
    $region27: #{vit_forward.1} parent=1 // pred_check_branch
      %38 = sbr.rel (0) target = $region29
    $region28: #{vit_forward.1} parent=1 // pred_region
      _
    $region29: #{vit_forward.1} parent=1 // pred_fallthru
      _
    // Predicated region
    $region30: #{vit_forward.1} parent=1 // pred_check
      _
    $region31: #{vit_forward.1} parent=1 // pred_check_branch
      %40 = sbr.rel (0) target = $region33
    $region32: #{vit_forward.1} parent=1 // pred_region
      _
    $region33: #{vit_forward.1} parent=1 // pred_fallthru
      _
    // Predicated region
    $region34: #{vit_forward.1} parent=1 // pred_check
      _
    $region35: #{vit_forward.1} parent=1 // pred_check_branch
      %42 = sbr.rel (0) target = $region37
    $region36: #{vit_forward.1} parent=1 // pred_region
      _
    $region37: #{vit_forward.1} parent=1 // pred_fallthru
      _
    // Predicated region
    $region38: #{vit_forward.1} parent=1 // pred_check
      _
    $region39: #{vit_forward.1} parent=1 // pred_check_branch
      %44 = sbr.rel (0) target = $region41
    $region40: #{vit_forward.1} parent=1 // pred_region
      _
    $region41: #{vit_forward.1} parent=1 // pred_fallthru
      _
    // Predicated region
    $region42: #{vit_forward.1} parent=1 // pred_check
      _
    $region43: #{vit_forward.1} parent=1 // pred_check_branch
      %46 = sbr.rel (0) target = $region45
    $region44: #{vit_forward.1} parent=1 // pred_region
      _
    $region45: #{vit_forward.1} parent=1 // pred_fallthru
      _
    // Predicated region
    $region46: #{vit_forward.1} parent=1 // pred_check
      _
    $region47: #{vit_forward.1} parent=1 // pred_check_branch
      %48 = sbr.rel (0) target = $region49
    $region48: #{vit_forward.1} parent=1 // pred_region
      _
    $region49: #{vit_forward.1} parent=1 // pred_fallthru
      _
    // Predicated region
    $region50: #{vit_forward.1} parent=1 // pred_check
      _
    $region51: #{vit_forward.1} parent=1 // pred_check_branch
      %50 = sbr.rel (0) target = $region53
    $region52: #{vit_forward.1} parent=1 // pred_region
      _
    $region53: #{vit_forward.1} parent=1 // pred_fallthru
      _
    // Predicated region
    $region54: #{vit_forward.1} parent=1 // pred_check
      _
    $region55: #{vit_forward.1} parent=1 // pred_check_branch
      %52 = sbr.rel (0) target = $region57
    $region56: #{vit_forward.1} parent=1 // pred_region
      _
    $region57: #{vit_forward.1} parent=1 // pred_fallthru
      _
    // Predicated region
    $region58: #{vit_forward.1} parent=1 // pred_check
      _
    $region59: #{vit_forward.1} parent=1 // pred_check_branch
      %54 = sbr.rel (0) target = $region61
    $region60: #{vit_forward.1} parent=1 // pred_region
      _
    $region61: #{vit_forward.1} parent=1 // pred_fallthru
      _
    // Predicated region
    $region62: #{vit_forward.1} parent=1 // pred_check
      _
    $region63: #{vit_forward.1} parent=1 // pred_check_branch
      %56 = sbr.rel (0) target = $region65
    $region64: #{vit_forward.1} parent=1 // pred_region
      _
    $region65: #{vit_forward.1} parent=1 // pred_fallthru
      _
    // Predicated region
    $region66: #{vit_forward.1} parent=1 // pred_check
      _
    $region67: #{vit_forward.1} parent=1 // pred_check_branch
      %58 = sbr.rel (0) target = $region69
    $region68: #{vit_forward.1} parent=1 // pred_region
      _
    $region69: #{vit_forward.1} parent=1 // pred_fallthru
      _
    // Predicated region
    $region70: #{vit_forward.1} parent=1 // pred_check
      _
    $region71: #{vit_forward.1} parent=1 // pred_check_branch
      %60 = sbr.rel (0) target = $region73
    $region72: #{vit_forward.1} parent=1 // pred_region
      _
    $region73: #{vit_forward.1} parent=1 // pred_fallthru
      _
    // Predicated region
    $region74: #{vit_forward.1} parent=1 // pred_check
      _
    $region75: #{vit_forward.1} parent=1 // pred_check_branch
      %62 = sbr.rel (0) target = $region77
    $region76: #{vit_forward.1} parent=1 // pred_region
      _
    $region77: #{vit_forward.1} parent=1 // pred_fallthru
      _
    %v63 = vld [vmem:[%s0] sm:$0xff]
    %v64 = vld [vmem:[%s0 + $0x8] sm:$0xff]
    %v65 = vld [vmem:[%s0 + $0x10] sm:$0xff]
    %v66 = vld [vmem:[%s0 + $0x18] sm:$0xff]
    %v67 = vld [vmem:[%s0 + $0x20] sm:$0xff]
    %v68 = vld [vmem:[%s0 + $0x28] sm:$0xff]
    %v69 = vld [vmem:[%s0 + $0x30] sm:$0x3]
    %v70 = vld [vmem:[%s0 + $0x38] sm:$0x3]
    %v71 = vld [vmem:[%s0 + $0x40] sm:$0x3]
    %v72 = vld [vmem:[%s0 + $0x48] sm:$0x3]
    %v73 = vld [vmem:[%s0 + $0x50] sm:$0x3]
    %v74 = vld [vmem:[%s0 + $0x58] sm:$0x3]
    %v75 = vld [vmem:[%s2] sm:$0xff]
    %v76 = vld [vmem:[%s2 + $0x8] sm:$0xff]
    %v77 = vld [vmem:[%s2 + $0x10] sm:$0xff]
    %v78 = vld [vmem:[%s2 + $0x18] sm:$0xff]
    %v79 = vld [vmem:[%s2 + $0x20] sm:$0xff]
    %v80 = vld [vmem:[%s2 + $0x28] sm:$0xff]
    %v81 = vld [vmem:[%s2 + $0x30] sm:$0xff]
    %v82 = vld [vmem:[%s2 + $0x38] sm:$0xff]
    %v83 = vld [vmem:[%s2 + $0x40] sm:$0xff]
    %v84 = vld [vmem:[%s2 + $0x48] sm:$0xff]
    %v85 = vld [vmem:[%s2 + $0x50] sm:$0xff]
    %v86 = vld [vmem:[%s2 + $0x58] sm:$0xff]
    %v87 = vld [vmem:[%s2 + $0x60] sm:$0xff]
    %v88 = vld [vmem:[%s2 + $0x68] sm:$0xff]
    %v89 = vld [vmem:[%s2 + $0x70] sm:$0xff]
    %v90 = vld [vmem:[%s2 + $0x78] sm:$0xff]
    %v91 = vld [vmem:[%s2 + $0x80] sm:$0xff]
    %v92 = vld [vmem:[%s2 + $0x88] sm:$0xff]
    %v93 = vld [vmem:[%s2 + $0x90] sm:$0xff]
    %v94 = vld [vmem:[%s2 + $0x98] sm:$0xff]
    %v95 = vld [vmem:[%s2 + $0xa0] sm:$0xff]
    %v96 = vld [vmem:[%s2 + $0xa8] sm:$0xff]
    %v97 = vld [vmem:[%s2 + $0xb0] sm:$0xff]
    %v98 = vld [vmem:[%s2 + $0xb8] sm:$0xff]
    %v99 = vld [vmem:[%s2 + $0xc0] sm:$0xff]
    %v100 = vld [vmem:[%s2 + $0xc8] sm:$0xff]
    %v101 = vld [vmem:[%s2 + $0xd0] sm:$0xff]
    %v102 = vld [vmem:[%s2 + $0xd8] sm:$0xff]
    %v103 = vld [vmem:[%s2 + $0xe0] sm:$0xff]
    %v104 = vld [vmem:[%s2 + $0xe8] sm:$0xff]
    %v105 = vld [vmem:[%s2 + $0xf0] sm:$0xff]
    %v106 = vld [vmem:[%s2 + $0xf8] sm:$0xff]
    %v107 = vld [vmem:[%s2 + $0x100] sm:$0xff]
    %v108 = vld [vmem:[%s2 + $0x108] sm:$0xff]
    %v109 = vld [vmem:[%s2 + $0x110] sm:$0xff]
    %v110 = vld [vmem:[%s2 + $0x118] sm:$0xff]
    %v111 = vld [vmem:[%s2 + $0x120] sm:$0xff]
    %v112 = vld [vmem:[%s2 + $0x128] sm:$0xff]
    %v113 = vld [vmem:[%s2 + $0x130] sm:$0xff]
    %v114 = vld [vmem:[%s2 + $0x138] sm:$0xff]
    %v115 = vld [vmem:[%s2 + $0x140] sm:$0xff]
    %v116 = vld [vmem:[%s2 + $0x148] sm:$0xff]
    %v117 = vld [vmem:[%s2 + $0x150] sm:$0xff]
    %v118 = vld [vmem:[%s2 + $0x158] sm:$0xff]
    %v119 = vld [vmem:[%s2 + $0x160] sm:$0xff]
    %v120 = vld [vmem:[%s2 + $0x168] sm:$0xff]
    %v121 = vld [vmem:[%s2 + $0x170] sm:$0xff]
    %v122 = vld [vmem:[%s2 + $0x178] sm:$0xff]
    %v123 = vld [vmem:[%s2 + $0x180] sm:$0xff]
    %v124 = vld [vmem:[%s2 + $0x188] sm:$0xff]
    %v125 = vld [vmem:[%s2 + $0x190] sm:$0xff]
    %v126 = vld [vmem:[%s2 + $0x198] sm:$0xff]
    %v127 = vld [vmem:[%s2 + $0x1a0] sm:$0xff]
    %v128 = vld [vmem:[%s2 + $0x1a8] sm:$0xff]
    %v129 = vld [vmem:[%s2 + $0x1b0] sm:$0xff]
    %v130 = vld [vmem:[%s2 + $0x1b8] sm:$0xff]
    %v131 = vld [vmem:[%s2 + $0x1c0] sm:$0xff]
    %v132 = vld [vmem:[%s2 + $0x1c8] sm:$0xff]
    %v133 = vld [vmem:[%s2 + $0x1d0] sm:$0xff]
    %v134 = vld [vmem:[%s2 + $0x1d8] sm:$0xff]
    %v135 = vld [vmem:[%s2 + $0x1e0] sm:$0xff]
    %v136 = vld [vmem:[%s2 + $0x1e8] sm:$0xff]
    %v137 = vld [vmem:[%s2 + $0x1f0] sm:$0xff]
    %v138 = vld [vmem:[%s2 + $0x1f8] sm:$0xff]
    %v139 = vld [vmem:[%s2 + $0x200] sm:$0xff]
    %v140 = vld [vmem:[%s2 + $0x208] sm:$0xff]
    %v141 = vld [vmem:[%s2 + $0x210] sm:$0xff]
    %v142 = vld [vmem:[%s2 + $0x218] sm:$0xff]
    %v143 = vld [vmem:[%s2 + $0x220] sm:$0xff]
    %v144 = vld [vmem:[%s2 + $0x228] sm:$0xff]
    %v145 = vld [vmem:[%s2 + $0x230] sm:$0xff]
    %v146 = vld [vmem:[%s2 + $0x238] sm:$0xff]
    %v147 = vld [vmem:[%s2 + $0x240] sm:$0xff]
    %v148 = vld [vmem:[%s2 + $0x248] sm:$0xff]
    %v149 = vld [vmem:[%s2 + $0x250] sm:$0xff]
    %v150 = vld [vmem:[%s2 + $0x258] sm:$0xff]
    %v151 = vld [vmem:[%s2 + $0x260] sm:$0xff]
    %v152 = vld [vmem:[%s2 + $0x268] sm:$0xff]
    %v153 = vld [vmem:[%s2 + $0x270] sm:$0xff]
    %v154 = vld [vmem:[%s2 + $0x278] sm:$0xff]
    %v155 = vld [vmem:[%s2 + $0x280] sm:$0xff]
    %v156 = vld [vmem:[%s2 + $0x288] sm:$0xff]
    %v157 = vld [vmem:[%s2 + $0x290] sm:$0xff]
    %v158 = vld [vmem:[%s2 + $0x298] sm:$0xff]
    %v159 = vld [vmem:[%s2 + $0x2a0] sm:$0xff]
    %v160 = vld [vmem:[%s2 + $0x2a8] sm:$0xff]
    %v161 = vld [vmem:[%s2 + $0x2b0] sm:$0xff]
    %v162 = vld [vmem:[%s2 + $0x2b8] sm:$0xff]
    %v163 = vld [vmem:[%s2 + $0x2c0] sm:$0xff]
    %v164 = vld [vmem:[%s2 + $0x2c8] sm:$0xff]
    %v165 = vld [vmem:[%s2 + $0x2d0] sm:$0xff]
    %v166 = vld [vmem:[%s2 + $0x2d8] sm:$0xff]
    %v167 = vld [vmem:[%s2 + $0x2e0] sm:$0xff]
    %v168 = vld [vmem:[%s2 + $0x2e8] sm:$0xff]
    %v169 = vld [vmem:[%s2 + $0x2f0] sm:$0xff]
    %v170 = vld [vmem:[%s2 + $0x2f8] sm:$0xff]
    %v171 = vld [vmem:[%s1] sm:$0xff]
    %v172 = vld [vmem:[%s1 + $0x8] sm:$0x3]
    %173 = vmatpush.msra.mxu0 %v90
    %174 = vmatpush.msra.mxu0 %v89
    %175 = vmatpush.msra.mxu0 %v88
    %176 = vmatpush.msra.mxu0 %v87
    %177 = vmatpush.msra.mxu0 %v86
    %178 = vmatpush.msra.mxu0 %v85
    %179 = vmatpush.msra.mxu0 %v84
    %180 = vmatpush.msra.mxu0 %v83
    %181 = vmatpush.msra.mxu0 %v82
    %182 = vmatpush.msra.mxu0 %v81
    %183 = vmatpush.msra.mxu0 %v80
    %184 = vmatpush.msra.mxu0 %v79
    %185 = vmatpush.msra.mxu0 %v78
    %186 = vmatpush.msra.mxu0 %v77
    %187 = vmatpush.msra.mxu0 %v76
    %188 = vmatpush.msra.mxu0 %v75
    %189 = vmatmul.f32.gmra.mxu0 %v63
    %v190 = vpop.f32.mrf.mxu0
    %v191 = vadd.f32 %v171, %v190
    %192 = vmatmul.f32.gmra.mxu0 %v69
    %v193 = vpop.f32.mrf.mxu0
    %v194 = vadd.f32 %v172, %v193
    %195 = vdwg.mxu0
    %196 = vmatpush.msra.mxu0 %v106
    %197 = vmatpush.msra.mxu0 %v105
    %198 = vmatpush.msra.mxu0 %v104
    %199 = vmatpush.msra.mxu0 %v103
    %200 = vmatpush.msra.mxu0 %v102
    %201 = vmatpush.msra.mxu0 %v101
    %202 = vmatpush.msra.mxu0 %v100
    %203 = vmatpush.msra.mxu0 %v99
    %204 = vmatpush.msra.mxu0 %v98
    %205 = vmatpush.msra.mxu0 %v97
    %206 = vmatpush.msra.mxu0 %v96
    %207 = vmatpush.msra.mxu0 %v95
    %208 = vmatpush.msra.mxu0 %v94
    %209 = vmatpush.msra.mxu0 %v93
    %210 = vmatpush.msra.mxu0 %v92
    %211 = vmatpush.msra.mxu0 %v91
    %212 = vmatmul.f32.gmra.mxu0 %v64
    %v213 = vpop.f32.mrf.mxu0
    %v214 = vadd.f32 %v191, %v213
    %215 = vmatmul.f32.gmra.mxu0 %v70
    %v216 = vpop.f32.mrf.mxu0
    %v217 = vadd.f32 %v194, %v216
    %218 = vdwg.mxu0
    %219 = vmatpush.msra.mxu0 %v122
    %220 = vmatpush.msra.mxu0 %v121
    %221 = vmatpush.msra.mxu0 %v120
    %222 = vmatpush.msra.mxu0 %v119
    %223 = vmatpush.msra.mxu0 %v118
    %224 = vmatpush.msra.mxu0 %v117
    %225 = vmatpush.msra.mxu0 %v116
    %226 = vmatpush.msra.mxu0 %v115
    %227 = vmatpush.msra.mxu0 %v114
    %228 = vmatpush.msra.mxu0 %v113
    %229 = vmatpush.msra.mxu0 %v112
    %230 = vmatpush.msra.mxu0 %v111
    %231 = vmatpush.msra.mxu0 %v110
    %232 = vmatpush.msra.mxu0 %v109
    %233 = vmatpush.msra.mxu0 %v108
    %234 = vmatpush.msra.mxu0 %v107
    %235 = vmatmul.f32.gmra.mxu0 %v65
    %v236 = vpop.f32.mrf.mxu0
    %v237 = vadd.f32 %v214, %v236
    %238 = vmatmul.f32.gmra.mxu0 %v71
    %v239 = vpop.f32.mrf.mxu0
    %v240 = vadd.f32 %v217, %v239
    %241 = vdwg.mxu0
    %242 = vmatpush.msra.mxu0 %v138
    %243 = vmatpush.msra.mxu0 %v137
    %244 = vmatpush.msra.mxu0 %v136
    %245 = vmatpush.msra.mxu0 %v135
    %246 = vmatpush.msra.mxu0 %v134
    %247 = vmatpush.msra.mxu0 %v133
    %248 = vmatpush.msra.mxu0 %v132
    %249 = vmatpush.msra.mxu0 %v131
    %250 = vmatpush.msra.mxu0 %v130
    %251 = vmatpush.msra.mxu0 %v129
    %252 = vmatpush.msra.mxu0 %v128
    %253 = vmatpush.msra.mxu0 %v127
    %254 = vmatpush.msra.mxu0 %v126
    %255 = vmatpush.msra.mxu0 %v125
    %256 = vmatpush.msra.mxu0 %v124
    %257 = vmatpush.msra.mxu0 %v123
    %258 = vmatmul.f32.gmra.mxu0 %v66
    %v259 = vpop.f32.mrf.mxu0
    %v260 = vadd.f32 %v237, %v259
    %261 = vmatmul.f32.gmra.mxu0 %v72
    %v262 = vpop.f32.mrf.mxu0
    %v263 = vadd.f32 %v240, %v262
    %264 = vdwg.mxu0
    %265 = vmatpush.msra.mxu0 %v154
    %266 = vmatpush.msra.mxu0 %v153
    %267 = vmatpush.msra.mxu0 %v152
    %268 = vmatpush.msra.mxu0 %v151
    %269 = vmatpush.msra.mxu0 %v150
    %270 = vmatpush.msra.mxu0 %v149
    %271 = vmatpush.msra.mxu0 %v148
    %272 = vmatpush.msra.mxu0 %v147
    %273 = vmatpush.msra.mxu0 %v146
    %274 = vmatpush.msra.mxu0 %v145
    %275 = vmatpush.msra.mxu0 %v144
    %276 = vmatpush.msra.mxu0 %v143
    %277 = vmatpush.msra.mxu0 %v142
    %278 = vmatpush.msra.mxu0 %v141
    %279 = vmatpush.msra.mxu0 %v140
    %280 = vmatpush.msra.mxu0 %v139
    %281 = vmatmul.f32.gmra.mxu0 %v67
    %v282 = vpop.f32.mrf.mxu0
    %v283 = vadd.f32 %v260, %v282
    %284 = vmatmul.f32.gmra.mxu0 %v73
    %v285 = vpop.f32.mrf.mxu0
    %v286 = vadd.f32 %v263, %v285
    %287 = vdwg.mxu0
    %288 = vmatpush.msra.mxu0 %v170
    %289 = vmatpush.msra.mxu0 %v169
    %290 = vmatpush.msra.mxu0 %v168
    %291 = vmatpush.msra.mxu0 %v167
    %292 = vmatpush.msra.mxu0 %v166
    %293 = vmatpush.msra.mxu0 %v165
    %294 = vmatpush.msra.mxu0 %v164
    %295 = vmatpush.msra.mxu0 %v163
    %296 = vmatpush.msra.mxu0 %v162
    %297 = vmatpush.msra.mxu0 %v161
    %298 = vmatpush.msra.mxu0 %v160
    %299 = vmatpush.msra.mxu0 %v159
    %300 = vmatpush.msra.mxu0 %v158
    %301 = vmatpush.msra.mxu0 %v157
    %302 = vmatpush.msra.mxu0 %v156
    %303 = vmatpush.msra.mxu0 %v155
    %304 = vmatmul.f32.gmra.mxu0 %v68
    %v305 = vpop.f32.mrf.mxu0
    %v306 = vadd.f32 %v283, %v305
    %307 = vmatmul.f32.gmra.mxu0 %v74
    %v308 = vpop.f32.mrf.mxu0
    %v309 = vadd.f32 %v286, %v308
    %310 = vdwg.mxu0
    %v311 = vld [vmem:[%s3] sm:$0x1]
    %v312 = vld [vmem:[%s4] sm:$0x1]
    %313 = vadd.xlane.f32.xlu0 %v306
    %v314 = vpop.xlane.xlu0 %313
    %vm315 = vcmask 1041408
    %v316 = vsel %vm315, %v309, 0.0
    %317 = vadd.xlane.f32.xlu0 %v316
    %v318 = vpop.xlane.xlu0 %317
    %v319 = vrcp.pop 128.0
    %v320 = vmul.f32 128.0, %v319
    %v321 = vsub.f32 1.0, %v320
    %v322 = vmul.f32 %v319, %v321
    %v323 = vadd.f32 %v319, %v322
    %vm324 = vweird.f32 %v319
    %v325 = vsel %vm324, %v319, %v323
    %v326 = vmul.f32 %v314, %v325
    %v327 = vmul.f32 %v318, %v325
    %v328 = vsub.f32 %v306, %v326
    %v329 = vsub.f32 %v309, %v327
    %v330 = vmul.f32 %v328, %v328
    %v331 = vmul.f32 %v329, %v329
    %332 = vadd.xlane.f32.xlu0 %v330
    %v333 = vpop.xlane.xlu0 %332
    %v334 = vsel %vm315, %v331, 0.0
    %335 = vadd.xlane.f32.xlu0 %v334
    %v336 = vpop.xlane.xlu0 %335
    %v337 = vmul.f32 %v333, %v325
    %v338 = vmul.f32 %v336, %v325
    %v339 = vadd.f32 %v337, 1e-06
    %v340 = vadd.f32 %v338, 1e-06
    %v341 = vrsqrt.pop %v339
    %v342 = vmul.f32 %v341, %v339
    %v343 = vmul.f32 %v342, %v341
    %v344 = vmul.f32 0.5, %v343
    %v345 = vsub.f32 1.5, %v344
    %v346 = vmul.f32 %v341, %v345
    %vm347 = vweird.f32 %v339
    %vm348 = vweird.f32 %v341
    %vm349 = vmor %vm347, %vm348
    %v350 = vsel %vm349, %v341, %v346
    %v351 = vrsqrt.pop %v340
    %v352 = vmul.f32 %v351, %v340
    %v353 = vmul.f32 %v352, %v351
    %v354 = vmul.f32 0.5, %v353
    %v355 = vsub.f32 1.5, %v354
    %v356 = vmul.f32 %v351, %v355
    %vm357 = vweird.f32 %v340
    %vm358 = vweird.f32 %v351
    %vm359 = vmor %vm357, %vm358
    %v360 = vsel %vm359, %v351, %v356
    %v361 = vmul.f32 %v328, %v350
    %v362 = vmul.f32 %v329, %v360
    %v364 = vperm.slane %v311, 0
    %v366 = vmul.f32 %v361, %v364
    %v367 = vmul.f32 %v362, %v364
    %v369 = vperm.slane %v312, 0
    %v371 = vadd.f32 %v366, %v369
    %v372 = vadd.f32 %v367, %v369
    %v373 = vld [vmem:[%s5] sm:$0xff]
    %v374 = vld [vmem:[%s5 + $0x8] sm:$0xff]
    %v375 = vld [vmem:[%s5 + $0x10] sm:$0xff]
    %v376 = vld [vmem:[%s5 + $0x18] sm:$0xff]
    %v377 = vld [vmem:[%s5 + $0x20] sm:$0xff]
    %v378 = vld [vmem:[%s5 + $0x28] sm:$0xff]
    %v379 = vld [vmem:[%s5 + $0x30] sm:$0xff]
    %v380 = vld [vmem:[%s5 + $0x38] sm:$0xff]
    %v381 = vld [vmem:[%s5 + $0x40] sm:$0xff]
    %v382 = vld [vmem:[%s5 + $0x48] sm:$0xff]
    %v383 = vld [vmem:[%s5 + $0x50] sm:$0xff]
    %v384 = vld [vmem:[%s5 + $0x58] sm:$0xff]
    %v385 = vld [vmem:[%s5 + $0x60] sm:$0xff]
    %v386 = vld [vmem:[%s5 + $0x68] sm:$0xff]
    %v387 = vld [vmem:[%s5 + $0x70] sm:$0xff]
    %v388 = vld [vmem:[%s5 + $0x78] sm:$0xff]
    %v389 = vld [vmem:[%s5 + $0x80] sm:$0xff]
    %v390 = vld [vmem:[%s5 + $0x88] sm:$0xff]
    %v391 = vld [vmem:[%s5 + $0x90] sm:$0xff]
    %v392 = vld [vmem:[%s5 + $0x98] sm:$0xff]
    %v393 = vld [vmem:[%s5 + $0xa0] sm:$0xff]
    %v394 = vld [vmem:[%s5 + $0xa8] sm:$0xff]
    %v395 = vld [vmem:[%s5 + $0xb0] sm:$0xff]
    %v396 = vld [vmem:[%s5 + $0xb8] sm:$0xff]
    %v397 = vld [vmem:[%s5 + $0xc0] sm:$0xff]
    %v398 = vld [vmem:[%s5 + $0xc8] sm:$0xff]
    %v399 = vld [vmem:[%s5 + $0xd0] sm:$0xff]
    %v400 = vld [vmem:[%s5 + $0xd8] sm:$0xff]
    %v401 = vld [vmem:[%s5 + $0xe0] sm:$0xff]
    %v402 = vld [vmem:[%s5 + $0xe8] sm:$0xff]
    %v403 = vld [vmem:[%s5 + $0xf0] sm:$0xff]
    %v404 = vld [vmem:[%s5 + $0xf8] sm:$0xff]
    %v405 = vld [vmem:[%s5 + $0x100] sm:$0xff]
    %v406 = vld [vmem:[%s5 + $0x108] sm:$0xff]
    %v407 = vld [vmem:[%s5 + $0x110] sm:$0xff]
    %v408 = vld [vmem:[%s5 + $0x118] sm:$0xff]
    %v409 = vld [vmem:[%s5 + $0x120] sm:$0xff]
    %v410 = vld [vmem:[%s5 + $0x128] sm:$0xff]
    %v411 = vld [vmem:[%s5 + $0x130] sm:$0xff]
    %v412 = vld [vmem:[%s5 + $0x138] sm:$0xff]
    %v413 = vld [vmem:[%s5 + $0x140] sm:$0xff]
    %v414 = vld [vmem:[%s5 + $0x148] sm:$0xff]
    %v415 = vld [vmem:[%s5 + $0x150] sm:$0xff]
    %v416 = vld [vmem:[%s5 + $0x158] sm:$0xff]
    %v417 = vld [vmem:[%s5 + $0x160] sm:$0xff]
    %v418 = vld [vmem:[%s5 + $0x168] sm:$0xff]
    %v419 = vld [vmem:[%s5 + $0x170] sm:$0xff]
    %v420 = vld [vmem:[%s5 + $0x178] sm:$0xff]
    %v421 = vld [vmem:[%s6] sm:$0x7]
    %v423 = vperm.slane %v421, 0
    %v424 = vperm.slane %v421, 1
    %v425 = vperm.slane %v421, 2
    %429 = vmatpush.msra.mxu0 %v418
    %430 = vmatpush.msra.mxu0 %v415
    %431 = vmatpush.msra.mxu0 %v412
    %432 = vmatpush.msra.mxu0 %v409
    %433 = vmatpush.msra.mxu0 %v406
    %434 = vmatpush.msra.mxu0 %v403
    %435 = vmatpush.msra.mxu0 %v400
    %436 = vmatpush.msra.mxu0 %v397
    %437 = vmatpush.msra.mxu0 %v394
    %438 = vmatpush.msra.mxu0 %v391
    %439 = vmatpush.msra.mxu0 %v388
    %440 = vmatpush.msra.mxu0 %v385
    %441 = vmatpush.msra.mxu0 %v382
    %442 = vmatpush.msra.mxu0 %v379
    %443 = vmatpush.msra.mxu0 %v376
    %444 = vmatpush.msra.mxu0 %v373
    %445 = vmatmul.f32.gmra.mxu0 %v371
    %v446 = vpop.f32.mrf.mxu0
    %v447 = vadd.f32 %v423, %v446
    %448 = vmatmul.f32.gmra.mxu0 %v372
    %v449 = vpop.f32.mrf.mxu0
    %v450 = vadd.f32 %v423, %v449
    %451 = vdwg.mxu0
    %452 = vmatpush.msra.mxu0 %v419
    %453 = vmatpush.msra.mxu0 %v416
    %454 = vmatpush.msra.mxu0 %v413
    %455 = vmatpush.msra.mxu0 %v410
    %456 = vmatpush.msra.mxu0 %v407
    %457 = vmatpush.msra.mxu0 %v404
    %458 = vmatpush.msra.mxu0 %v401
    %459 = vmatpush.msra.mxu0 %v398
    %460 = vmatpush.msra.mxu0 %v395
    %461 = vmatpush.msra.mxu0 %v392
    %462 = vmatpush.msra.mxu0 %v389
    %463 = vmatpush.msra.mxu0 %v386
    %464 = vmatpush.msra.mxu0 %v383
    %465 = vmatpush.msra.mxu0 %v380
    %466 = vmatpush.msra.mxu0 %v377
    %467 = vmatpush.msra.mxu0 %v374
    %468 = vmatmul.f32.gmra.mxu0 %v371
    %v469 = vpop.f32.mrf.mxu0
    %v470 = vadd.f32 %v424, %v469
    %471 = vmatmul.f32.gmra.mxu0 %v372
    %v472 = vpop.f32.mrf.mxu0
    %v473 = vadd.f32 %v424, %v472
    %474 = vdwg.mxu0
    %475 = vmatpush.msra.mxu0 %v420
    %476 = vmatpush.msra.mxu0 %v417
    %477 = vmatpush.msra.mxu0 %v414
    %478 = vmatpush.msra.mxu0 %v411
    %479 = vmatpush.msra.mxu0 %v408
    %480 = vmatpush.msra.mxu0 %v405
    %481 = vmatpush.msra.mxu0 %v402
    %482 = vmatpush.msra.mxu0 %v399
    %483 = vmatpush.msra.mxu0 %v396
    %484 = vmatpush.msra.mxu0 %v393
    %485 = vmatpush.msra.mxu0 %v390
    %486 = vmatpush.msra.mxu0 %v387
    %487 = vmatpush.msra.mxu0 %v384
    %488 = vmatpush.msra.mxu0 %v381
    %489 = vmatpush.msra.mxu0 %v378
    %490 = vmatpush.msra.mxu0 %v375
    %491 = vmatmul.f32.gmra.mxu0 %v371
    %v492 = vpop.f32.mrf.mxu0
    %v493 = vadd.f32 %v425, %v492
    %494 = vmatmul.f32.gmra.mxu0 %v372
    %v495 = vpop.f32.mrf.mxu0
    %v496 = vadd.f32 %v425, %v495
    %497 = vdwg.mxu0
    %v498 = vld [vmem:[%s7] sm:$0xff]
    %v499 = vld [vmem:[%s7 + $0x8] sm:$0xff]
    %v500 = vld [vmem:[%s7 + $0x10] sm:$0xff]
    %v501 = vld [vmem:[%s7 + $0x18] sm:$0xff]
    %v502 = vld [vmem:[%s7 + $0x20] sm:$0xff]
    %v503 = vld [vmem:[%s7 + $0x28] sm:$0xff]
    %v504 = vld [vmem:[%s7 + $0x30] sm:$0xff]
    %v505 = vld [vmem:[%s7 + $0x38] sm:$0xff]
    %v506 = vld [vmem:[%s7 + $0x40] sm:$0xff]
    %v507 = vld [vmem:[%s7 + $0x48] sm:$0xff]
    %v508 = vld [vmem:[%s7 + $0x50] sm:$0xff]
    %v509 = vld [vmem:[%s7 + $0x58] sm:$0xff]
    %v510 = vld [vmem:[%s7 + $0x60] sm:$0xff]
    %v511 = vld [vmem:[%s7 + $0x68] sm:$0xff]
    %v512 = vld [vmem:[%s7 + $0x70] sm:$0xff]
    %v513 = vld [vmem:[%s7 + $0x78] sm:$0xff]
    %v516 = vrot.slane %v447, 1
    %v517 = vrot.slane %v447, 2
    %v518 = vrot.slane %v447, 3
    %v519 = vrot.slane %v447, 4
    %v520 = vrot.slane %v447, 5
    %v521 = vrot.slane %v447, 6
    %v522 = vrot.slane %v447, 7
    %v523 = vrot.slane %v450, 1
    %v526 = vrot.slane %v470, 1
    %v527 = vrot.slane %v470, 2
    %v528 = vrot.slane %v470, 3
    %v529 = vrot.slane %v470, 4
    %v530 = vrot.slane %v470, 5
    %v531 = vrot.slane %v470, 6
    %v532 = vrot.slane %v470, 7
    %v533 = vrot.slane %v473, 1
    %v536 = vrot.slane %v493, 1
    %v537 = vrot.slane %v493, 2
    %v538 = vrot.slane %v493, 3
    %v539 = vrot.slane %v493, 4
    %v540 = vrot.slane %v493, 5
    %v541 = vrot.slane %v493, 6
    %v542 = vrot.slane %v493, 7
    %v543 = vrot.slane %v496, 1
    %544 = vst [vmem:[#allocation1] ss:$9 sm:$0xff] %v447
    %s545 = scalar_lea.vmem [#allocation1], 1
    %546 = vst [vmem:[%s545] ss:$9 sm:$0xff] %v516
    %s547 = scalar_lea.vmem [#allocation1], 2
    %548 = vst [vmem:[%s547] ss:$9 sm:$0xff] %v517
    %s549 = scalar_lea.vmem [#allocation1], 3
    %550 = vst [vmem:[%s549] ss:$9 sm:$0xff] %v518
    %s551 = scalar_lea.vmem [#allocation1], 4
    %552 = vst [vmem:[%s551] ss:$9 sm:$0xff] %v519
    %v553 = vld [vmem:[#allocation1] sm:$0xff]
    %554 = vst [vmem:[#allocation1] ss:$9 sm:$0xff] %v470
    %s555 = scalar_lea.vmem [#allocation1], 1
    %556 = vst [vmem:[%s555] ss:$9 sm:$0xff] %v526
    %s557 = scalar_lea.vmem [#allocation1], 2
    %558 = vst [vmem:[%s557] ss:$9 sm:$0xff] %v527
    %s559 = scalar_lea.vmem [#allocation1], 3
    %560 = vst [vmem:[%s559] ss:$9 sm:$0xff] %v528
    %s561 = scalar_lea.vmem [#allocation1], 4
    %562 = vst [vmem:[%s561] ss:$9 sm:$0xff] %v529
    %v563 = vld [vmem:[#allocation1] sm:$0xff]
    %vm564 = vcmask 261120
    %v565 = vsel %vm564, %v553, 0
    %v567 = vsel %vm564, %v563, 0
    %569 = vmatpush.xpose.msra.mxu0 0.0
    %570 = vmatpush.xpose.msra.mxu0 0.0
    %571 = vmatpush.xpose.msra.mxu0 0.0
    %572 = vmatpush.xpose.msra.mxu0 0.0
    %573 = vmatpush.xpose.msra.mxu0 0.0
    %574 = vmatpush.xpose.msra.mxu0 0.0
    %575 = vmatpush.xpose.msra.mxu0 0.0
    %576 = vmatpush.xpose.msra.mxu0 0.0
    %577 = vmatpush.xpose.msra.mxu0 0.0
    %578 = vmatpush.xpose.msra.mxu0 0.0
    %579 = vmatpush.xpose.msra.mxu0 0.0
    %580 = vmatpush.xpose.msra.mxu0 0.0
    %581 = vmatpush.xpose.msra.mxu0 0.0
    %582 = vmatpush.xpose.msra.mxu0 0.0
    %583 = vmatpush.xpose.msra.mxu0 0.0
    %584 = vmatpush.xpose.msra.mxu0 %v567
    %585 = vmatmul.f32.gmra.mxu0 %v565
    %v586 = vpop.f32.mrf.mxu0
    %v587 = vadd.f32 0.0, %v586
    %588 = vdwg.mxu0
    %589 = vst [vmem:[#allocation1] ss:$9 sm:$0xff] %v520
    %s590 = scalar_lea.vmem [#allocation1], 1
    %591 = vst [vmem:[%s590] ss:$9 sm:$0xff] %v521
    %s592 = scalar_lea.vmem [#allocation1], 2
    %593 = vst [vmem:[%s592] ss:$9 sm:$0xff] %v522
    %s594 = scalar_lea.vmem [#allocation1], 3
    %595 = vst [vmem:[%s594] ss:$9 sm:$0xff] %v450
    %s596 = scalar_lea.vmem [#allocation1], 4
    %597 = vst [vmem:[%s596] ss:$9 sm:$0xff] %v523
    %v598 = vld [vmem:[#allocation1] sm:$0xff]
    %599 = vst [vmem:[#allocation1] ss:$9 sm:$0xff] %v530
    %s600 = scalar_lea.vmem [#allocation1], 1
    %601 = vst [vmem:[%s600] ss:$9 sm:$0xff] %v531
    %s602 = scalar_lea.vmem [#allocation1], 2
    %603 = vst [vmem:[%s602] ss:$9 sm:$0xff] %v532
    %s604 = scalar_lea.vmem [#allocation1], 3
    %605 = vst [vmem:[%s604] ss:$9 sm:$0xff] %v473
    %s606 = scalar_lea.vmem [#allocation1], 4
    %607 = vst [vmem:[%s606] ss:$9 sm:$0xff] %v533
    %v608 = vld [vmem:[#allocation1] sm:$0xff]
    %v609 = vsel %vm564, %v598, 0
    %v611 = vsel %vm564, %v608, 0
    %613 = vmatpush.xpose.msra.mxu0 0.0
    %614 = vmatpush.xpose.msra.mxu0 0.0
    %615 = vmatpush.xpose.msra.mxu0 0.0
    %616 = vmatpush.xpose.msra.mxu0 0.0
    %617 = vmatpush.xpose.msra.mxu0 0.0
    %618 = vmatpush.xpose.msra.mxu0 0.0
    %619 = vmatpush.xpose.msra.mxu0 0.0
    %620 = vmatpush.xpose.msra.mxu0 0.0
    %621 = vmatpush.xpose.msra.mxu0 0.0
    %622 = vmatpush.xpose.msra.mxu0 0.0
    %623 = vmatpush.xpose.msra.mxu0 0.0
    %624 = vmatpush.xpose.msra.mxu0 0.0
    %625 = vmatpush.xpose.msra.mxu0 0.0
    %626 = vmatpush.xpose.msra.mxu0 0.0
    %627 = vmatpush.xpose.msra.mxu0 0.0
    %628 = vmatpush.xpose.msra.mxu0 %v611
    %629 = vmatmul.f32.gmra.mxu0 %v609
    %v630 = vpop.f32.mrf.mxu0
    %v631 = vadd.f32 0.0, %v630
    %632 = vdwg.mxu0
    %v633 = vmul.f32 %v587, 0.17677669
    %v634 = vmul.f32 %v631, 0.17677669
    %vm635 = vcmask 36864
    %v636 = vsel %vm635, %v633, -inf
    %637 = vmax.xlane.f32.xlu0 %v636
    %v638 = vpop.xlane.xlu0 %637
    %v639 = vsel %vm635, %v634, -inf
    %640 = vmax.xlane.f32.xlu0 %v639
    %v641 = vpop.xlane.xlu0 %640
    %v642 = vsub.f32 %v633, %v638
    %v643 = vsub.f32 %v634, %v641
    %v644 = vmul.f32 %v642, 1.442695
    %v645 = vpow.pop %v644
    %v646 = vmul.f32 %v643, 1.442695
    %v647 = vpow.pop %v646
    %v648 = vsel %vm635, %v645, 0.0
    %649 = vadd.xlane.f32.xlu0 %v648
    %v650 = vpop.xlane.xlu0 %649
    %v651 = vsel %vm635, %v647, 0.0
    %652 = vadd.xlane.f32.xlu0 %v651
    %v653 = vpop.xlane.xlu0 %652
    %v654 = vrcp.pop %v650
    %v655 = vrcp.pop %v653
    %v656 = vmul.f32 %v645, %v654
    %v657 = vmul.f32 %v647, %v655
    %658 = vst [vmem:[#allocation1] ss:$9 sm:$0xff] %v493
    %s659 = scalar_lea.vmem [#allocation1], 1
    %660 = vst [vmem:[%s659] ss:$9 sm:$0xff] %v536
    %s661 = scalar_lea.vmem [#allocation1], 2
    %662 = vst [vmem:[%s661] ss:$9 sm:$0xff] %v537
    %s663 = scalar_lea.vmem [#allocation1], 3
    %664 = vst [vmem:[%s663] ss:$9 sm:$0xff] %v538
    %s665 = scalar_lea.vmem [#allocation1], 4
    %666 = vst [vmem:[%s665] ss:$9 sm:$0xff] %v539
    %v667 = vld [vmem:[#allocation1] sm:$0xff]
    %vm668 = vcmask 39936
    %v670 = vsel %vm668, %v656, 0
    %vm672 = vcmask 1044480
    %v673 = vsel %vm672, %v667, 0
    %675 = vmatpush.msra.mxu0 0.0
    %676 = vmatpush.msra.mxu0 0.0
    %677 = vmatpush.msra.mxu0 0.0
    %678 = vmatpush.msra.mxu0 0.0
    %679 = vmatpush.msra.mxu0 0.0
    %680 = vmatpush.msra.mxu0 0.0
    %681 = vmatpush.msra.mxu0 0.0
    %682 = vmatpush.msra.mxu0 0.0
    %683 = vmatpush.msra.mxu0 0.0
    %684 = vmatpush.msra.mxu0 0.0
    %685 = vmatpush.msra.mxu0 0.0
    %686 = vmatpush.msra.mxu0 0.0
    %687 = vmatpush.msra.mxu0 0.0
    %688 = vmatpush.msra.mxu0 0.0
    %689 = vmatpush.msra.mxu0 0.0
    %690 = vmatpush.msra.mxu0 %v673
    %691 = vmatmul.f32.gmra.mxu0 %v670
    %v692 = vpop.f32.mrf.mxu0
    %v693 = vadd.f32 0.0, %v692
    %694 = vdwg.mxu0
    %695 = vst [vmem:[#allocation1] ss:$9 sm:$0xff] %v540
    %s696 = scalar_lea.vmem [#allocation1], 1
    %697 = vst [vmem:[%s696] ss:$9 sm:$0xff] %v541
    %s698 = scalar_lea.vmem [#allocation1], 2
    %699 = vst [vmem:[%s698] ss:$9 sm:$0xff] %v542
    %s700 = scalar_lea.vmem [#allocation1], 3
    %701 = vst [vmem:[%s700] ss:$9 sm:$0xff] %v496
    %s702 = scalar_lea.vmem [#allocation1], 4
    %703 = vst [vmem:[%s702] ss:$9 sm:$0xff] %v543
    %v704 = vld [vmem:[#allocation1] sm:$0xff]
    %v706 = vsel %vm668, %v657, 0
    %v708 = vsel %vm672, %v704, 0
    %710 = vmatpush.msra.mxu0 0.0
    %711 = vmatpush.msra.mxu0 0.0
    %712 = vmatpush.msra.mxu0 0.0
    %713 = vmatpush.msra.mxu0 0.0
    %714 = vmatpush.msra.mxu0 0.0
    %715 = vmatpush.msra.mxu0 0.0
    %716 = vmatpush.msra.mxu0 0.0
    %717 = vmatpush.msra.mxu0 0.0
    %718 = vmatpush.msra.mxu0 0.0
    %719 = vmatpush.msra.mxu0 0.0
    %720 = vmatpush.msra.mxu0 0.0
    %721 = vmatpush.msra.mxu0 0.0
    %722 = vmatpush.msra.mxu0 0.0
    %723 = vmatpush.msra.mxu0 0.0
    %724 = vmatpush.msra.mxu0 0.0
    %725 = vmatpush.msra.mxu0 %v708
    %726 = vmatmul.f32.gmra.mxu0 %v706
    %v727 = vpop.f32.mrf.mxu0
    %v728 = vadd.f32 0.0, %v727
    %729 = vdwg.mxu0
    %v732 = vrot.slane %v693, 1
    %v733 = vrot.slane %v693, 2
    %v734 = vrot.slane %v693, 3
    %v735 = vrot.slane %v693, 4
    %v736 = vrot.slane %v728, 1
    %v737 = vrot.slane %v728, 2
    %v738 = vrot.slane %v728, 3
    %v739 = vrot.slane %v728, 4
    %740 = vst [vmem:[#allocation1] ss:$9 sm:$0xff] %v447
    %s741 = scalar_lea.vmem [#allocation1], 1
    %742 = vst [vmem:[%s741] ss:$9 sm:$0xff] %v516
    %s743 = scalar_lea.vmem [#allocation1], 2
    %744 = vst [vmem:[%s743] ss:$9 sm:$0xff] %v517
    %s745 = scalar_lea.vmem [#allocation1], 3
    %746 = vst [vmem:[%s745] ss:$9 sm:$0xff] %v518
    %s747 = scalar_lea.vmem [#allocation1], 4
    %748 = vst [vmem:[%s747] ss:$9 sm:$0xff] %v519
    %v749 = vld [vmem:[#allocation1] sm:$0xff]
    %750 = vrot.lane.b32.xlu0 %v749, 96
    %v751 = vpop.permute.xlu0 %750
    %752 = vst [vmem:[#allocation1] ss:$9 sm:$0xff] %v470
    %s753 = scalar_lea.vmem [#allocation1], 1
    %754 = vst [vmem:[%s753] ss:$9 sm:$0xff] %v526
    %s755 = scalar_lea.vmem [#allocation1], 2
    %756 = vst [vmem:[%s755] ss:$9 sm:$0xff] %v527
    %s757 = scalar_lea.vmem [#allocation1], 3
    %758 = vst [vmem:[%s757] ss:$9 sm:$0xff] %v528
    %s759 = scalar_lea.vmem [#allocation1], 4
    %760 = vst [vmem:[%s759] ss:$9 sm:$0xff] %v529
    %v761 = vld [vmem:[#allocation1] sm:$0xff]
    %762 = vrot.lane.b32.xlu0 %v761, 96
    %v763 = vpop.permute.xlu0 %762
    %v764 = vsel %vm564, %v751, 0
    %v766 = vsel %vm564, %v763, 0
    %768 = vmatpush.xpose.msra.mxu0 0.0
    %769 = vmatpush.xpose.msra.mxu0 0.0
    %770 = vmatpush.xpose.msra.mxu0 0.0
    %771 = vmatpush.xpose.msra.mxu0 0.0
    %772 = vmatpush.xpose.msra.mxu0 0.0
    %773 = vmatpush.xpose.msra.mxu0 0.0
    %774 = vmatpush.xpose.msra.mxu0 0.0
    %775 = vmatpush.xpose.msra.mxu0 0.0
    %776 = vmatpush.xpose.msra.mxu0 0.0
    %777 = vmatpush.xpose.msra.mxu0 0.0
    %778 = vmatpush.xpose.msra.mxu0 0.0
    %779 = vmatpush.xpose.msra.mxu0 0.0
    %780 = vmatpush.xpose.msra.mxu0 0.0
    %781 = vmatpush.xpose.msra.mxu0 0.0
    %782 = vmatpush.xpose.msra.mxu0 0.0
    %783 = vmatpush.xpose.msra.mxu0 %v766
    %784 = vmatmul.f32.gmra.mxu0 %v764
    %v785 = vpop.f32.mrf.mxu0
    %v786 = vadd.f32 0.0, %v785
    %787 = vdwg.mxu0
    %788 = vst [vmem:[#allocation1] ss:$9 sm:$0xff] %v520
    %s789 = scalar_lea.vmem [#allocation1], 1
    %790 = vst [vmem:[%s789] ss:$9 sm:$0xff] %v521
    %s791 = scalar_lea.vmem [#allocation1], 2
    %792 = vst [vmem:[%s791] ss:$9 sm:$0xff] %v522
    %s793 = scalar_lea.vmem [#allocation1], 3
    %794 = vst [vmem:[%s793] ss:$9 sm:$0xff] %v450
    %s795 = scalar_lea.vmem [#allocation1], 4
    %796 = vst [vmem:[%s795] ss:$9 sm:$0xff] %v523
    %v797 = vld [vmem:[#allocation1] sm:$0xff]
    %798 = vrot.lane.b32.xlu0 %v797, 96
    %v799 = vpop.permute.xlu0 %798
    %800 = vst [vmem:[#allocation1] ss:$9 sm:$0xff] %v530
    %s801 = scalar_lea.vmem [#allocation1], 1
    %802 = vst [vmem:[%s801] ss:$9 sm:$0xff] %v531
    %s803 = scalar_lea.vmem [#allocation1], 2
    %804 = vst [vmem:[%s803] ss:$9 sm:$0xff] %v532
    %s805 = scalar_lea.vmem [#allocation1], 3
    %806 = vst [vmem:[%s805] ss:$9 sm:$0xff] %v473
    %s807 = scalar_lea.vmem [#allocation1], 4
    %808 = vst [vmem:[%s807] ss:$9 sm:$0xff] %v533
    %v809 = vld [vmem:[#allocation1] sm:$0xff]
    %810 = vrot.lane.b32.xlu0 %v809, 96
    %v811 = vpop.permute.xlu0 %810
    %v812 = vsel %vm564, %v799, 0
    %v814 = vsel %vm564, %v811, 0
    %816 = vmatpush.xpose.msra.mxu0 0.0
    %817 = vmatpush.xpose.msra.mxu0 0.0
    %818 = vmatpush.xpose.msra.mxu0 0.0
    %819 = vmatpush.xpose.msra.mxu0 0.0
    %820 = vmatpush.xpose.msra.mxu0 0.0
    %821 = vmatpush.xpose.msra.mxu0 0.0
    %822 = vmatpush.xpose.msra.mxu0 0.0
    %823 = vmatpush.xpose.msra.mxu0 0.0
    %824 = vmatpush.xpose.msra.mxu0 0.0
    %825 = vmatpush.xpose.msra.mxu0 0.0
    %826 = vmatpush.xpose.msra.mxu0 0.0
    %827 = vmatpush.xpose.msra.mxu0 0.0
    %828 = vmatpush.xpose.msra.mxu0 0.0
    %829 = vmatpush.xpose.msra.mxu0 0.0
    %830 = vmatpush.xpose.msra.mxu0 0.0
    %831 = vmatpush.xpose.msra.mxu0 %v814
    %832 = vmatmul.f32.gmra.mxu0 %v812
    %v833 = vpop.f32.mrf.mxu0
    %v834 = vadd.f32 0.0, %v833
    %835 = vdwg.mxu0
    %v836 = vmul.f32 %v786, 0.17677669
    %v837 = vmul.f32 %v834, 0.17677669
    %v838 = vsel %vm635, %v836, -inf
    %839 = vmax.xlane.f32.xlu0 %v838
    %v840 = vpop.xlane.xlu0 %839
    %v841 = vsel %vm635, %v837, -inf
    %842 = vmax.xlane.f32.xlu0 %v841
    %v843 = vpop.xlane.xlu0 %842
    %v844 = vsub.f32 %v836, %v840
    %v845 = vsub.f32 %v837, %v843
    %v846 = vmul.f32 %v844, 1.442695
    %v847 = vpow.pop %v846
    %v848 = vmul.f32 %v845, 1.442695
    %v849 = vpow.pop %v848
    %v850 = vsel %vm635, %v847, 0.0
    %851 = vadd.xlane.f32.xlu0 %v850
    %v852 = vpop.xlane.xlu0 %851
    %v853 = vsel %vm635, %v849, 0.0
    %854 = vadd.xlane.f32.xlu0 %v853
    %v855 = vpop.xlane.xlu0 %854
    %v856 = vrcp.pop %v852
    %v857 = vrcp.pop %v855
    %v858 = vmul.f32 %v847, %v856
    %v859 = vmul.f32 %v849, %v857
    %860 = vst [vmem:[#allocation1] ss:$9 sm:$0xff] %v493
    %s861 = scalar_lea.vmem [#allocation1], 1
    %862 = vst [vmem:[%s861] ss:$9 sm:$0xff] %v536
    %s863 = scalar_lea.vmem [#allocation1], 2
    %864 = vst [vmem:[%s863] ss:$9 sm:$0xff] %v537
    %s865 = scalar_lea.vmem [#allocation1], 3
    %866 = vst [vmem:[%s865] ss:$9 sm:$0xff] %v538
    %s867 = scalar_lea.vmem [#allocation1], 4
    %868 = vst [vmem:[%s867] ss:$9 sm:$0xff] %v539
    %v869 = vld [vmem:[#allocation1] sm:$0xff]
    %870 = vrot.lane.b32.xlu0 %v869, 96
    %v871 = vpop.permute.xlu0 %870
    %v873 = vsel %vm668, %v858, 0
    %v875 = vsel %vm672, %v871, 0
    %877 = vmatpush.msra.mxu0 0.0
    %878 = vmatpush.msra.mxu0 0.0
    %879 = vmatpush.msra.mxu0 0.0
    %880 = vmatpush.msra.mxu0 0.0
    %881 = vmatpush.msra.mxu0 0.0
    %882 = vmatpush.msra.mxu0 0.0
    %883 = vmatpush.msra.mxu0 0.0
    %884 = vmatpush.msra.mxu0 0.0
    %885 = vmatpush.msra.mxu0 0.0
    %886 = vmatpush.msra.mxu0 0.0
    %887 = vmatpush.msra.mxu0 0.0
    %888 = vmatpush.msra.mxu0 0.0
    %889 = vmatpush.msra.mxu0 0.0
    %890 = vmatpush.msra.mxu0 0.0
    %891 = vmatpush.msra.mxu0 0.0
    %892 = vmatpush.msra.mxu0 %v875
    %893 = vmatmul.f32.gmra.mxu0 %v873
    %v894 = vpop.f32.mrf.mxu0
    %v895 = vadd.f32 0.0, %v894
    %896 = vdwg.mxu0
    %897 = vst [vmem:[#allocation1] ss:$9 sm:$0xff] %v540
    %s898 = scalar_lea.vmem [#allocation1], 1
    %899 = vst [vmem:[%s898] ss:$9 sm:$0xff] %v541
    %s900 = scalar_lea.vmem [#allocation1], 2
    %901 = vst [vmem:[%s900] ss:$9 sm:$0xff] %v542
    %s902 = scalar_lea.vmem [#allocation1], 3
    %903 = vst [vmem:[%s902] ss:$9 sm:$0xff] %v496
    %s904 = scalar_lea.vmem [#allocation1], 4
    %905 = vst [vmem:[%s904] ss:$9 sm:$0xff] %v543
    %v906 = vld [vmem:[#allocation1] sm:$0xff]
    %907 = vrot.lane.b32.xlu0 %v906, 96
    %v908 = vpop.permute.xlu0 %907
    %v910 = vsel %vm668, %v859, 0
    %v912 = vsel %vm672, %v908, 0
    %914 = vmatpush.msra.mxu0 0.0
    %915 = vmatpush.msra.mxu0 0.0
    %916 = vmatpush.msra.mxu0 0.0
    %917 = vmatpush.msra.mxu0 0.0
    %918 = vmatpush.msra.mxu0 0.0
    %919 = vmatpush.msra.mxu0 0.0
    %920 = vmatpush.msra.mxu0 0.0
    %921 = vmatpush.msra.mxu0 0.0
    %922 = vmatpush.msra.mxu0 0.0
    %923 = vmatpush.msra.mxu0 0.0
    %924 = vmatpush.msra.mxu0 0.0
    %925 = vmatpush.msra.mxu0 0.0
    %926 = vmatpush.msra.mxu0 0.0
    %927 = vmatpush.msra.mxu0 0.0
    %928 = vmatpush.msra.mxu0 0.0
    %929 = vmatpush.msra.mxu0 %v912
    %930 = vmatmul.f32.gmra.mxu0 %v910
    %v931 = vpop.f32.mrf.mxu0
    %v932 = vadd.f32 0.0, %v931
    %933 = vdwg.mxu0
    %v936 = vrot.slane %v895, 1
    %v937 = vrot.slane %v895, 2
    %v938 = vrot.slane %v895, 3
    %v939 = vrot.slane %v895, 4
    %v940 = vrot.slane %v932, 1
    %v941 = vrot.slane %v932, 2
    %v942 = vrot.slane %v932, 3
    %v943 = vrot.slane %v932, 4
    %944 = vst [vmem:[#allocation1] ss:$9 sm:$0xff] %v895
    %s945 = scalar_lea.vmem [#allocation1], 1
    %946 = vst [vmem:[%s945] ss:$9 sm:$0xff] %v936
    %s947 = scalar_lea.vmem [#allocation1], 2
    %948 = vst [vmem:[%s947] ss:$9 sm:$0xff] %v937
    %s949 = scalar_lea.vmem [#allocation1], 3
    %950 = vst [vmem:[%s949] ss:$9 sm:$0xff] %v938
    %s951 = scalar_lea.vmem [#allocation1], 4
    %952 = vst [vmem:[%s951] ss:$9 sm:$0xff] %v939
    %s953 = scalar_lea.vmem [#allocation1], 5
    %954 = vst [vmem:[%s953] ss:$9 sm:$0xff] %v932
    %s955 = scalar_lea.vmem [#allocation1], 6
    %956 = vst [vmem:[%s955] ss:$9 sm:$0xff] %v940
    %s957 = scalar_lea.vmem [#allocation1], 7
    %958 = vst [vmem:[%s957] ss:$9 sm:$0xff] %v941
    %v959 = vld [vmem:[#allocation1] sm:$0xff]
    %960 = vst [vmem:[#allocation1] ss:$9 sm:$0xff] %v942
    %961 = vst [vmem:[%s945] ss:$9 sm:$0xff] %v943
    %v962 = vld [vmem:[#allocation1] sm:$0xff]
    %v963 = vsel %vm564, %v959, 0
    %v965 = vsel %vm564, %v962, 0
    %967 = vmatpush.msra.mxu0 0.0
    %968 = vmatpush.msra.mxu0 0.0
    %969 = vmatpush.msra.mxu0 0.0
    %970 = vmatpush.msra.mxu0 0.0
    %971 = vmatpush.msra.mxu0 0.0
    %972 = vmatpush.msra.mxu0 0.0
    %973 = vmatpush.msra.mxu0 0.0
    %974 = vmatpush.msra.mxu0 0.0
    %975 = vmatpush.msra.mxu0 0.0
    %976 = vmatpush.msra.mxu0 0.0
    %977 = vmatpush.msra.mxu0 0.0
    %978 = vmatpush.msra.mxu0 0.0
    %979 = vmatpush.msra.mxu0 %v505
    %980 = vmatpush.msra.mxu0 %v504
    %981 = vmatpush.msra.mxu0 %v503
    %982 = vmatpush.msra.mxu0 %v502
    %983 = vmatmul.f32.gmra.mxu0 %v963
    %v984 = vpop.f32.mrf.mxu0
    %v985 = vadd.f32 0.0, %v984
    %986 = vmatmul.f32.gmra.mxu0 %v965
    %v987 = vpop.f32.mrf.mxu0
    %v988 = vadd.f32 0.0, %v987
    %989 = vdwg.mxu0
    %990 = vst [vmem:[#allocation1] ss:$9 sm:$0xff] %v693
    %s991 = scalar_lea.vmem [#allocation1], 1
    %992 = vst [vmem:[%s991] ss:$9 sm:$0xff] %v732
    %s993 = scalar_lea.vmem [#allocation1], 2
    %994 = vst [vmem:[%s993] ss:$9 sm:$0xff] %v733
    %s995 = scalar_lea.vmem [#allocation1], 3
    %996 = vst [vmem:[%s995] ss:$9 sm:$0xff] %v734
    %s997 = scalar_lea.vmem [#allocation1], 4
    %998 = vst [vmem:[%s997] ss:$9 sm:$0xff] %v735
    %s999 = scalar_lea.vmem [#allocation1], 5
    %1000 = vst [vmem:[%s999] ss:$9 sm:$0xff] %v728
    %s1001 = scalar_lea.vmem [#allocation1], 6
    %1002 = vst [vmem:[%s1001] ss:$9 sm:$0xff] %v736
    %s1003 = scalar_lea.vmem [#allocation1], 7
    %1004 = vst [vmem:[%s1003] ss:$9 sm:$0xff] %v737
    %v1005 = vld [vmem:[#allocation1] sm:$0xff]
    %1006 = vst [vmem:[#allocation1] ss:$9 sm:$0xff] %v738
    %1007 = vst [vmem:[%s991] ss:$9 sm:$0xff] %v739
    %v1008 = vld [vmem:[#allocation1] sm:$0xff]
    %v1009 = vsel %vm564, %v1005, 0
    %v1011 = vsel %vm564, %v1008, 0
    %1013 = vmatpush.msra.mxu0 0.0
    %1014 = vmatpush.msra.mxu0 0.0
    %1015 = vmatpush.msra.mxu0 0.0
    %1016 = vmatpush.msra.mxu0 0.0
    %1017 = vmatpush.msra.mxu0 0.0
    %1018 = vmatpush.msra.mxu0 0.0
    %1019 = vmatpush.msra.mxu0 0.0
    %1020 = vmatpush.msra.mxu0 0.0
    %1021 = vmatpush.msra.mxu0 0.0
    %1022 = vmatpush.msra.mxu0 0.0
    %1023 = vmatpush.msra.mxu0 0.0
    %1024 = vmatpush.msra.mxu0 0.0
    %1025 = vmatpush.msra.mxu0 %v501
    %1026 = vmatpush.msra.mxu0 %v500
    %1027 = vmatpush.msra.mxu0 %v499
    %1028 = vmatpush.msra.mxu0 %v498
    %1029 = vmatmul.f32.gmra.mxu0 %v1009
    %v1030 = vpop.f32.mrf.mxu0
    %v1031 = vadd.f32 %v985, %v1030
    %1032 = vmatmul.f32.gmra.mxu0 %v1011
    %v1033 = vpop.f32.mrf.mxu0
    %v1034 = vadd.f32 %v988, %v1033
    %1035 = vdwg.mxu0
    %1036 = vst [vmem:[#allocation1] ss:$9 sm:$0xff] %v447
    %s1037 = scalar_lea.vmem [#allocation1], 1
    %1038 = vst [vmem:[%s1037] ss:$9 sm:$0xff] %v516
    %s1039 = scalar_lea.vmem [#allocation1], 2
    %1040 = vst [vmem:[%s1039] ss:$9 sm:$0xff] %v517
    %s1041 = scalar_lea.vmem [#allocation1], 3
    %1042 = vst [vmem:[%s1041] ss:$9 sm:$0xff] %v518
    %s1043 = scalar_lea.vmem [#allocation1], 4
    %1044 = vst [vmem:[%s1043] ss:$9 sm:$0xff] %v519
    %v1045 = vld [vmem:[#allocation1] sm:$0xff]
    %1046 = vrot.lane.b32.xlu0 %v1045, 64
    %v1047 = vpop.permute.xlu0 %1046
    %1048 = vst [vmem:[#allocation1] ss:$9 sm:$0xff] %v470
    %s1049 = scalar_lea.vmem [#allocation1], 1
    %1050 = vst [vmem:[%s1049] ss:$9 sm:$0xff] %v526
    %s1051 = scalar_lea.vmem [#allocation1], 2
    %1052 = vst [vmem:[%s1051] ss:$9 sm:$0xff] %v527
    %s1053 = scalar_lea.vmem [#allocation1], 3
    %1054 = vst [vmem:[%s1053] ss:$9 sm:$0xff] %v528
    %s1055 = scalar_lea.vmem [#allocation1], 4
    %1056 = vst [vmem:[%s1055] ss:$9 sm:$0xff] %v529
    %v1057 = vld [vmem:[#allocation1] sm:$0xff]
    %1058 = vrot.lane.b32.xlu0 %v1057, 64
    %v1059 = vpop.permute.xlu0 %1058
    %v1060 = vsel %vm564, %v1047, 0
    %v1062 = vsel %vm564, %v1059, 0
    %1064 = vmatpush.xpose.msra.mxu0 0.0
    %1065 = vmatpush.xpose.msra.mxu0 0.0
    %1066 = vmatpush.xpose.msra.mxu0 0.0
    %1067 = vmatpush.xpose.msra.mxu0 0.0
    %1068 = vmatpush.xpose.msra.mxu0 0.0
    %1069 = vmatpush.xpose.msra.mxu0 0.0
    %1070 = vmatpush.xpose.msra.mxu0 0.0
    %1071 = vmatpush.xpose.msra.mxu0 0.0
    %1072 = vmatpush.xpose.msra.mxu0 0.0
    %1073 = vmatpush.xpose.msra.mxu0 0.0
    %1074 = vmatpush.xpose.msra.mxu0 0.0
    %1075 = vmatpush.xpose.msra.mxu0 0.0
    %1076 = vmatpush.xpose.msra.mxu0 0.0
    %1077 = vmatpush.xpose.msra.mxu0 0.0
    %1078 = vmatpush.xpose.msra.mxu0 0.0
    %1079 = vmatpush.xpose.msra.mxu0 %v1062
    %1080 = vmatmul.f32.gmra.mxu0 %v1060
    %v1081 = vpop.f32.mrf.mxu0
    %v1082 = vadd.f32 0.0, %v1081
    %1083 = vdwg.mxu0
    %1084 = vst [vmem:[#allocation1] ss:$9 sm:$0xff] %v520
    %s1085 = scalar_lea.vmem [#allocation1], 1
    %1086 = vst [vmem:[%s1085] ss:$9 sm:$0xff] %v521
    %s1087 = scalar_lea.vmem [#allocation1], 2
    %1088 = vst [vmem:[%s1087] ss:$9 sm:$0xff] %v522
    %s1089 = scalar_lea.vmem [#allocation1], 3
    %1090 = vst [vmem:[%s1089] ss:$9 sm:$0xff] %v450
    %s1091 = scalar_lea.vmem [#allocation1], 4
    %1092 = vst [vmem:[%s1091] ss:$9 sm:$0xff] %v523
    %v1093 = vld [vmem:[#allocation1] sm:$0xff]
    %1094 = vrot.lane.b32.xlu0 %v1093, 64
    %v1095 = vpop.permute.xlu0 %1094
    %1096 = vst [vmem:[#allocation1] ss:$9 sm:$0xff] %v530
    %s1097 = scalar_lea.vmem [#allocation1], 1
    %1098 = vst [vmem:[%s1097] ss:$9 sm:$0xff] %v531
    %s1099 = scalar_lea.vmem [#allocation1], 2
    %1100 = vst [vmem:[%s1099] ss:$9 sm:$0xff] %v532
    %s1101 = scalar_lea.vmem [#allocation1], 3
    %1102 = vst [vmem:[%s1101] ss:$9 sm:$0xff] %v473
    %s1103 = scalar_lea.vmem [#allocation1], 4
    %1104 = vst [vmem:[%s1103] ss:$9 sm:$0xff] %v533
    %v1105 = vld [vmem:[#allocation1] sm:$0xff]
    %1106 = vrot.lane.b32.xlu0 %v1105, 64
    %v1107 = vpop.permute.xlu0 %1106
    %v1108 = vsel %vm564, %v1095, 0
    %v1110 = vsel %vm564, %v1107, 0
    %1112 = vmatpush.xpose.msra.mxu0 0.0
    %1113 = vmatpush.xpose.msra.mxu0 0.0
    %1114 = vmatpush.xpose.msra.mxu0 0.0
    %1115 = vmatpush.xpose.msra.mxu0 0.0
    %1116 = vmatpush.xpose.msra.mxu0 0.0
    %1117 = vmatpush.xpose.msra.mxu0 0.0
    %1118 = vmatpush.xpose.msra.mxu0 0.0
    %1119 = vmatpush.xpose.msra.mxu0 0.0
    %1120 = vmatpush.xpose.msra.mxu0 0.0
    %1121 = vmatpush.xpose.msra.mxu0 0.0
    %1122 = vmatpush.xpose.msra.mxu0 0.0
    %1123 = vmatpush.xpose.msra.mxu0 0.0
    %1124 = vmatpush.xpose.msra.mxu0 0.0
    %1125 = vmatpush.xpose.msra.mxu0 0.0
    %1126 = vmatpush.xpose.msra.mxu0 0.0
    %1127 = vmatpush.xpose.msra.mxu0 %v1110
    %1128 = vmatmul.f32.gmra.mxu0 %v1108
    %v1129 = vpop.f32.mrf.mxu0
    %v1130 = vadd.f32 0.0, %v1129
    %1131 = vdwg.mxu0
    %v1132 = vmul.f32 %v1082, 0.17677669
    %v1133 = vmul.f32 %v1130, 0.17677669
    %v1134 = vsel %vm635, %v1132, -inf
    %1135 = vmax.xlane.f32.xlu0 %v1134
    %v1136 = vpop.xlane.xlu0 %1135
    %v1137 = vsel %vm635, %v1133, -inf
    %1138 = vmax.xlane.f32.xlu0 %v1137
    %v1139 = vpop.xlane.xlu0 %1138
    %v1140 = vsub.f32 %v1132, %v1136
    %v1141 = vsub.f32 %v1133, %v1139
    %v1142 = vmul.f32 %v1140, 1.442695
    %v1143 = vpow.pop %v1142
    %v1144 = vmul.f32 %v1141, 1.442695
    %v1145 = vpow.pop %v1144
    %v1146 = vsel %vm635, %v1143, 0.0
    %1147 = vadd.xlane.f32.xlu0 %v1146
    %v1148 = vpop.xlane.xlu0 %1147
    %v1149 = vsel %vm635, %v1145, 0.0
    %1150 = vadd.xlane.f32.xlu0 %v1149
    %v1151 = vpop.xlane.xlu0 %1150
    %v1152 = vrcp.pop %v1148
    %v1153 = vrcp.pop %v1151
    %v1154 = vmul.f32 %v1143, %v1152
    %v1155 = vmul.f32 %v1145, %v1153
    %1156 = vst [vmem:[#allocation1] ss:$9 sm:$0xff] %v493
    %s1157 = scalar_lea.vmem [#allocation1], 1
    %1158 = vst [vmem:[%s1157] ss:$9 sm:$0xff] %v536
    %s1159 = scalar_lea.vmem [#allocation1], 2
    %1160 = vst [vmem:[%s1159] ss:$9 sm:$0xff] %v537
    %s1161 = scalar_lea.vmem [#allocation1], 3
    %1162 = vst [vmem:[%s1161] ss:$9 sm:$0xff] %v538
    %s1163 = scalar_lea.vmem [#allocation1], 4
    %1164 = vst [vmem:[%s1163] ss:$9 sm:$0xff] %v539
    %v1165 = vld [vmem:[#allocation1] sm:$0xff]
    %1166 = vrot.lane.b32.xlu0 %v1165, 64
    %v1167 = vpop.permute.xlu0 %1166
    %v1169 = vsel %vm668, %v1154, 0
    %v1171 = vsel %vm672, %v1167, 0
    %1173 = vmatpush.msra.mxu0 0.0
    %1174 = vmatpush.msra.mxu0 0.0
    %1175 = vmatpush.msra.mxu0 0.0
    %1176 = vmatpush.msra.mxu0 0.0
    %1177 = vmatpush.msra.mxu0 0.0
    %1178 = vmatpush.msra.mxu0 0.0
    %1179 = vmatpush.msra.mxu0 0.0
    %1180 = vmatpush.msra.mxu0 0.0
    %1181 = vmatpush.msra.mxu0 0.0
    %1182 = vmatpush.msra.mxu0 0.0
    %1183 = vmatpush.msra.mxu0 0.0
    %1184 = vmatpush.msra.mxu0 0.0
    %1185 = vmatpush.msra.mxu0 0.0
    %1186 = vmatpush.msra.mxu0 0.0
    %1187 = vmatpush.msra.mxu0 0.0
    %1188 = vmatpush.msra.mxu0 %v1171
    %1189 = vmatmul.f32.gmra.mxu0 %v1169
    %v1190 = vpop.f32.mrf.mxu0
    %v1191 = vadd.f32 0.0, %v1190
    %1192 = vdwg.mxu0
    %1193 = vst [vmem:[#allocation1] ss:$9 sm:$0xff] %v540
    %s1194 = scalar_lea.vmem [#allocation1], 1
    %1195 = vst [vmem:[%s1194] ss:$9 sm:$0xff] %v541
    %s1196 = scalar_lea.vmem [#allocation1], 2
    %1197 = vst [vmem:[%s1196] ss:$9 sm:$0xff] %v542
    %s1198 = scalar_lea.vmem [#allocation1], 3
    %1199 = vst [vmem:[%s1198] ss:$9 sm:$0xff] %v496
    %s1200 = scalar_lea.vmem [#allocation1], 4
    %1201 = vst [vmem:[%s1200] ss:$9 sm:$0xff] %v543
    %v1202 = vld [vmem:[#allocation1] sm:$0xff]
    %1203 = vrot.lane.b32.xlu0 %v1202, 64
    %v1204 = vpop.permute.xlu0 %1203
    %v1206 = vsel %vm668, %v1155, 0
    %v1208 = vsel %vm672, %v1204, 0
    %1210 = vmatpush.msra.mxu0 0.0
    %1211 = vmatpush.msra.mxu0 0.0
    %1212 = vmatpush.msra.mxu0 0.0
    %1213 = vmatpush.msra.mxu0 0.0
    %1214 = vmatpush.msra.mxu0 0.0
    %1215 = vmatpush.msra.mxu0 0.0
    %1216 = vmatpush.msra.mxu0 0.0
    %1217 = vmatpush.msra.mxu0 0.0
    %1218 = vmatpush.msra.mxu0 0.0
    %1219 = vmatpush.msra.mxu0 0.0
    %1220 = vmatpush.msra.mxu0 0.0
    %1221 = vmatpush.msra.mxu0 0.0
    %1222 = vmatpush.msra.mxu0 0.0
    %1223 = vmatpush.msra.mxu0 0.0
    %1224 = vmatpush.msra.mxu0 0.0
    %1225 = vmatpush.msra.mxu0 %v1208
    %1226 = vmatmul.f32.gmra.mxu0 %v1206
    %v1227 = vpop.f32.mrf.mxu0
    %v1228 = vadd.f32 0.0, %v1227
    %1229 = vdwg.mxu0
    %v1232 = vrot.slane %v1191, 1
    %v1233 = vrot.slane %v1191, 2
    %v1234 = vrot.slane %v1191, 3
    %v1235 = vrot.slane %v1191, 4
    %v1236 = vrot.slane %v1228, 1
    %v1237 = vrot.slane %v1228, 2
    %v1238 = vrot.slane %v1228, 3
    %v1239 = vrot.slane %v1228, 4
    %1240 = vst [vmem:[#allocation1] ss:$9 sm:$0xff] %v1191
    %s1241 = scalar_lea.vmem [#allocation1], 1
    %1242 = vst [vmem:[%s1241] ss:$9 sm:$0xff] %v1232
    %s1243 = scalar_lea.vmem [#allocation1], 2
    %1244 = vst [vmem:[%s1243] ss:$9 sm:$0xff] %v1233
    %s1245 = scalar_lea.vmem [#allocation1], 3
    %1246 = vst [vmem:[%s1245] ss:$9 sm:$0xff] %v1234
    %s1247 = scalar_lea.vmem [#allocation1], 4
    %1248 = vst [vmem:[%s1247] ss:$9 sm:$0xff] %v1235
    %s1249 = scalar_lea.vmem [#allocation1], 5
    %1250 = vst [vmem:[%s1249] ss:$9 sm:$0xff] %v1228
    %s1251 = scalar_lea.vmem [#allocation1], 6
    %1252 = vst [vmem:[%s1251] ss:$9 sm:$0xff] %v1236
    %s1253 = scalar_lea.vmem [#allocation1], 7
    %1254 = vst [vmem:[%s1253] ss:$9 sm:$0xff] %v1237
    %v1255 = vld [vmem:[#allocation1] sm:$0xff]
    %1256 = vst [vmem:[#allocation1] ss:$9 sm:$0xff] %v1238
    %1257 = vst [vmem:[%s1241] ss:$9 sm:$0xff] %v1239
    %v1258 = vld [vmem:[#allocation1] sm:$0xff]
    %v1259 = vsel %vm564, %v1255, 0
    %v1261 = vsel %vm564, %v1258, 0
    %1263 = vmatpush.msra.mxu0 0.0
    %1264 = vmatpush.msra.mxu0 0.0
    %1265 = vmatpush.msra.mxu0 0.0
    %1266 = vmatpush.msra.mxu0 0.0
    %1267 = vmatpush.msra.mxu0 0.0
    %1268 = vmatpush.msra.mxu0 0.0
    %1269 = vmatpush.msra.mxu0 0.0
    %1270 = vmatpush.msra.mxu0 0.0
    %1271 = vmatpush.msra.mxu0 0.0
    %1272 = vmatpush.msra.mxu0 0.0
    %1273 = vmatpush.msra.mxu0 0.0
    %1274 = vmatpush.msra.mxu0 0.0
    %1275 = vmatpush.msra.mxu0 %v509
    %1276 = vmatpush.msra.mxu0 %v508
    %1277 = vmatpush.msra.mxu0 %v507
    %1278 = vmatpush.msra.mxu0 %v506
    %1279 = vmatmul.f32.gmra.mxu0 %v1259
    %v1280 = vpop.f32.mrf.mxu0
    %v1281 = vadd.f32 0.0, %v1280
    %1282 = vmatmul.f32.gmra.mxu0 %v1261
    %v1283 = vpop.f32.mrf.mxu0
    %v1284 = vadd.f32 0.0, %v1283
    %1285 = vdwg.mxu0
    %v1286 = vadd.f32 %v1031, %v1281
    %v1287 = vadd.f32 %v1034, %v1284
    %1288 = vst [vmem:[#allocation1] ss:$9 sm:$0xff] %v447
    %s1289 = scalar_lea.vmem [#allocation1], 1
    %1290 = vst [vmem:[%s1289] ss:$9 sm:$0xff] %v516
    %s1291 = scalar_lea.vmem [#allocation1], 2
    %1292 = vst [vmem:[%s1291] ss:$9 sm:$0xff] %v517
    %s1293 = scalar_lea.vmem [#allocation1], 3
    %1294 = vst [vmem:[%s1293] ss:$9 sm:$0xff] %v518
    %s1295 = scalar_lea.vmem [#allocation1], 4
    %1296 = vst [vmem:[%s1295] ss:$9 sm:$0xff] %v519
    %v1297 = vld [vmem:[#allocation1] sm:$0xff]
    %1298 = vrot.lane.b32.xlu0 %v1297, 32
    %v1299 = vpop.permute.xlu0 %1298
    %1300 = vst [vmem:[#allocation1] ss:$9 sm:$0xff] %v470
    %s1301 = scalar_lea.vmem [#allocation1], 1
    %1302 = vst [vmem:[%s1301] ss:$9 sm:$0xff] %v526
    %s1303 = scalar_lea.vmem [#allocation1], 2
    %1304 = vst [vmem:[%s1303] ss:$9 sm:$0xff] %v527
    %s1305 = scalar_lea.vmem [#allocation1], 3
    %1306 = vst [vmem:[%s1305] ss:$9 sm:$0xff] %v528
    %s1307 = scalar_lea.vmem [#allocation1], 4
    %1308 = vst [vmem:[%s1307] ss:$9 sm:$0xff] %v529
    %v1309 = vld [vmem:[#allocation1] sm:$0xff]
    %1310 = vrot.lane.b32.xlu0 %v1309, 32
    %v1311 = vpop.permute.xlu0 %1310
    %v1312 = vsel %vm564, %v1299, 0
    %v1314 = vsel %vm564, %v1311, 0
    %1316 = vmatpush.xpose.msra.mxu0 0.0
    %1317 = vmatpush.xpose.msra.mxu0 0.0
    %1318 = vmatpush.xpose.msra.mxu0 0.0
    %1319 = vmatpush.xpose.msra.mxu0 0.0
    %1320 = vmatpush.xpose.msra.mxu0 0.0
    %1321 = vmatpush.xpose.msra.mxu0 0.0
    %1322 = vmatpush.xpose.msra.mxu0 0.0
    %1323 = vmatpush.xpose.msra.mxu0 0.0
    %1324 = vmatpush.xpose.msra.mxu0 0.0
    %1325 = vmatpush.xpose.msra.mxu0 0.0
    %1326 = vmatpush.xpose.msra.mxu0 0.0
    %1327 = vmatpush.xpose.msra.mxu0 0.0
    %1328 = vmatpush.xpose.msra.mxu0 0.0
    %1329 = vmatpush.xpose.msra.mxu0 0.0
    %1330 = vmatpush.xpose.msra.mxu0 0.0
    %1331 = vmatpush.xpose.msra.mxu0 %v1314
    %1332 = vmatmul.f32.gmra.mxu0 %v1312
    %v1333 = vpop.f32.mrf.mxu0
    %v1334 = vadd.f32 0.0, %v1333
    %1335 = vdwg.mxu0
    %1336 = vst [vmem:[#allocation1] ss:$9 sm:$0xff] %v520
    %s1337 = scalar_lea.vmem [#allocation1], 1
    %1338 = vst [vmem:[%s1337] ss:$9 sm:$0xff] %v521
    %s1339 = scalar_lea.vmem [#allocation1], 2
    %1340 = vst [vmem:[%s1339] ss:$9 sm:$0xff] %v522
    %s1341 = scalar_lea.vmem [#allocation1], 3
    %1342 = vst [vmem:[%s1341] ss:$9 sm:$0xff] %v450
    %s1343 = scalar_lea.vmem [#allocation1], 4
    %1344 = vst [vmem:[%s1343] ss:$9 sm:$0xff] %v523
    %v1345 = vld [vmem:[#allocation1] sm:$0xff]
    %1346 = vrot.lane.b32.xlu0 %v1345, 32
    %v1347 = vpop.permute.xlu0 %1346
    %1348 = vst [vmem:[#allocation1] ss:$9 sm:$0xff] %v530
    %s1349 = scalar_lea.vmem [#allocation1], 1
    %1350 = vst [vmem:[%s1349] ss:$9 sm:$0xff] %v531
    %s1351 = scalar_lea.vmem [#allocation1], 2
    %1352 = vst [vmem:[%s1351] ss:$9 sm:$0xff] %v532
    %s1353 = scalar_lea.vmem [#allocation1], 3
    %1354 = vst [vmem:[%s1353] ss:$9 sm:$0xff] %v473
    %s1355 = scalar_lea.vmem [#allocation1], 4
    %1356 = vst [vmem:[%s1355] ss:$9 sm:$0xff] %v533
    %v1357 = vld [vmem:[#allocation1] sm:$0xff]
    %1358 = vrot.lane.b32.xlu0 %v1357, 32
    %v1359 = vpop.permute.xlu0 %1358
    %v1360 = vsel %vm564, %v1347, 0
    %v1362 = vsel %vm564, %v1359, 0
    %1364 = vmatpush.xpose.msra.mxu0 0.0
    %1365 = vmatpush.xpose.msra.mxu0 0.0
    %1366 = vmatpush.xpose.msra.mxu0 0.0
    %1367 = vmatpush.xpose.msra.mxu0 0.0
    %1368 = vmatpush.xpose.msra.mxu0 0.0
    %1369 = vmatpush.xpose.msra.mxu0 0.0
    %1370 = vmatpush.xpose.msra.mxu0 0.0
    %1371 = vmatpush.xpose.msra.mxu0 0.0
    %1372 = vmatpush.xpose.msra.mxu0 0.0
    %1373 = vmatpush.xpose.msra.mxu0 0.0
    %1374 = vmatpush.xpose.msra.mxu0 0.0
    %1375 = vmatpush.xpose.msra.mxu0 0.0
    %1376 = vmatpush.xpose.msra.mxu0 0.0
    %1377 = vmatpush.xpose.msra.mxu0 0.0
    %1378 = vmatpush.xpose.msra.mxu0 0.0
    %1379 = vmatpush.xpose.msra.mxu0 %v1362
    %1380 = vmatmul.f32.gmra.mxu0 %v1360
    %v1381 = vpop.f32.mrf.mxu0
    %v1382 = vadd.f32 0.0, %v1381
    %1383 = vdwg.mxu0
    %v1384 = vmul.f32 %v1334, 0.17677669
    %v1385 = vmul.f32 %v1382, 0.17677669
    %v1386 = vsel %vm635, %v1384, -inf
    %1387 = vmax.xlane.f32.xlu0 %v1386
    %v1388 = vpop.xlane.xlu0 %1387
    %v1389 = vsel %vm635, %v1385, -inf
    %1390 = vmax.xlane.f32.xlu0 %v1389
    %v1391 = vpop.xlane.xlu0 %1390
    %v1392 = vsub.f32 %v1384, %v1388
    %v1393 = vsub.f32 %v1385, %v1391
    %v1394 = vmul.f32 %v1392, 1.442695
    %v1395 = vpow.pop %v1394
    %v1396 = vmul.f32 %v1393, 1.442695
    %v1397 = vpow.pop %v1396
    %v1398 = vsel %vm635, %v1395, 0.0
    %1399 = vadd.xlane.f32.xlu0 %v1398
    %v1400 = vpop.xlane.xlu0 %1399
    %v1401 = vsel %vm635, %v1397, 0.0
    %1402 = vadd.xlane.f32.xlu0 %v1401
    %v1403 = vpop.xlane.xlu0 %1402
    %v1404 = vrcp.pop %v1400
    %v1405 = vrcp.pop %v1403
    %v1406 = vmul.f32 %v1395, %v1404
    %v1407 = vmul.f32 %v1397, %v1405
    %1408 = vst [vmem:[#allocation1] ss:$9 sm:$0xff] %v493
    %s1409 = scalar_lea.vmem [#allocation1], 1
    %1410 = vst [vmem:[%s1409] ss:$9 sm:$0xff] %v536
    %s1411 = scalar_lea.vmem [#allocation1], 2
    %1412 = vst [vmem:[%s1411] ss:$9 sm:$0xff] %v537
    %s1413 = scalar_lea.vmem [#allocation1], 3
    %1414 = vst [vmem:[%s1413] ss:$9 sm:$0xff] %v538
    %s1415 = scalar_lea.vmem [#allocation1], 4
    %1416 = vst [vmem:[%s1415] ss:$9 sm:$0xff] %v539
    %v1417 = vld [vmem:[#allocation1] sm:$0xff]
    %1418 = vrot.lane.b32.xlu0 %v1417, 32
    %v1419 = vpop.permute.xlu0 %1418
    %v1421 = vsel %vm668, %v1406, 0
    %v1423 = vsel %vm672, %v1419, 0
    %1425 = vmatpush.msra.mxu0 0.0
    %1426 = vmatpush.msra.mxu0 0.0
    %1427 = vmatpush.msra.mxu0 0.0
    %1428 = vmatpush.msra.mxu0 0.0
    %1429 = vmatpush.msra.mxu0 0.0
    %1430 = vmatpush.msra.mxu0 0.0
    %1431 = vmatpush.msra.mxu0 0.0
    %1432 = vmatpush.msra.mxu0 0.0
    %1433 = vmatpush.msra.mxu0 0.0
    %1434 = vmatpush.msra.mxu0 0.0
    %1435 = vmatpush.msra.mxu0 0.0
    %1436 = vmatpush.msra.mxu0 0.0
    %1437 = vmatpush.msra.mxu0 0.0
    %1438 = vmatpush.msra.mxu0 0.0
    %1439 = vmatpush.msra.mxu0 0.0
    %1440 = vmatpush.msra.mxu0 %v1423
    %1441 = vmatmul.f32.gmra.mxu0 %v1421
    %v1442 = vpop.f32.mrf.mxu0
    %v1443 = vadd.f32 0.0, %v1442
    %1444 = vdwg.mxu0
    %1445 = vst [vmem:[#allocation1] ss:$9 sm:$0xff] %v540
    %s1446 = scalar_lea.vmem [#allocation1], 1
    %1447 = vst [vmem:[%s1446] ss:$9 sm:$0xff] %v541
    %s1448 = scalar_lea.vmem [#allocation1], 2
    %1449 = vst [vmem:[%s1448] ss:$9 sm:$0xff] %v542
    %s1450 = scalar_lea.vmem [#allocation1], 3
    %1451 = vst [vmem:[%s1450] ss:$9 sm:$0xff] %v496
    %s1452 = scalar_lea.vmem [#allocation1], 4
    %1453 = vst [vmem:[%s1452] ss:$9 sm:$0xff] %v543
    %v1454 = vld [vmem:[#allocation1] sm:$0xff]
    %1455 = vrot.lane.b32.xlu0 %v1454, 32
    %v1456 = vpop.permute.xlu0 %1455
    %v1458 = vsel %vm668, %v1407, 0
    %v1460 = vsel %vm672, %v1456, 0
    %1462 = vmatpush.msra.mxu0 0.0
    %1463 = vmatpush.msra.mxu0 0.0
    %1464 = vmatpush.msra.mxu0 0.0
    %1465 = vmatpush.msra.mxu0 0.0
    %1466 = vmatpush.msra.mxu0 0.0
    %1467 = vmatpush.msra.mxu0 0.0
    %1468 = vmatpush.msra.mxu0 0.0
    %1469 = vmatpush.msra.mxu0 0.0
    %1470 = vmatpush.msra.mxu0 0.0
    %1471 = vmatpush.msra.mxu0 0.0
    %1472 = vmatpush.msra.mxu0 0.0
    %1473 = vmatpush.msra.mxu0 0.0
    %1474 = vmatpush.msra.mxu0 0.0
    %1475 = vmatpush.msra.mxu0 0.0
    %1476 = vmatpush.msra.mxu0 0.0
    %1477 = vmatpush.msra.mxu0 %v1460
    %1478 = vmatmul.f32.gmra.mxu0 %v1458
    %v1479 = vpop.f32.mrf.mxu0
    %v1480 = vadd.f32 0.0, %v1479
    %1481 = vdwg.mxu0
    %v1484 = vrot.slane %v1443, 1
    %v1485 = vrot.slane %v1443, 2
    %v1486 = vrot.slane %v1443, 3
    %v1487 = vrot.slane %v1443, 4
    %v1488 = vrot.slane %v1480, 1
    %v1489 = vrot.slane %v1480, 2
    %v1490 = vrot.slane %v1480, 3
    %v1491 = vrot.slane %v1480, 4
    %1492 = vst [vmem:[#allocation1] ss:$9 sm:$0xff] %v1443
    %s1493 = scalar_lea.vmem [#allocation1], 1
    %1494 = vst [vmem:[%s1493] ss:$9 sm:$0xff] %v1484
    %s1495 = scalar_lea.vmem [#allocation1], 2
    %1496 = vst [vmem:[%s1495] ss:$9 sm:$0xff] %v1485
    %s1497 = scalar_lea.vmem [#allocation1], 3
    %1498 = vst [vmem:[%s1497] ss:$9 sm:$0xff] %v1486
    %s1499 = scalar_lea.vmem [#allocation1], 4
    %1500 = vst [vmem:[%s1499] ss:$9 sm:$0xff] %v1487
    %s1501 = scalar_lea.vmem [#allocation1], 5
    %1502 = vst [vmem:[%s1501] ss:$9 sm:$0xff] %v1480
    %s1503 = scalar_lea.vmem [#allocation1], 6
    %1504 = vst [vmem:[%s1503] ss:$9 sm:$0xff] %v1488
    %s1505 = scalar_lea.vmem [#allocation1], 7
    %1506 = vst [vmem:[%s1505] ss:$9 sm:$0xff] %v1489
    %v1507 = vld [vmem:[#allocation1] sm:$0xff]
    %1508 = vst [vmem:[#allocation1] ss:$9 sm:$0xff] %v1490
    %1509 = vst [vmem:[%s1493] ss:$9 sm:$0xff] %v1491
    %v1510 = vld [vmem:[#allocation1] sm:$0xff]
    %v1511 = vsel %vm564, %v1507, 0
    %v1513 = vsel %vm564, %v1510, 0
    %1515 = vmatpush.msra.mxu0 0.0
    %1516 = vmatpush.msra.mxu0 0.0
    %1517 = vmatpush.msra.mxu0 0.0
    %1518 = vmatpush.msra.mxu0 0.0
    %1519 = vmatpush.msra.mxu0 0.0
    %1520 = vmatpush.msra.mxu0 0.0
    %1521 = vmatpush.msra.mxu0 0.0
    %1522 = vmatpush.msra.mxu0 0.0
    %1523 = vmatpush.msra.mxu0 0.0
    %1524 = vmatpush.msra.mxu0 0.0
    %1525 = vmatpush.msra.mxu0 0.0
    %1526 = vmatpush.msra.mxu0 0.0
    %1527 = vmatpush.msra.mxu0 %v513
    %1528 = vmatpush.msra.mxu0 %v512
    %1529 = vmatpush.msra.mxu0 %v511
    %1530 = vmatpush.msra.mxu0 %v510
    %1531 = vmatmul.f32.gmra.mxu0 %v1511
    %v1532 = vpop.f32.mrf.mxu0
    %v1533 = vadd.f32 0.0, %v1532
    %1534 = vmatmul.f32.gmra.mxu0 %v1513
    %v1535 = vpop.f32.mrf.mxu0
    %v1536 = vadd.f32 0.0, %v1535
    %1537 = vdwg.mxu0
    %v1538 = vadd.f32 %v1286, %v1533
    %v1539 = vadd.f32 %v1287, %v1536
    %v1540 = vadd.f32 %v306, %v1538
    %v1541 = vadd.f32 %v309, %v1539
    %v1542 = vld [vmem:[%s8] sm:$0x1]
    %v1544 = vperm.slane %v1542, 0
    %v1546 = vadd.f32 %v1540, %v1544
    %v1547 = vadd.f32 %v1541, %v1544
    %v1548 = vld [vmem:[%s9] sm:$0x1]
    %v1549 = vld [vmem:[%s10] sm:$0x1]
    %1550 = vadd.xlane.f32.xlu0 %v1546
    %v1551 = vpop.xlane.xlu0 %1550
    %v1552 = vsel %vm315, %v1547, 0.0
    %1553 = vadd.xlane.f32.xlu0 %v1552
    %v1554 = vpop.xlane.xlu0 %1553
    %v1555 = vmul.f32 %v1551, %v325
    %v1556 = vmul.f32 %v1554, %v325
    %v1557 = vsub.f32 %v1546, %v1555
    %v1558 = vsub.f32 %v1547, %v1556
    %v1559 = vmul.f32 %v1557, %v1557
    %v1560 = vmul.f32 %v1558, %v1558
    %1561 = vadd.xlane.f32.xlu0 %v1559
    %v1562 = vpop.xlane.xlu0 %1561
    %v1563 = vsel %vm315, %v1560, 0.0
    %1564 = vadd.xlane.f32.xlu0 %v1563
    %v1565 = vpop.xlane.xlu0 %1564
    %v1566 = vmul.f32 %v1562, %v325
    %v1567 = vmul.f32 %v1565, %v325
    %v1568 = vadd.f32 %v1566, 1e-06
    %v1569 = vadd.f32 %v1567, 1e-06
    %v1570 = vrsqrt.pop %v1568
    %v1571 = vmul.f32 %v1570, %v1568
    %v1572 = vmul.f32 %v1571, %v1570
    %v1573 = vmul.f32 0.5, %v1572
    %v1574 = vsub.f32 1.5, %v1573
    %v1575 = vmul.f32 %v1570, %v1574
    %vm1576 = vweird.f32 %v1568
    %vm1577 = vweird.f32 %v1570
    %vm1578 = vmor %vm1576, %vm1577
    %v1579 = vsel %vm1578, %v1570, %v1575
    %v1580 = vrsqrt.pop %v1569
    %v1581 = vmul.f32 %v1580, %v1569
    %v1582 = vmul.f32 %v1581, %v1580
    %v1583 = vmul.f32 0.5, %v1582
    %v1584 = vsub.f32 1.5, %v1583
    %v1585 = vmul.f32 %v1580, %v1584
    %vm1586 = vweird.f32 %v1569
    %vm1587 = vweird.f32 %v1580
    %vm1588 = vmor %vm1586, %vm1587
    %v1589 = vsel %vm1588, %v1580, %v1585
    %v1590 = vmul.f32 %v1557, %v1579
    %v1591 = vmul.f32 %v1558, %v1589
    %v1593 = vperm.slane %v1548, 0
    %v1595 = vmul.f32 %v1590, %v1593
    %v1596 = vmul.f32 %v1591, %v1593
    %v1598 = vperm.slane %v1549, 0
    %v1600 = vadd.f32 %v1595, %v1598
    %v1601 = vadd.f32 %v1596, %v1598
    %v1602 = vld [vmem:[%s11] sm:$0xff]
    %v1603 = vld [vmem:[%s11 + $0x8] sm:$0xff]
    %v1604 = vld [vmem:[%s11 + $0x10] sm:$0xff]
    %v1605 = vld [vmem:[%s11 + $0x18] sm:$0xff]
    %v1606 = vld [vmem:[%s11 + $0x20] sm:$0xff]
    %v1607 = vld [vmem:[%s11 + $0x28] sm:$0xff]
    %v1608 = vld [vmem:[%s11 + $0x30] sm:$0xff]
    %v1609 = vld [vmem:[%s11 + $0x38] sm:$0xff]
    %v1610 = vld [vmem:[%s11 + $0x40] sm:$0xff]
    %v1611 = vld [vmem:[%s11 + $0x48] sm:$0xff]
    %v1612 = vld [vmem:[%s11 + $0x50] sm:$0xff]
    %v1613 = vld [vmem:[%s11 + $0x58] sm:$0xff]
    %v1614 = vld [vmem:[%s11 + $0x60] sm:$0xff]
    %v1615 = vld [vmem:[%s11 + $0x68] sm:$0xff]
    %v1616 = vld [vmem:[%s11 + $0x70] sm:$0xff]
    %v1617 = vld [vmem:[%s11 + $0x78] sm:$0xff]
    %v1618 = vld [vmem:[%s11 + $0x80] sm:$0xff]
    %v1619 = vld [vmem:[%s11 + $0x88] sm:$0xff]
    %v1620 = vld [vmem:[%s11 + $0x90] sm:$0xff]
    %v1621 = vld [vmem:[%s11 + $0x98] sm:$0xff]
    %v1622 = vld [vmem:[%s11 + $0xa0] sm:$0xff]
    %v1623 = vld [vmem:[%s11 + $0xa8] sm:$0xff]
    %v1624 = vld [vmem:[%s11 + $0xb0] sm:$0xff]
    %v1625 = vld [vmem:[%s11 + $0xb8] sm:$0xff]
    %v1626 = vld [vmem:[%s11 + $0xc0] sm:$0xff]
    %v1627 = vld [vmem:[%s11 + $0xc8] sm:$0xff]
    %v1628 = vld [vmem:[%s11 + $0xd0] sm:$0xff]
    %v1629 = vld [vmem:[%s11 + $0xd8] sm:$0xff]
    %v1630 = vld [vmem:[%s11 + $0xe0] sm:$0xff]
    %v1631 = vld [vmem:[%s11 + $0xe8] sm:$0xff]
    %v1632 = vld [vmem:[%s11 + $0xf0] sm:$0xff]
    %v1633 = vld [vmem:[%s11 + $0xf8] sm:$0xff]
    %v1634 = vld [vmem:[%s12] sm:$0x3]
    %v1636 = vperm.slane %v1634, 0
    %v1637 = vperm.slane %v1634, 1
    %1640 = vmatpush.msra.mxu0 %v1632
    %1641 = vmatpush.msra.mxu0 %v1630
    %1642 = vmatpush.msra.mxu0 %v1628
    %1643 = vmatpush.msra.mxu0 %v1626
    %1644 = vmatpush.msra.mxu0 %v1624
    %1645 = vmatpush.msra.mxu0 %v1622
    %1646 = vmatpush.msra.mxu0 %v1620
    %1647 = vmatpush.msra.mxu0 %v1618
    %1648 = vmatpush.msra.mxu0 %v1616
    %1649 = vmatpush.msra.mxu0 %v1614
    %1650 = vmatpush.msra.mxu0 %v1612
    %1651 = vmatpush.msra.mxu0 %v1610
    %1652 = vmatpush.msra.mxu0 %v1608
    %1653 = vmatpush.msra.mxu0 %v1606
    %1654 = vmatpush.msra.mxu0 %v1604
    %1655 = vmatpush.msra.mxu0 %v1602
    %1656 = vmatmul.f32.gmra.mxu0 %v1600
    %v1657 = vpop.f32.mrf.mxu0
    %v1658 = vadd.f32 %v1636, %v1657
    %1659 = vmatmul.f32.gmra.mxu0 %v1601
    %v1660 = vpop.f32.mrf.mxu0
    %v1661 = vadd.f32 %v1636, %v1660
    %1662 = vdwg.mxu0
    %1663 = vmatpush.msra.mxu0 %v1633
    %1664 = vmatpush.msra.mxu0 %v1631
    %1665 = vmatpush.msra.mxu0 %v1629
    %1666 = vmatpush.msra.mxu0 %v1627
    %1667 = vmatpush.msra.mxu0 %v1625
    %1668 = vmatpush.msra.mxu0 %v1623
    %1669 = vmatpush.msra.mxu0 %v1621
    %1670 = vmatpush.msra.mxu0 %v1619
    %1671 = vmatpush.msra.mxu0 %v1617
    %1672 = vmatpush.msra.mxu0 %v1615
    %1673 = vmatpush.msra.mxu0 %v1613
    %1674 = vmatpush.msra.mxu0 %v1611
    %1675 = vmatpush.msra.mxu0 %v1609
    %1676 = vmatpush.msra.mxu0 %v1607
    %1677 = vmatpush.msra.mxu0 %v1605
    %1678 = vmatpush.msra.mxu0 %v1603
    %1679 = vmatmul.f32.gmra.mxu0 %v1600
    %v1680 = vpop.f32.mrf.mxu0
    %v1681 = vadd.f32 %v1637, %v1680
    %1682 = vmatmul.f32.gmra.mxu0 %v1601
    %v1683 = vpop.f32.mrf.mxu0
    %v1684 = vadd.f32 %v1637, %v1683
    %1685 = vdwg.mxu0
    %v1686 = vmul.f32 %v1658, 0.5
    %v1687 = vmul.f32 %v1681, 0.5
    %v1688 = vmul.f32 %v1661, 0.5
    %v1689 = vmul.f32 %v1684, 0.5
    %v1690 = vmul.f32 %v1658, 0.70710677
    %v1691 = vmul.f32 %v1681, 0.70710677
    %v1692 = vmul.f32 %v1661, 0.70710677
    %v1693 = vmul.f32 %v1684, 0.70710677
    %v1694 = vmul.f32 %v1690, %v1690
    %v1695 = vmin.f32 16.0, %v1694
    %v1696 = vmul.f32 %v1695, 2.1237322e-06
    %v1697 = vadd.f32 %v1696, 0.00028619796
    %v1698 = vmul.f32 %v1695, %v1697
    %v1699 = vadd.f32 %v1698, 0.0036580483
    %v1700 = vmul.f32 %v1695, %v1699
    %v1701 = vadd.f32 %v1700, 0.05243302
    %v1702 = vmul.f32 %v1695, %v1701
    %v1703 = vadd.f32 %v1702, 0.18741608
    %v1704 = vmul.f32 %v1695, %v1703
    %v1705 = vadd.f32 %v1704, 1.1283791
    %v1706 = vmul.f32 %v1690, %v1705
    %v1707 = vmul.f32 %v1695, 3.8918573e-05
    %v1708 = vadd.f32 %v1707, 0.001143296
    %v1709 = vmul.f32 %v1695, %v1708
    %v1710 = vadd.f32 %v1709, 0.014752088
    %v1711 = vmul.f32 %v1695, %v1710
    %v1712 = vadd.f32 %v1711, 0.112945676
    %v1713 = vmul.f32 %v1695, %v1712
    %v1714 = vadd.f32 %v1713, 0.4994258
    %v1715 = vmul.f32 %v1695, %v1714
    %v1716 = vadd.f32 %v1715, 1.0
    %v1717 = vrcp.pop %v1716
    %v1718 = vmul.f32 %v1716, %v1717
    %v1719 = vsub.f32 1.0, %v1718
    %v1720 = vmul.f32 %v1717, %v1719
    %v1721 = vadd.f32 %v1717, %v1720
    %vm1722 = vweird.f32 %v1716
    %vm1723 = vweird.f32 %v1717
    %vm1724 = vmor %vm1722, %vm1723
    %v1725 = vsel %vm1724, %v1717, %v1721
    %v1726 = vand.u32 2147483647, %v1716
    %vm1727 = vcmp.eq.f32.partialorder %v1726, 8.507059e+37
    %v1728 = vand.u32 %v1716, 2147483648
    %v1729 = vor.u32 1.1754944e-38, %v1728
    %v1730 = vsel %vm1727, %v1729, %v1725
    %v1731 = vmul.f32 %v1706, %v1730
    %v1732 = vmin.f32 %v1731, 1.0
    %v1733 = vmax.f32 %v1732, -1.0
    %v1734 = vmul.f32 %v1691, %v1691
    %v1735 = vmin.f32 16.0, %v1734
    %v1736 = vmul.f32 %v1735, 2.1237322e-06
    %v1737 = vadd.f32 %v1736, 0.00028619796
    %v1738 = vmul.f32 %v1735, %v1737
    %v1739 = vadd.f32 %v1738, 0.0036580483
    %v1740 = vmul.f32 %v1735, %v1739
    %v1741 = vadd.f32 %v1740, 0.05243302
    %v1742 = vmul.f32 %v1735, %v1741
    %v1743 = vadd.f32 %v1742, 0.18741608
    %v1744 = vmul.f32 %v1735, %v1743
    %v1745 = vadd.f32 %v1744, 1.1283791
    %v1746 = vmul.f32 %v1691, %v1745
    %v1747 = vmul.f32 %v1735, 3.8918573e-05
    %v1748 = vadd.f32 %v1747, 0.001143296
    %v1749 = vmul.f32 %v1735, %v1748
    %v1750 = vadd.f32 %v1749, 0.014752088
    %v1751 = vmul.f32 %v1735, %v1750
    %v1752 = vadd.f32 %v1751, 0.112945676
    %v1753 = vmul.f32 %v1735, %v1752
    %v1754 = vadd.f32 %v1753, 0.4994258
    %v1755 = vmul.f32 %v1735, %v1754
    %v1756 = vadd.f32 %v1755, 1.0
    %v1757 = vrcp.pop %v1756
    %v1758 = vmul.f32 %v1756, %v1757
    %v1759 = vsub.f32 1.0, %v1758
    %v1760 = vmul.f32 %v1757, %v1759
    %v1761 = vadd.f32 %v1757, %v1760
    %vm1762 = vweird.f32 %v1756
    %vm1763 = vweird.f32 %v1757
    %vm1764 = vmor %vm1762, %vm1763
    %v1765 = vsel %vm1764, %v1757, %v1761
    %v1766 = vand.u32 2147483647, %v1756
    %vm1767 = vcmp.eq.f32.partialorder %v1766, 8.507059e+37
    %v1768 = vand.u32 %v1756, 2147483648
    %v1769 = vor.u32 1.1754944e-38, %v1768
    %v1770 = vsel %vm1767, %v1769, %v1765
    %v1771 = vmul.f32 %v1746, %v1770
    %v1772 = vmin.f32 %v1771, 1.0
    %v1773 = vmax.f32 %v1772, -1.0
    %v1774 = vmul.f32 %v1692, %v1692
    %v1775 = vmin.f32 16.0, %v1774
    %v1776 = vmul.f32 %v1775, 2.1237322e-06
    %v1777 = vadd.f32 %v1776, 0.00028619796
    %v1778 = vmul.f32 %v1775, %v1777
    %v1779 = vadd.f32 %v1778, 0.0036580483
    %v1780 = vmul.f32 %v1775, %v1779
    %v1781 = vadd.f32 %v1780, 0.05243302
    %v1782 = vmul.f32 %v1775, %v1781
    %v1783 = vadd.f32 %v1782, 0.18741608
    %v1784 = vmul.f32 %v1775, %v1783
    %v1785 = vadd.f32 %v1784, 1.1283791
    %v1786 = vmul.f32 %v1692, %v1785
    %v1787 = vmul.f32 %v1775, 3.8918573e-05
    %v1788 = vadd.f32 %v1787, 0.001143296
    %v1789 = vmul.f32 %v1775, %v1788
    %v1790 = vadd.f32 %v1789, 0.014752088
    %v1791 = vmul.f32 %v1775, %v1790
    %v1792 = vadd.f32 %v1791, 0.112945676
    %v1793 = vmul.f32 %v1775, %v1792
    %v1794 = vadd.f32 %v1793, 0.4994258
    %v1795 = vmul.f32 %v1775, %v1794
    %v1796 = vadd.f32 %v1795, 1.0
    %v1797 = vrcp.pop %v1796
    %v1798 = vmul.f32 %v1796, %v1797
    %v1799 = vsub.f32 1.0, %v1798
    %v1800 = vmul.f32 %v1797, %v1799
    %v1801 = vadd.f32 %v1797, %v1800
    %vm1802 = vweird.f32 %v1796
    %vm1803 = vweird.f32 %v1797
    %vm1804 = vmor %vm1802, %vm1803
    %v1805 = vsel %vm1804, %v1797, %v1801
    %v1806 = vand.u32 2147483647, %v1796
    %vm1807 = vcmp.eq.f32.partialorder %v1806, 8.507059e+37
    %v1808 = vand.u32 %v1796, 2147483648
    %v1809 = vor.u32 1.1754944e-38, %v1808
    %v1810 = vsel %vm1807, %v1809, %v1805
    %v1811 = vmul.f32 %v1786, %v1810
    %v1812 = vmin.f32 %v1811, 1.0
    %v1813 = vmax.f32 %v1812, -1.0
    %v1814 = vmul.f32 %v1693, %v1693
    %v1815 = vmin.f32 16.0, %v1814
    %v1816 = vmul.f32 %v1815, 2.1237322e-06
    %v1817 = vadd.f32 %v1816, 0.00028619796
    %v1818 = vmul.f32 %v1815, %v1817
    %v1819 = vadd.f32 %v1818, 0.0036580483
    %v1820 = vmul.f32 %v1815, %v1819
    %v1821 = vadd.f32 %v1820, 0.05243302
    %v1822 = vmul.f32 %v1815, %v1821
    %v1823 = vadd.f32 %v1822, 0.18741608
    %v1824 = vmul.f32 %v1815, %v1823
    %v1825 = vadd.f32 %v1824, 1.1283791
    %v1826 = vmul.f32 %v1693, %v1825
    %v1827 = vmul.f32 %v1815, 3.8918573e-05
    %v1828 = vadd.f32 %v1827, 0.001143296
    %v1829 = vmul.f32 %v1815, %v1828
    %v1830 = vadd.f32 %v1829, 0.014752088
    %v1831 = vmul.f32 %v1815, %v1830
    %v1832 = vadd.f32 %v1831, 0.112945676
    %v1833 = vmul.f32 %v1815, %v1832
    %v1834 = vadd.f32 %v1833, 0.4994258
    %v1835 = vmul.f32 %v1815, %v1834
    %v1836 = vadd.f32 %v1835, 1.0
    %v1837 = vrcp.pop %v1836
    %v1838 = vmul.f32 %v1836, %v1837
    %v1839 = vsub.f32 1.0, %v1838
    %v1840 = vmul.f32 %v1837, %v1839
    %v1841 = vadd.f32 %v1837, %v1840
    %vm1842 = vweird.f32 %v1836
    %vm1843 = vweird.f32 %v1837
    %vm1844 = vmor %vm1842, %vm1843
    %v1845 = vsel %vm1844, %v1837, %v1841
    %v1846 = vand.u32 2147483647, %v1836
    %vm1847 = vcmp.eq.f32.partialorder %v1846, 8.507059e+37
    %v1848 = vand.u32 %v1836, 2147483648
    %v1849 = vor.u32 1.1754944e-38, %v1848
    %v1850 = vsel %vm1847, %v1849, %v1845
    %v1851 = vmul.f32 %v1826, %v1850
    %v1852 = vmin.f32 %v1851, 1.0
    %v1853 = vmax.f32 %v1852, -1.0
    %v1854 = vadd.f32 %v1733, 1.0
    %v1855 = vadd.f32 %v1773, 1.0
    %v1856 = vadd.f32 %v1813, 1.0
    %v1857 = vadd.f32 %v1853, 1.0
    %v1858 = vmul.f32 %v1686, %v1854
    %v1859 = vmul.f32 %v1687, %v1855
    %v1860 = vmul.f32 %v1688, %v1856
    %v1861 = vmul.f32 %v1689, %v1857
    %v1862 = vld [vmem:[%s13] sm:$0xff]
    %v1863 = vld [vmem:[%s13 + $0x8] sm:$0xff]
    %v1864 = vld [vmem:[%s13 + $0x10] sm:$0xff]
    %v1865 = vld [vmem:[%s13 + $0x18] sm:$0xff]
    %v1866 = vld [vmem:[%s13 + $0x20] sm:$0xff]
    %v1867 = vld [vmem:[%s13 + $0x28] sm:$0xff]
    %v1868 = vld [vmem:[%s13 + $0x30] sm:$0xff]
    %v1869 = vld [vmem:[%s13 + $0x38] sm:$0xff]
    %v1870 = vld [vmem:[%s13 + $0x40] sm:$0xff]
    %v1871 = vld [vmem:[%s13 + $0x48] sm:$0xff]
    %v1872 = vld [vmem:[%s13 + $0x50] sm:$0xff]
    %v1873 = vld [vmem:[%s13 + $0x58] sm:$0xff]
    %v1874 = vld [vmem:[%s13 + $0x60] sm:$0xff]
    %v1875 = vld [vmem:[%s13 + $0x68] sm:$0xff]
    %v1876 = vld [vmem:[%s13 + $0x70] sm:$0xff]
    %v1877 = vld [vmem:[%s13 + $0x78] sm:$0xff]
    %v1878 = vld [vmem:[%s13 + $0x80] sm:$0xff]
    %v1879 = vld [vmem:[%s13 + $0x88] sm:$0xff]
    %v1880 = vld [vmem:[%s13 + $0x90] sm:$0xff]
    %v1881 = vld [vmem:[%s13 + $0x98] sm:$0xff]
    %v1882 = vld [vmem:[%s13 + $0xa0] sm:$0xff]
    %v1883 = vld [vmem:[%s13 + $0xa8] sm:$0xff]
    %v1884 = vld [vmem:[%s13 + $0xb0] sm:$0xff]
    %v1885 = vld [vmem:[%s13 + $0xb8] sm:$0xff]
    %v1886 = vld [vmem:[%s13 + $0xc0] sm:$0xff]
    %v1887 = vld [vmem:[%s13 + $0xc8] sm:$0xff]
    %v1888 = vld [vmem:[%s13 + $0xd0] sm:$0xff]
    %v1889 = vld [vmem:[%s13 + $0xd8] sm:$0xff]
    %v1890 = vld [vmem:[%s13 + $0xe0] sm:$0xff]
    %v1891 = vld [vmem:[%s13 + $0xe8] sm:$0xff]
    %v1892 = vld [vmem:[%s13 + $0xf0] sm:$0xff]
    %v1893 = vld [vmem:[%s13 + $0xf8] sm:$0xff]
    %v1894 = vld [vmem:[%s14] sm:$0x1]
    %v1896 = vperm.slane %v1894, 0
    %1898 = vmatpush.msra.mxu0 %v1877
    %1899 = vmatpush.msra.mxu0 %v1876
    %1900 = vmatpush.msra.mxu0 %v1875
    %1901 = vmatpush.msra.mxu0 %v1874
    %1902 = vmatpush.msra.mxu0 %v1873
    %1903 = vmatpush.msra.mxu0 %v1872
    %1904 = vmatpush.msra.mxu0 %v1871
    %1905 = vmatpush.msra.mxu0 %v1870
    %1906 = vmatpush.msra.mxu0 %v1869
    %1907 = vmatpush.msra.mxu0 %v1868
    %1908 = vmatpush.msra.mxu0 %v1867
    %1909 = vmatpush.msra.mxu0 %v1866
    %1910 = vmatpush.msra.mxu0 %v1865
    %1911 = vmatpush.msra.mxu0 %v1864
    %1912 = vmatpush.msra.mxu0 %v1863
    %1913 = vmatpush.msra.mxu0 %v1862
    %1914 = vmatmul.f32.gmra.mxu0 %v1858
    %v1915 = vpop.f32.mrf.mxu0
    %v1916 = vadd.f32 %v1896, %v1915
    %1917 = vmatmul.f32.gmra.mxu0 %v1860
    %v1918 = vpop.f32.mrf.mxu0
    %v1919 = vadd.f32 %v1896, %v1918
    %1920 = vdwg.mxu0
    %1921 = vmatpush.msra.mxu0 %v1893
    %1922 = vmatpush.msra.mxu0 %v1892
    %1923 = vmatpush.msra.mxu0 %v1891
    %1924 = vmatpush.msra.mxu0 %v1890
    %1925 = vmatpush.msra.mxu0 %v1889
    %1926 = vmatpush.msra.mxu0 %v1888
    %1927 = vmatpush.msra.mxu0 %v1887
    %1928 = vmatpush.msra.mxu0 %v1886
    %1929 = vmatpush.msra.mxu0 %v1885
    %1930 = vmatpush.msra.mxu0 %v1884
    %1931 = vmatpush.msra.mxu0 %v1883
    %1932 = vmatpush.msra.mxu0 %v1882
    %1933 = vmatpush.msra.mxu0 %v1881
    %1934 = vmatpush.msra.mxu0 %v1880
    %1935 = vmatpush.msra.mxu0 %v1879
    %1936 = vmatpush.msra.mxu0 %v1878
    %1937 = vmatmul.f32.gmra.mxu0 %v1859
    %v1938 = vpop.f32.mrf.mxu0
    %v1939 = vadd.f32 %v1916, %v1938
    %1940 = vmatmul.f32.gmra.mxu0 %v1861
    %v1941 = vpop.f32.mrf.mxu0
    %v1942 = vadd.f32 %v1919, %v1941
    %1943 = vdwg.mxu0
    %v1944 = vadd.f32 %v1546, %v1939
    %v1945 = vadd.f32 %v1547, %v1942
    %s1946 = scalar_lea.vmem %s3, 1
    %v1947 = vld [vmem:[%s1946] sm:$0x1]
    %s1948 = scalar_lea.vmem %s4, 1
    %v1949 = vld [vmem:[%s1948] sm:$0x1]
    %1950 = vadd.xlane.f32.xlu0 %v1944
    %v1951 = vpop.xlane.xlu0 %1950
    %v1952 = vsel %vm315, %v1945, 0.0
    %1953 = vadd.xlane.f32.xlu0 %v1952
    %v1954 = vpop.xlane.xlu0 %1953
    %v1955 = vmul.f32 %v1951, %v325
    %v1956 = vmul.f32 %v1954, %v325
    %v1957 = vsub.f32 %v1944, %v1955
    %v1958 = vsub.f32 %v1945, %v1956
    %v1959 = vmul.f32 %v1957, %v1957
    %v1960 = vmul.f32 %v1958, %v1958
    %1961 = vadd.xlane.f32.xlu0 %v1959
    %v1962 = vpop.xlane.xlu0 %1961
    %v1963 = vsel %vm315, %v1960, 0.0
    %1964 = vadd.xlane.f32.xlu0 %v1963
    %v1965 = vpop.xlane.xlu0 %1964
    %v1966 = vmul.f32 %v1962, %v325
    %v1967 = vmul.f32 %v1965, %v325
    %v1968 = vadd.f32 %v1966, 1e-06
    %v1969 = vadd.f32 %v1967, 1e-06
    %v1970 = vrsqrt.pop %v1968
    %v1971 = vmul.f32 %v1970, %v1968
    %v1972 = vmul.f32 %v1971, %v1970
    %v1973 = vmul.f32 0.5, %v1972
    %v1974 = vsub.f32 1.5, %v1973
    %v1975 = vmul.f32 %v1970, %v1974
    %vm1976 = vweird.f32 %v1968
    %vm1977 = vweird.f32 %v1970
    %vm1978 = vmor %vm1976, %vm1977
    %v1979 = vsel %vm1978, %v1970, %v1975
    %v1980 = vrsqrt.pop %v1969
    %v1981 = vmul.f32 %v1980, %v1969
    %v1982 = vmul.f32 %v1981, %v1980
    %v1983 = vmul.f32 0.5, %v1982
    %v1984 = vsub.f32 1.5, %v1983
    %v1985 = vmul.f32 %v1980, %v1984
    %vm1986 = vweird.f32 %v1969
    %vm1987 = vweird.f32 %v1980
    %vm1988 = vmor %vm1986, %vm1987
    %v1989 = vsel %vm1988, %v1980, %v1985
    %v1990 = vmul.f32 %v1957, %v1979
    %v1991 = vmul.f32 %v1958, %v1989
    %v1993 = vperm.slane %v1947, 0
    %v1995 = vmul.f32 %v1990, %v1993
    %v1996 = vmul.f32 %v1991, %v1993
    %v1998 = vperm.slane %v1949, 0
    %v2000 = vadd.f32 %v1995, %v1998
    %v2001 = vadd.f32 %v1996, %v1998
    %s2002 = scalar_lea.vmem %s5, 384
    %v2003 = vld [vmem:[%s2002] sm:$0xff]
    %v2004 = vld [vmem:[%s2002 + $0x8] sm:$0xff]
    %v2005 = vld [vmem:[%s2002 + $0x10] sm:$0xff]
    %v2006 = vld [vmem:[%s2002 + $0x18] sm:$0xff]
    %v2007 = vld [vmem:[%s2002 + $0x20] sm:$0xff]
    %v2008 = vld [vmem:[%s2002 + $0x28] sm:$0xff]
    %v2009 = vld [vmem:[%s2002 + $0x30] sm:$0xff]
    %v2010 = vld [vmem:[%s2002 + $0x38] sm:$0xff]
    %v2011 = vld [vmem:[%s2002 + $0x40] sm:$0xff]
    %v2012 = vld [vmem:[%s2002 + $0x48] sm:$0xff]
    %v2013 = vld [vmem:[%s2002 + $0x50] sm:$0xff]
    %v2014 = vld [vmem:[%s2002 + $0x58] sm:$0xff]
    %v2015 = vld [vmem:[%s2002 + $0x60] sm:$0xff]
    %v2016 = vld [vmem:[%s2002 + $0x68] sm:$0xff]
    %v2017 = vld [vmem:[%s2002 + $0x70] sm:$0xff]
    %v2018 = vld [vmem:[%s2002 + $0x78] sm:$0xff]
    %v2019 = vld [vmem:[%s2002 + $0x80] sm:$0xff]
    %v2020 = vld [vmem:[%s2002 + $0x88] sm:$0xff]
    %v2021 = vld [vmem:[%s2002 + $0x90] sm:$0xff]
    %v2022 = vld [vmem:[%s2002 + $0x98] sm:$0xff]
    %v2023 = vld [vmem:[%s2002 + $0xa0] sm:$0xff]
    %v2024 = vld [vmem:[%s2002 + $0xa8] sm:$0xff]
    %v2025 = vld [vmem:[%s2002 + $0xb0] sm:$0xff]
    %v2026 = vld [vmem:[%s2002 + $0xb8] sm:$0xff]
    %v2027 = vld [vmem:[%s2002 + $0xc0] sm:$0xff]
    %v2028 = vld [vmem:[%s2002 + $0xc8] sm:$0xff]
    %v2029 = vld [vmem:[%s2002 + $0xd0] sm:$0xff]
    %v2030 = vld [vmem:[%s2002 + $0xd8] sm:$0xff]
    %v2031 = vld [vmem:[%s2002 + $0xe0] sm:$0xff]
    %v2032 = vld [vmem:[%s2002 + $0xe8] sm:$0xff]
    %v2033 = vld [vmem:[%s2002 + $0xf0] sm:$0xff]
    %v2034 = vld [vmem:[%s2002 + $0xf8] sm:$0xff]
    %v2035 = vld [vmem:[%s2002 + $0x100] sm:$0xff]
    %v2036 = vld [vmem:[%s2002 + $0x108] sm:$0xff]
    %v2037 = vld [vmem:[%s2002 + $0x110] sm:$0xff]
    %v2038 = vld [vmem:[%s2002 + $0x118] sm:$0xff]
    %v2039 = vld [vmem:[%s2002 + $0x120] sm:$0xff]
    %v2040 = vld [vmem:[%s2002 + $0x128] sm:$0xff]
    %v2041 = vld [vmem:[%s2002 + $0x130] sm:$0xff]
    %v2042 = vld [vmem:[%s2002 + $0x138] sm:$0xff]
    %v2043 = vld [vmem:[%s2002 + $0x140] sm:$0xff]
    %v2044 = vld [vmem:[%s2002 + $0x148] sm:$0xff]
    %v2045 = vld [vmem:[%s2002 + $0x150] sm:$0xff]
    %v2046 = vld [vmem:[%s2002 + $0x158] sm:$0xff]
    %v2047 = vld [vmem:[%s2002 + $0x160] sm:$0xff]
    %v2048 = vld [vmem:[%s2002 + $0x168] sm:$0xff]
    %v2049 = vld [vmem:[%s2002 + $0x170] sm:$0xff]
    %v2050 = vld [vmem:[%s2002 + $0x178] sm:$0xff]
    %s2051 = scalar_lea.vmem %s6, 3
    %v2052 = vld [vmem:[%s2051] sm:$0x7]
    %v2054 = vperm.slane %v2052, 0
    %v2055 = vperm.slane %v2052, 1
    %v2056 = vperm.slane %v2052, 2
    %2060 = vmatpush.msra.mxu0 %v2048
    %2061 = vmatpush.msra.mxu0 %v2045
    %2062 = vmatpush.msra.mxu0 %v2042
    %2063 = vmatpush.msra.mxu0 %v2039
    %2064 = vmatpush.msra.mxu0 %v2036
    %2065 = vmatpush.msra.mxu0 %v2033
    %2066 = vmatpush.msra.mxu0 %v2030
    %2067 = vmatpush.msra.mxu0 %v2027
    %2068 = vmatpush.msra.mxu0 %v2024
    %2069 = vmatpush.msra.mxu0 %v2021
    %2070 = vmatpush.msra.mxu0 %v2018
    %2071 = vmatpush.msra.mxu0 %v2015
    %2072 = vmatpush.msra.mxu0 %v2012
    %2073 = vmatpush.msra.mxu0 %v2009
    %2074 = vmatpush.msra.mxu0 %v2006
    %2075 = vmatpush.msra.mxu0 %v2003
    %2076 = vmatmul.f32.gmra.mxu0 %v2000
    %v2077 = vpop.f32.mrf.mxu0
    %v2078 = vadd.f32 %v2054, %v2077
    %2079 = vmatmul.f32.gmra.mxu0 %v2001
    %v2080 = vpop.f32.mrf.mxu0
    %v2081 = vadd.f32 %v2054, %v2080
    %2082 = vdwg.mxu0
    %2083 = vmatpush.msra.mxu0 %v2049
    %2084 = vmatpush.msra.mxu0 %v2046
    %2085 = vmatpush.msra.mxu0 %v2043
    %2086 = vmatpush.msra.mxu0 %v2040
    %2087 = vmatpush.msra.mxu0 %v2037
    %2088 = vmatpush.msra.mxu0 %v2034
    %2089 = vmatpush.msra.mxu0 %v2031
    %2090 = vmatpush.msra.mxu0 %v2028
    %2091 = vmatpush.msra.mxu0 %v2025
    %2092 = vmatpush.msra.mxu0 %v2022
    %2093 = vmatpush.msra.mxu0 %v2019
    %2094 = vmatpush.msra.mxu0 %v2016
    %2095 = vmatpush.msra.mxu0 %v2013
    %2096 = vmatpush.msra.mxu0 %v2010
    %2097 = vmatpush.msra.mxu0 %v2007
    %2098 = vmatpush.msra.mxu0 %v2004
    %2099 = vmatmul.f32.gmra.mxu0 %v2000
    %v2100 = vpop.f32.mrf.mxu0
    %v2101 = vadd.f32 %v2055, %v2100
    %2102 = vmatmul.f32.gmra.mxu0 %v2001
    %v2103 = vpop.f32.mrf.mxu0
    %v2104 = vadd.f32 %v2055, %v2103
    %2105 = vdwg.mxu0
    %2106 = vmatpush.msra.mxu0 %v2050
    %2107 = vmatpush.msra.mxu0 %v2047
    %2108 = vmatpush.msra.mxu0 %v2044
    %2109 = vmatpush.msra.mxu0 %v2041
    %2110 = vmatpush.msra.mxu0 %v2038
    %2111 = vmatpush.msra.mxu0 %v2035
    %2112 = vmatpush.msra.mxu0 %v2032
    %2113 = vmatpush.msra.mxu0 %v2029
    %2114 = vmatpush.msra.mxu0 %v2026
    %2115 = vmatpush.msra.mxu0 %v2023
    %2116 = vmatpush.msra.mxu0 %v2020
    %2117 = vmatpush.msra.mxu0 %v2017
    %2118 = vmatpush.msra.mxu0 %v2014
    %2119 = vmatpush.msra.mxu0 %v2011
    %2120 = vmatpush.msra.mxu0 %v2008
    %2121 = vmatpush.msra.mxu0 %v2005
    %2122 = vmatmul.f32.gmra.mxu0 %v2000
    %v2123 = vpop.f32.mrf.mxu0
    %v2124 = vadd.f32 %v2056, %v2123
    %2125 = vmatmul.f32.gmra.mxu0 %v2001
    %v2126 = vpop.f32.mrf.mxu0
    %v2127 = vadd.f32 %v2056, %v2126
    %2128 = vdwg.mxu0
    %s2129 = scalar_lea.vmem %s7, 128
    %v2130 = vld [vmem:[%s2129] sm:$0xff]
    %v2131 = vld [vmem:[%s2129 + $0x8] sm:$0xff]
    %v2132 = vld [vmem:[%s2129 + $0x10] sm:$0xff]
    %v2133 = vld [vmem:[%s2129 + $0x18] sm:$0xff]
    %v2134 = vld [vmem:[%s2129 + $0x20] sm:$0xff]
    %v2135 = vld [vmem:[%s2129 + $0x28] sm:$0xff]
    %v2136 = vld [vmem:[%s2129 + $0x30] sm:$0xff]
    %v2137 = vld [vmem:[%s2129 + $0x38] sm:$0xff]
    %v2138 = vld [vmem:[%s2129 + $0x40] sm:$0xff]
    %v2139 = vld [vmem:[%s2129 + $0x48] sm:$0xff]
    %v2140 = vld [vmem:[%s2129 + $0x50] sm:$0xff]
    %v2141 = vld [vmem:[%s2129 + $0x58] sm:$0xff]
    %v2142 = vld [vmem:[%s2129 + $0x60] sm:$0xff]
    %v2143 = vld [vmem:[%s2129 + $0x68] sm:$0xff]
    %v2144 = vld [vmem:[%s2129 + $0x70] sm:$0xff]
    %v2145 = vld [vmem:[%s2129 + $0x78] sm:$0xff]
    %v2148 = vrot.slane %v2078, 1
    %v2149 = vrot.slane %v2078, 2
    %v2150 = vrot.slane %v2078, 3
    %v2151 = vrot.slane %v2078, 4
    %v2152 = vrot.slane %v2078, 5
    %v2153 = vrot.slane %v2078, 6
    %v2154 = vrot.slane %v2078, 7
    %v2155 = vrot.slane %v2081, 1
    %v2158 = vrot.slane %v2101, 1
    %v2159 = vrot.slane %v2101, 2
    %v2160 = vrot.slane %v2101, 3
    %v2161 = vrot.slane %v2101, 4
    %v2162 = vrot.slane %v2101, 5
    %v2163 = vrot.slane %v2101, 6
    %v2164 = vrot.slane %v2101, 7
    %v2165 = vrot.slane %v2104, 1
    %v2168 = vrot.slane %v2124, 1
    %v2169 = vrot.slane %v2124, 2
    %v2170 = vrot.slane %v2124, 3
    %v2171 = vrot.slane %v2124, 4
    %v2172 = vrot.slane %v2124, 5
    %v2173 = vrot.slane %v2124, 6
    %v2174 = vrot.slane %v2124, 7
    %v2175 = vrot.slane %v2127, 1
    %2176 = vst [vmem:[#allocation1] ss:$9 sm:$0xff] %v2078
    %s2177 = scalar_lea.vmem [#allocation1], 1
    %2178 = vst [vmem:[%s2177] ss:$9 sm:$0xff] %v2148
    %s2179 = scalar_lea.vmem [#allocation1], 2
    %2180 = vst [vmem:[%s2179] ss:$9 sm:$0xff] %v2149
    %s2181 = scalar_lea.vmem [#allocation1], 3
    %2182 = vst [vmem:[%s2181] ss:$9 sm:$0xff] %v2150
    %s2183 = scalar_lea.vmem [#allocation1], 4
    %2184 = vst [vmem:[%s2183] ss:$9 sm:$0xff] %v2151
    %v2185 = vld [vmem:[#allocation1] sm:$0xff]
    %2186 = vst [vmem:[#allocation1] ss:$9 sm:$0xff] %v2101
    %s2187 = scalar_lea.vmem [#allocation1], 1
    %2188 = vst [vmem:[%s2187] ss:$9 sm:$0xff] %v2158
    %s2189 = scalar_lea.vmem [#allocation1], 2
    %2190 = vst [vmem:[%s2189] ss:$9 sm:$0xff] %v2159
    %s2191 = scalar_lea.vmem [#allocation1], 3
    %2192 = vst [vmem:[%s2191] ss:$9 sm:$0xff] %v2160
    %s2193 = scalar_lea.vmem [#allocation1], 4
    %2194 = vst [vmem:[%s2193] ss:$9 sm:$0xff] %v2161
    %v2195 = vld [vmem:[#allocation1] sm:$0xff]
    %v2196 = vsel %vm564, %v2185, 0
    %v2198 = vsel %vm564, %v2195, 0
    %2200 = vmatpush.xpose.msra.mxu0 0.0
    %2201 = vmatpush.xpose.msra.mxu0 0.0
    %2202 = vmatpush.xpose.msra.mxu0 0.0
    %2203 = vmatpush.xpose.msra.mxu0 0.0
    %2204 = vmatpush.xpose.msra.mxu0 0.0
    %2205 = vmatpush.xpose.msra.mxu0 0.0
    %2206 = vmatpush.xpose.msra.mxu0 0.0
    %2207 = vmatpush.xpose.msra.mxu0 0.0
    %2208 = vmatpush.xpose.msra.mxu0 0.0
    %2209 = vmatpush.xpose.msra.mxu0 0.0
    %2210 = vmatpush.xpose.msra.mxu0 0.0
    %2211 = vmatpush.xpose.msra.mxu0 0.0
    %2212 = vmatpush.xpose.msra.mxu0 0.0
    %2213 = vmatpush.xpose.msra.mxu0 0.0
    %2214 = vmatpush.xpose.msra.mxu0 0.0
    %2215 = vmatpush.xpose.msra.mxu0 %v2198
    %2216 = vmatmul.f32.gmra.mxu0 %v2196
    %v2217 = vpop.f32.mrf.mxu0
    %v2218 = vadd.f32 0.0, %v2217
    %2219 = vdwg.mxu0
    %2220 = vst [vmem:[#allocation1] ss:$9 sm:$0xff] %v2152
    %s2221 = scalar_lea.vmem [#allocation1], 1
    %2222 = vst [vmem:[%s2221] ss:$9 sm:$0xff] %v2153
    %s2223 = scalar_lea.vmem [#allocation1], 2
    %2224 = vst [vmem:[%s2223] ss:$9 sm:$0xff] %v2154
    %s2225 = scalar_lea.vmem [#allocation1], 3
    %2226 = vst [vmem:[%s2225] ss:$9 sm:$0xff] %v2081
    %s2227 = scalar_lea.vmem [#allocation1], 4
    %2228 = vst [vmem:[%s2227] ss:$9 sm:$0xff] %v2155
    %v2229 = vld [vmem:[#allocation1] sm:$0xff]
    %2230 = vst [vmem:[#allocation1] ss:$9 sm:$0xff] %v2162
    %s2231 = scalar_lea.vmem [#allocation1], 1
    %2232 = vst [vmem:[%s2231] ss:$9 sm:$0xff] %v2163
    %s2233 = scalar_lea.vmem [#allocation1], 2
    %2234 = vst [vmem:[%s2233] ss:$9 sm:$0xff] %v2164
    %s2235 = scalar_lea.vmem [#allocation1], 3
    %2236 = vst [vmem:[%s2235] ss:$9 sm:$0xff] %v2104
    %s2237 = scalar_lea.vmem [#allocation1], 4
    %2238 = vst [vmem:[%s2237] ss:$9 sm:$0xff] %v2165
    %v2239 = vld [vmem:[#allocation1] sm:$0xff]
    %v2240 = vsel %vm564, %v2229, 0
    %v2242 = vsel %vm564, %v2239, 0
    %2244 = vmatpush.xpose.msra.mxu0 0.0
    %2245 = vmatpush.xpose.msra.mxu0 0.0
    %2246 = vmatpush.xpose.msra.mxu0 0.0
    %2247 = vmatpush.xpose.msra.mxu0 0.0
    %2248 = vmatpush.xpose.msra.mxu0 0.0
    %2249 = vmatpush.xpose.msra.mxu0 0.0
    %2250 = vmatpush.xpose.msra.mxu0 0.0
    %2251 = vmatpush.xpose.msra.mxu0 0.0
    %2252 = vmatpush.xpose.msra.mxu0 0.0
    %2253 = vmatpush.xpose.msra.mxu0 0.0
    %2254 = vmatpush.xpose.msra.mxu0 0.0
    %2255 = vmatpush.xpose.msra.mxu0 0.0
    %2256 = vmatpush.xpose.msra.mxu0 0.0
    %2257 = vmatpush.xpose.msra.mxu0 0.0
    %2258 = vmatpush.xpose.msra.mxu0 0.0
    %2259 = vmatpush.xpose.msra.mxu0 %v2242
    %2260 = vmatmul.f32.gmra.mxu0 %v2240
    %v2261 = vpop.f32.mrf.mxu0
    %v2262 = vadd.f32 0.0, %v2261
    %2263 = vdwg.mxu0
    %v2264 = vmul.f32 %v2218, 0.17677669
    %v2265 = vmul.f32 %v2262, 0.17677669
    %v2266 = vsel %vm635, %v2264, -inf
    %2267 = vmax.xlane.f32.xlu0 %v2266
    %v2268 = vpop.xlane.xlu0 %2267
    %v2269 = vsel %vm635, %v2265, -inf
    %2270 = vmax.xlane.f32.xlu0 %v2269
    %v2271 = vpop.xlane.xlu0 %2270
    %v2272 = vsub.f32 %v2264, %v2268
    %v2273 = vsub.f32 %v2265, %v2271
    %v2274 = vmul.f32 %v2272, 1.442695
    %v2275 = vpow.pop %v2274
    %v2276 = vmul.f32 %v2273, 1.442695
    %v2277 = vpow.pop %v2276
    %v2278 = vsel %vm635, %v2275, 0.0
    %2279 = vadd.xlane.f32.xlu0 %v2278
    %v2280 = vpop.xlane.xlu0 %2279
    %v2281 = vsel %vm635, %v2277, 0.0
    %2282 = vadd.xlane.f32.xlu0 %v2281
    %v2283 = vpop.xlane.xlu0 %2282
    %v2284 = vrcp.pop %v2280
    %v2285 = vrcp.pop %v2283
    %v2286 = vmul.f32 %v2275, %v2284
    %v2287 = vmul.f32 %v2277, %v2285
    %2288 = vst [vmem:[#allocation1] ss:$9 sm:$0xff] %v2124
    %s2289 = scalar_lea.vmem [#allocation1], 1
    %2290 = vst [vmem:[%s2289] ss:$9 sm:$0xff] %v2168
    %s2291 = scalar_lea.vmem [#allocation1], 2
    %2292 = vst [vmem:[%s2291] ss:$9 sm:$0xff] %v2169
    %s2293 = scalar_lea.vmem [#allocation1], 3
    %2294 = vst [vmem:[%s2293] ss:$9 sm:$0xff] %v2170
    %s2295 = scalar_lea.vmem [#allocation1], 4
    %2296 = vst [vmem:[%s2295] ss:$9 sm:$0xff] %v2171
    %v2297 = vld [vmem:[#allocation1] sm:$0xff]
    %v2299 = vsel %vm668, %v2286, 0
    %v2301 = vsel %vm672, %v2297, 0
    %2303 = vmatpush.msra.mxu0 0.0
    %2304 = vmatpush.msra.mxu0 0.0
    %2305 = vmatpush.msra.mxu0 0.0
    %2306 = vmatpush.msra.mxu0 0.0
    %2307 = vmatpush.msra.mxu0 0.0
    %2308 = vmatpush.msra.mxu0 0.0
    %2309 = vmatpush.msra.mxu0 0.0
    %2310 = vmatpush.msra.mxu0 0.0
    %2311 = vmatpush.msra.mxu0 0.0
    %2312 = vmatpush.msra.mxu0 0.0
    %2313 = vmatpush.msra.mxu0 0.0
    %2314 = vmatpush.msra.mxu0 0.0
    %2315 = vmatpush.msra.mxu0 0.0
    %2316 = vmatpush.msra.mxu0 0.0
    %2317 = vmatpush.msra.mxu0 0.0
    %2318 = vmatpush.msra.mxu0 %v2301
    %2319 = vmatmul.f32.gmra.mxu0 %v2299
    %v2320 = vpop.f32.mrf.mxu0
    %v2321 = vadd.f32 0.0, %v2320
    %2322 = vdwg.mxu0
    %2323 = vst [vmem:[#allocation1] ss:$9 sm:$0xff] %v2172
    %s2324 = scalar_lea.vmem [#allocation1], 1
    %2325 = vst [vmem:[%s2324] ss:$9 sm:$0xff] %v2173
    %s2326 = scalar_lea.vmem [#allocation1], 2
    %2327 = vst [vmem:[%s2326] ss:$9 sm:$0xff] %v2174
    %s2328 = scalar_lea.vmem [#allocation1], 3
    %2329 = vst [vmem:[%s2328] ss:$9 sm:$0xff] %v2127
    %s2330 = scalar_lea.vmem [#allocation1], 4
    %2331 = vst [vmem:[%s2330] ss:$9 sm:$0xff] %v2175
    %v2332 = vld [vmem:[#allocation1] sm:$0xff]
    %v2334 = vsel %vm668, %v2287, 0
    %v2336 = vsel %vm672, %v2332, 0
    %2338 = vmatpush.msra.mxu0 0.0
    %2339 = vmatpush.msra.mxu0 0.0
    %2340 = vmatpush.msra.mxu0 0.0
    %2341 = vmatpush.msra.mxu0 0.0
    %2342 = vmatpush.msra.mxu0 0.0
    %2343 = vmatpush.msra.mxu0 0.0
    %2344 = vmatpush.msra.mxu0 0.0
    %2345 = vmatpush.msra.mxu0 0.0
    %2346 = vmatpush.msra.mxu0 0.0
    %2347 = vmatpush.msra.mxu0 0.0
    %2348 = vmatpush.msra.mxu0 0.0
    %2349 = vmatpush.msra.mxu0 0.0
    %2350 = vmatpush.msra.mxu0 0.0
    %2351 = vmatpush.msra.mxu0 0.0
    %2352 = vmatpush.msra.mxu0 0.0
    %2353 = vmatpush.msra.mxu0 %v2336
    %2354 = vmatmul.f32.gmra.mxu0 %v2334
    %v2355 = vpop.f32.mrf.mxu0
    %v2356 = vadd.f32 0.0, %v2355
    %2357 = vdwg.mxu0
    %v2360 = vrot.slane %v2321, 1
    %v2361 = vrot.slane %v2321, 2
    %v2362 = vrot.slane %v2321, 3
    %v2363 = vrot.slane %v2321, 4
    %v2364 = vrot.slane %v2356, 1
    %v2365 = vrot.slane %v2356, 2
    %v2366 = vrot.slane %v2356, 3
    %v2367 = vrot.slane %v2356, 4
    %2368 = vst [vmem:[#allocation1] ss:$9 sm:$0xff] %v2078
    %s2369 = scalar_lea.vmem [#allocation1], 1
    %2370 = vst [vmem:[%s2369] ss:$9 sm:$0xff] %v2148
    %s2371 = scalar_lea.vmem [#allocation1], 2
    %2372 = vst [vmem:[%s2371] ss:$9 sm:$0xff] %v2149
    %s2373 = scalar_lea.vmem [#allocation1], 3
    %2374 = vst [vmem:[%s2373] ss:$9 sm:$0xff] %v2150
    %s2375 = scalar_lea.vmem [#allocation1], 4
    %2376 = vst [vmem:[%s2375] ss:$9 sm:$0xff] %v2151
    %v2377 = vld [vmem:[#allocation1] sm:$0xff]
    %2378 = vrot.lane.b32.xlu0 %v2377, 96
    %v2379 = vpop.permute.xlu0 %2378
    %2380 = vst [vmem:[#allocation1] ss:$9 sm:$0xff] %v2101
    %s2381 = scalar_lea.vmem [#allocation1], 1
    %2382 = vst [vmem:[%s2381] ss:$9 sm:$0xff] %v2158
    %s2383 = scalar_lea.vmem [#allocation1], 2
    %2384 = vst [vmem:[%s2383] ss:$9 sm:$0xff] %v2159
    %s2385 = scalar_lea.vmem [#allocation1], 3
    %2386 = vst [vmem:[%s2385] ss:$9 sm:$0xff] %v2160
    %s2387 = scalar_lea.vmem [#allocation1], 4
    %2388 = vst [vmem:[%s2387] ss:$9 sm:$0xff] %v2161
    %v2389 = vld [vmem:[#allocation1] sm:$0xff]
    %2390 = vrot.lane.b32.xlu0 %v2389, 96
    %v2391 = vpop.permute.xlu0 %2390
    %v2392 = vsel %vm564, %v2379, 0
    %v2394 = vsel %vm564, %v2391, 0
    %2396 = vmatpush.xpose.msra.mxu0 0.0
    %2397 = vmatpush.xpose.msra.mxu0 0.0
    %2398 = vmatpush.xpose.msra.mxu0 0.0
    %2399 = vmatpush.xpose.msra.mxu0 0.0
    %2400 = vmatpush.xpose.msra.mxu0 0.0
    %2401 = vmatpush.xpose.msra.mxu0 0.0
    %2402 = vmatpush.xpose.msra.mxu0 0.0
    %2403 = vmatpush.xpose.msra.mxu0 0.0
    %2404 = vmatpush.xpose.msra.mxu0 0.0
    %2405 = vmatpush.xpose.msra.mxu0 0.0
    %2406 = vmatpush.xpose.msra.mxu0 0.0
    %2407 = vmatpush.xpose.msra.mxu0 0.0
    %2408 = vmatpush.xpose.msra.mxu0 0.0
    %2409 = vmatpush.xpose.msra.mxu0 0.0
    %2410 = vmatpush.xpose.msra.mxu0 0.0
    %2411 = vmatpush.xpose.msra.mxu0 %v2394
    %2412 = vmatmul.f32.gmra.mxu0 %v2392
    %v2413 = vpop.f32.mrf.mxu0
    %v2414 = vadd.f32 0.0, %v2413
    %2415 = vdwg.mxu0
    %2416 = vst [vmem:[#allocation1] ss:$9 sm:$0xff] %v2152
    %s2417 = scalar_lea.vmem [#allocation1], 1
    %2418 = vst [vmem:[%s2417] ss:$9 sm:$0xff] %v2153
    %s2419 = scalar_lea.vmem [#allocation1], 2
    %2420 = vst [vmem:[%s2419] ss:$9 sm:$0xff] %v2154
    %s2421 = scalar_lea.vmem [#allocation1], 3
    %2422 = vst [vmem:[%s2421] ss:$9 sm:$0xff] %v2081
    %s2423 = scalar_lea.vmem [#allocation1], 4
    %2424 = vst [vmem:[%s2423] ss:$9 sm:$0xff] %v2155
    %v2425 = vld [vmem:[#allocation1] sm:$0xff]
    %2426 = vrot.lane.b32.xlu0 %v2425, 96
    %v2427 = vpop.permute.xlu0 %2426
    %2428 = vst [vmem:[#allocation1] ss:$9 sm:$0xff] %v2162
    %s2429 = scalar_lea.vmem [#allocation1], 1
    %2430 = vst [vmem:[%s2429] ss:$9 sm:$0xff] %v2163
    %s2431 = scalar_lea.vmem [#allocation1], 2
    %2432 = vst [vmem:[%s2431] ss:$9 sm:$0xff] %v2164
    %s2433 = scalar_lea.vmem [#allocation1], 3
    %2434 = vst [vmem:[%s2433] ss:$9 sm:$0xff] %v2104
    %s2435 = scalar_lea.vmem [#allocation1], 4
    %2436 = vst [vmem:[%s2435] ss:$9 sm:$0xff] %v2165
    %v2437 = vld [vmem:[#allocation1] sm:$0xff]
    %2438 = vrot.lane.b32.xlu0 %v2437, 96
    %v2439 = vpop.permute.xlu0 %2438
    %v2440 = vsel %vm564, %v2427, 0
    %v2442 = vsel %vm564, %v2439, 0
    %2444 = vmatpush.xpose.msra.mxu0 0.0
    %2445 = vmatpush.xpose.msra.mxu0 0.0
    %2446 = vmatpush.xpose.msra.mxu0 0.0
    %2447 = vmatpush.xpose.msra.mxu0 0.0
    %2448 = vmatpush.xpose.msra.mxu0 0.0
    %2449 = vmatpush.xpose.msra.mxu0 0.0
    %2450 = vmatpush.xpose.msra.mxu0 0.0
    %2451 = vmatpush.xpose.msra.mxu0 0.0
    %2452 = vmatpush.xpose.msra.mxu0 0.0
    %2453 = vmatpush.xpose.msra.mxu0 0.0
    %2454 = vmatpush.xpose.msra.mxu0 0.0
    %2455 = vmatpush.xpose.msra.mxu0 0.0
    %2456 = vmatpush.xpose.msra.mxu0 0.0
    %2457 = vmatpush.xpose.msra.mxu0 0.0
    %2458 = vmatpush.xpose.msra.mxu0 0.0
    %2459 = vmatpush.xpose.msra.mxu0 %v2442
    %2460 = vmatmul.f32.gmra.mxu0 %v2440
    %v2461 = vpop.f32.mrf.mxu0
    %v2462 = vadd.f32 0.0, %v2461
    %2463 = vdwg.mxu0
    %v2464 = vmul.f32 %v2414, 0.17677669
    %v2465 = vmul.f32 %v2462, 0.17677669
    %v2466 = vsel %vm635, %v2464, -inf
    %2467 = vmax.xlane.f32.xlu0 %v2466
    %v2468 = vpop.xlane.xlu0 %2467
    %v2469 = vsel %vm635, %v2465, -inf
    %2470 = vmax.xlane.f32.xlu0 %v2469
    %v2471 = vpop.xlane.xlu0 %2470
    %v2472 = vsub.f32 %v2464, %v2468
    %v2473 = vsub.f32 %v2465, %v2471
    %v2474 = vmul.f32 %v2472, 1.442695
    %v2475 = vpow.pop %v2474
    %v2476 = vmul.f32 %v2473, 1.442695
    %v2477 = vpow.pop %v2476
    %v2478 = vsel %vm635, %v2475, 0.0
    %2479 = vadd.xlane.f32.xlu0 %v2478
    %v2480 = vpop.xlane.xlu0 %2479
    %v2481 = vsel %vm635, %v2477, 0.0
    %2482 = vadd.xlane.f32.xlu0 %v2481
    %v2483 = vpop.xlane.xlu0 %2482
    %v2484 = vrcp.pop %v2480
    %v2485 = vrcp.pop %v2483
    %v2486 = vmul.f32 %v2475, %v2484
    %v2487 = vmul.f32 %v2477, %v2485
    %2488 = vst [vmem:[#allocation1] ss:$9 sm:$0xff] %v2124
    %s2489 = scalar_lea.vmem [#allocation1], 1
    %2490 = vst [vmem:[%s2489] ss:$9 sm:$0xff] %v2168
    %s2491 = scalar_lea.vmem [#allocation1], 2
    %2492 = vst [vmem:[%s2491] ss:$9 sm:$0xff] %v2169
    %s2493 = scalar_lea.vmem [#allocation1], 3
    %2494 = vst [vmem:[%s2493] ss:$9 sm:$0xff] %v2170
    %s2495 = scalar_lea.vmem [#allocation1], 4
    %2496 = vst [vmem:[%s2495] ss:$9 sm:$0xff] %v2171
    %v2497 = vld [vmem:[#allocation1] sm:$0xff]
    %2498 = vrot.lane.b32.xlu0 %v2497, 96
    %v2499 = vpop.permute.xlu0 %2498
    %v2501 = vsel %vm668, %v2486, 0
    %v2503 = vsel %vm672, %v2499, 0
    %2505 = vmatpush.msra.mxu0 0.0
    %2506 = vmatpush.msra.mxu0 0.0
    %2507 = vmatpush.msra.mxu0 0.0
    %2508 = vmatpush.msra.mxu0 0.0
    %2509 = vmatpush.msra.mxu0 0.0
    %2510 = vmatpush.msra.mxu0 0.0
    %2511 = vmatpush.msra.mxu0 0.0
    %2512 = vmatpush.msra.mxu0 0.0
    %2513 = vmatpush.msra.mxu0 0.0
    %2514 = vmatpush.msra.mxu0 0.0
    %2515 = vmatpush.msra.mxu0 0.0
    %2516 = vmatpush.msra.mxu0 0.0
    %2517 = vmatpush.msra.mxu0 0.0
    %2518 = vmatpush.msra.mxu0 0.0
    %2519 = vmatpush.msra.mxu0 0.0
    %2520 = vmatpush.msra.mxu0 %v2503
    %2521 = vmatmul.f32.gmra.mxu0 %v2501
    %v2522 = vpop.f32.mrf.mxu0
    %v2523 = vadd.f32 0.0, %v2522
    %2524 = vdwg.mxu0
    %2525 = vst [vmem:[#allocation1] ss:$9 sm:$0xff] %v2172
    %s2526 = scalar_lea.vmem [#allocation1], 1
    %2527 = vst [vmem:[%s2526] ss:$9 sm:$0xff] %v2173
    %s2528 = scalar_lea.vmem [#allocation1], 2
    %2529 = vst [vmem:[%s2528] ss:$9 sm:$0xff] %v2174
    %s2530 = scalar_lea.vmem [#allocation1], 3
    %2531 = vst [vmem:[%s2530] ss:$9 sm:$0xff] %v2127
    %s2532 = scalar_lea.vmem [#allocation1], 4
    %2533 = vst [vmem:[%s2532] ss:$9 sm:$0xff] %v2175
    %v2534 = vld [vmem:[#allocation1] sm:$0xff]
    %2535 = vrot.lane.b32.xlu0 %v2534, 96
    %v2536 = vpop.permute.xlu0 %2535
    %v2538 = vsel %vm668, %v2487, 0
    %v2540 = vsel %vm672, %v2536, 0
    %2542 = vmatpush.msra.mxu0 0.0
    %2543 = vmatpush.msra.mxu0 0.0
    %2544 = vmatpush.msra.mxu0 0.0
    %2545 = vmatpush.msra.mxu0 0.0
    %2546 = vmatpush.msra.mxu0 0.0
    %2547 = vmatpush.msra.mxu0 0.0
    %2548 = vmatpush.msra.mxu0 0.0
    %2549 = vmatpush.msra.mxu0 0.0
    %2550 = vmatpush.msra.mxu0 0.0
    %2551 = vmatpush.msra.mxu0 0.0
    %2552 = vmatpush.msra.mxu0 0.0
    %2553 = vmatpush.msra.mxu0 0.0
    %2554 = vmatpush.msra.mxu0 0.0
    %2555 = vmatpush.msra.mxu0 0.0
    %2556 = vmatpush.msra.mxu0 0.0
    %2557 = vmatpush.msra.mxu0 %v2540
    %2558 = vmatmul.f32.gmra.mxu0 %v2538
    %v2559 = vpop.f32.mrf.mxu0
    %v2560 = vadd.f32 0.0, %v2559
    %2561 = vdwg.mxu0
    %v2564 = vrot.slane %v2523, 1
    %v2565 = vrot.slane %v2523, 2
    %v2566 = vrot.slane %v2523, 3
    %v2567 = vrot.slane %v2523, 4
    %v2568 = vrot.slane %v2560, 1
    %v2569 = vrot.slane %v2560, 2
    %v2570 = vrot.slane %v2560, 3
    %v2571 = vrot.slane %v2560, 4
    %2572 = vst [vmem:[#allocation1] ss:$9 sm:$0xff] %v2523
    %s2573 = scalar_lea.vmem [#allocation1], 1
    %2574 = vst [vmem:[%s2573] ss:$9 sm:$0xff] %v2564
    %s2575 = scalar_lea.vmem [#allocation1], 2
    %2576 = vst [vmem:[%s2575] ss:$9 sm:$0xff] %v2565
    %s2577 = scalar_lea.vmem [#allocation1], 3
    %2578 = vst [vmem:[%s2577] ss:$9 sm:$0xff] %v2566
    %s2579 = scalar_lea.vmem [#allocation1], 4
    %2580 = vst [vmem:[%s2579] ss:$9 sm:$0xff] %v2567
    %s2581 = scalar_lea.vmem [#allocation1], 5
    %2582 = vst [vmem:[%s2581] ss:$9 sm:$0xff] %v2560
    %s2583 = scalar_lea.vmem [#allocation1], 6
    %2584 = vst [vmem:[%s2583] ss:$9 sm:$0xff] %v2568
    %s2585 = scalar_lea.vmem [#allocation1], 7
    %2586 = vst [vmem:[%s2585] ss:$9 sm:$0xff] %v2569
    %v2587 = vld [vmem:[#allocation1] sm:$0xff]
    %2588 = vst [vmem:[#allocation1] ss:$9 sm:$0xff] %v2570
    %2589 = vst [vmem:[%s2573] ss:$9 sm:$0xff] %v2571
    %v2590 = vld [vmem:[#allocation1] sm:$0xff]
    %v2591 = vsel %vm564, %v2587, 0
    %v2593 = vsel %vm564, %v2590, 0
    %2595 = vmatpush.msra.mxu0 0.0
    %2596 = vmatpush.msra.mxu0 0.0
    %2597 = vmatpush.msra.mxu0 0.0
    %2598 = vmatpush.msra.mxu0 0.0
    %2599 = vmatpush.msra.mxu0 0.0
    %2600 = vmatpush.msra.mxu0 0.0
    %2601 = vmatpush.msra.mxu0 0.0
    %2602 = vmatpush.msra.mxu0 0.0
    %2603 = vmatpush.msra.mxu0 0.0
    %2604 = vmatpush.msra.mxu0 0.0
    %2605 = vmatpush.msra.mxu0 0.0
    %2606 = vmatpush.msra.mxu0 0.0
    %2607 = vmatpush.msra.mxu0 %v2137
    %2608 = vmatpush.msra.mxu0 %v2136
    %2609 = vmatpush.msra.mxu0 %v2135
    %2610 = vmatpush.msra.mxu0 %v2134
    %2611 = vmatmul.f32.gmra.mxu0 %v2591
    %v2612 = vpop.f32.mrf.mxu0
    %v2613 = vadd.f32 0.0, %v2612
    %2614 = vmatmul.f32.gmra.mxu0 %v2593
    %v2615 = vpop.f32.mrf.mxu0
    %v2616 = vadd.f32 0.0, %v2615
    %2617 = vdwg.mxu0
    %2618 = vst [vmem:[#allocation1] ss:$9 sm:$0xff] %v2321
    %s2619 = scalar_lea.vmem [#allocation1], 1
    %2620 = vst [vmem:[%s2619] ss:$9 sm:$0xff] %v2360
    %s2621 = scalar_lea.vmem [#allocation1], 2
    %2622 = vst [vmem:[%s2621] ss:$9 sm:$0xff] %v2361
    %s2623 = scalar_lea.vmem [#allocation1], 3
    %2624 = vst [vmem:[%s2623] ss:$9 sm:$0xff] %v2362
    %s2625 = scalar_lea.vmem [#allocation1], 4
    %2626 = vst [vmem:[%s2625] ss:$9 sm:$0xff] %v2363
    %s2627 = scalar_lea.vmem [#allocation1], 5
    %2628 = vst [vmem:[%s2627] ss:$9 sm:$0xff] %v2356
    %s2629 = scalar_lea.vmem [#allocation1], 6
    %2630 = vst [vmem:[%s2629] ss:$9 sm:$0xff] %v2364
    %s2631 = scalar_lea.vmem [#allocation1], 7
    %2632 = vst [vmem:[%s2631] ss:$9 sm:$0xff] %v2365
    %v2633 = vld [vmem:[#allocation1] sm:$0xff]
    %2634 = vst [vmem:[#allocation1] ss:$9 sm:$0xff] %v2366
    %2635 = vst [vmem:[%s2619] ss:$9 sm:$0xff] %v2367
    %v2636 = vld [vmem:[#allocation1] sm:$0xff]
    %v2637 = vsel %vm564, %v2633, 0
    %v2639 = vsel %vm564, %v2636, 0
    %2641 = vmatpush.msra.mxu0 0.0
    %2642 = vmatpush.msra.mxu0 0.0
    %2643 = vmatpush.msra.mxu0 0.0
    %2644 = vmatpush.msra.mxu0 0.0
    %2645 = vmatpush.msra.mxu0 0.0
    %2646 = vmatpush.msra.mxu0 0.0
    %2647 = vmatpush.msra.mxu0 0.0
    %2648 = vmatpush.msra.mxu0 0.0
    %2649 = vmatpush.msra.mxu0 0.0
    %2650 = vmatpush.msra.mxu0 0.0
    %2651 = vmatpush.msra.mxu0 0.0
    %2652 = vmatpush.msra.mxu0 0.0
    %2653 = vmatpush.msra.mxu0 %v2133
    %2654 = vmatpush.msra.mxu0 %v2132
    %2655 = vmatpush.msra.mxu0 %v2131
    %2656 = vmatpush.msra.mxu0 %v2130
    %2657 = vmatmul.f32.gmra.mxu0 %v2637
    %v2658 = vpop.f32.mrf.mxu0
    %v2659 = vadd.f32 %v2613, %v2658
    %2660 = vmatmul.f32.gmra.mxu0 %v2639
    %v2661 = vpop.f32.mrf.mxu0
    %v2662 = vadd.f32 %v2616, %v2661
    %2663 = vdwg.mxu0
    %2664 = vst [vmem:[#allocation1] ss:$9 sm:$0xff] %v2078
    %s2665 = scalar_lea.vmem [#allocation1], 1
    %2666 = vst [vmem:[%s2665] ss:$9 sm:$0xff] %v2148
    %s2667 = scalar_lea.vmem [#allocation1], 2
    %2668 = vst [vmem:[%s2667] ss:$9 sm:$0xff] %v2149
    %s2669 = scalar_lea.vmem [#allocation1], 3
    %2670 = vst [vmem:[%s2669] ss:$9 sm:$0xff] %v2150
    %s2671 = scalar_lea.vmem [#allocation1], 4
    %2672 = vst [vmem:[%s2671] ss:$9 sm:$0xff] %v2151
    %v2673 = vld [vmem:[#allocation1] sm:$0xff]
    %2674 = vrot.lane.b32.xlu0 %v2673, 64
    %v2675 = vpop.permute.xlu0 %2674
    %2676 = vst [vmem:[#allocation1] ss:$9 sm:$0xff] %v2101
    %s2677 = scalar_lea.vmem [#allocation1], 1
    %2678 = vst [vmem:[%s2677] ss:$9 sm:$0xff] %v2158
    %s2679 = scalar_lea.vmem [#allocation1], 2
    %2680 = vst [vmem:[%s2679] ss:$9 sm:$0xff] %v2159
    %s2681 = scalar_lea.vmem [#allocation1], 3
    %2682 = vst [vmem:[%s2681] ss:$9 sm:$0xff] %v2160
    %s2683 = scalar_lea.vmem [#allocation1], 4
    %2684 = vst [vmem:[%s2683] ss:$9 sm:$0xff] %v2161
    %v2685 = vld [vmem:[#allocation1] sm:$0xff]
    %2686 = vrot.lane.b32.xlu0 %v2685, 64
    %v2687 = vpop.permute.xlu0 %2686
    %v2688 = vsel %vm564, %v2675, 0
    %v2690 = vsel %vm564, %v2687, 0
    %2692 = vmatpush.xpose.msra.mxu0 0.0
    %2693 = vmatpush.xpose.msra.mxu0 0.0
    %2694 = vmatpush.xpose.msra.mxu0 0.0
    %2695 = vmatpush.xpose.msra.mxu0 0.0
    %2696 = vmatpush.xpose.msra.mxu0 0.0
    %2697 = vmatpush.xpose.msra.mxu0 0.0
    %2698 = vmatpush.xpose.msra.mxu0 0.0
    %2699 = vmatpush.xpose.msra.mxu0 0.0
    %2700 = vmatpush.xpose.msra.mxu0 0.0
    %2701 = vmatpush.xpose.msra.mxu0 0.0
    %2702 = vmatpush.xpose.msra.mxu0 0.0
    %2703 = vmatpush.xpose.msra.mxu0 0.0
    %2704 = vmatpush.xpose.msra.mxu0 0.0
    %2705 = vmatpush.xpose.msra.mxu0 0.0
    %2706 = vmatpush.xpose.msra.mxu0 0.0
    %2707 = vmatpush.xpose.msra.mxu0 %v2690
    %2708 = vmatmul.f32.gmra.mxu0 %v2688
    %v2709 = vpop.f32.mrf.mxu0
    %v2710 = vadd.f32 0.0, %v2709
    %2711 = vdwg.mxu0
    %2712 = vst [vmem:[#allocation1] ss:$9 sm:$0xff] %v2152
    %s2713 = scalar_lea.vmem [#allocation1], 1
    %2714 = vst [vmem:[%s2713] ss:$9 sm:$0xff] %v2153
    %s2715 = scalar_lea.vmem [#allocation1], 2
    %2716 = vst [vmem:[%s2715] ss:$9 sm:$0xff] %v2154
    %s2717 = scalar_lea.vmem [#allocation1], 3
    %2718 = vst [vmem:[%s2717] ss:$9 sm:$0xff] %v2081
    %s2719 = scalar_lea.vmem [#allocation1], 4
    %2720 = vst [vmem:[%s2719] ss:$9 sm:$0xff] %v2155
    %v2721 = vld [vmem:[#allocation1] sm:$0xff]
    %2722 = vrot.lane.b32.xlu0 %v2721, 64
    %v2723 = vpop.permute.xlu0 %2722
    %2724 = vst [vmem:[#allocation1] ss:$9 sm:$0xff] %v2162
    %s2725 = scalar_lea.vmem [#allocation1], 1
    %2726 = vst [vmem:[%s2725] ss:$9 sm:$0xff] %v2163
    %s2727 = scalar_lea.vmem [#allocation1], 2
    %2728 = vst [vmem:[%s2727] ss:$9 sm:$0xff] %v2164
    %s2729 = scalar_lea.vmem [#allocation1], 3
    %2730 = vst [vmem:[%s2729] ss:$9 sm:$0xff] %v2104
    %s2731 = scalar_lea.vmem [#allocation1], 4
    %2732 = vst [vmem:[%s2731] ss:$9 sm:$0xff] %v2165
    %v2733 = vld [vmem:[#allocation1] sm:$0xff]
    %2734 = vrot.lane.b32.xlu0 %v2733, 64
    %v2735 = vpop.permute.xlu0 %2734
    %v2736 = vsel %vm564, %v2723, 0
    %v2738 = vsel %vm564, %v2735, 0
    %2740 = vmatpush.xpose.msra.mxu0 0.0
    %2741 = vmatpush.xpose.msra.mxu0 0.0
    %2742 = vmatpush.xpose.msra.mxu0 0.0
    %2743 = vmatpush.xpose.msra.mxu0 0.0
    %2744 = vmatpush.xpose.msra.mxu0 0.0
    %2745 = vmatpush.xpose.msra.mxu0 0.0
    %2746 = vmatpush.xpose.msra.mxu0 0.0
    %2747 = vmatpush.xpose.msra.mxu0 0.0
    %2748 = vmatpush.xpose.msra.mxu0 0.0
    %2749 = vmatpush.xpose.msra.mxu0 0.0
    %2750 = vmatpush.xpose.msra.mxu0 0.0
    %2751 = vmatpush.xpose.msra.mxu0 0.0
    %2752 = vmatpush.xpose.msra.mxu0 0.0
    %2753 = vmatpush.xpose.msra.mxu0 0.0
    %2754 = vmatpush.xpose.msra.mxu0 0.0
    %2755 = vmatpush.xpose.msra.mxu0 %v2738
    %2756 = vmatmul.f32.gmra.mxu0 %v2736
    %v2757 = vpop.f32.mrf.mxu0
    %v2758 = vadd.f32 0.0, %v2757
    %2759 = vdwg.mxu0
    %v2760 = vmul.f32 %v2710, 0.17677669
    %v2761 = vmul.f32 %v2758, 0.17677669
    %v2762 = vsel %vm635, %v2760, -inf
    %2763 = vmax.xlane.f32.xlu0 %v2762
    %v2764 = vpop.xlane.xlu0 %2763
    %v2765 = vsel %vm635, %v2761, -inf
    %2766 = vmax.xlane.f32.xlu0 %v2765
    %v2767 = vpop.xlane.xlu0 %2766
    %v2768 = vsub.f32 %v2760, %v2764
    %v2769 = vsub.f32 %v2761, %v2767
    %v2770 = vmul.f32 %v2768, 1.442695
    %v2771 = vpow.pop %v2770
    %v2772 = vmul.f32 %v2769, 1.442695
    %v2773 = vpow.pop %v2772
    %v2774 = vsel %vm635, %v2771, 0.0
    %2775 = vadd.xlane.f32.xlu0 %v2774
    %v2776 = vpop.xlane.xlu0 %2775
    %v2777 = vsel %vm635, %v2773, 0.0
    %2778 = vadd.xlane.f32.xlu0 %v2777
    %v2779 = vpop.xlane.xlu0 %2778
    %v2780 = vrcp.pop %v2776
    %v2781 = vrcp.pop %v2779
    %v2782 = vmul.f32 %v2771, %v2780
    %v2783 = vmul.f32 %v2773, %v2781
    %2784 = vst [vmem:[#allocation1] ss:$9 sm:$0xff] %v2124
    %s2785 = scalar_lea.vmem [#allocation1], 1
    %2786 = vst [vmem:[%s2785] ss:$9 sm:$0xff] %v2168
    %s2787 = scalar_lea.vmem [#allocation1], 2
    %2788 = vst [vmem:[%s2787] ss:$9 sm:$0xff] %v2169
    %s2789 = scalar_lea.vmem [#allocation1], 3
    %2790 = vst [vmem:[%s2789] ss:$9 sm:$0xff] %v2170
    %s2791 = scalar_lea.vmem [#allocation1], 4
    %2792 = vst [vmem:[%s2791] ss:$9 sm:$0xff] %v2171
    %v2793 = vld [vmem:[#allocation1] sm:$0xff]
    %2794 = vrot.lane.b32.xlu0 %v2793, 64
    %v2795 = vpop.permute.xlu0 %2794
    %v2797 = vsel %vm668, %v2782, 0
    %v2799 = vsel %vm672, %v2795, 0
    %2801 = vmatpush.msra.mxu0 0.0
    %2802 = vmatpush.msra.mxu0 0.0
    %2803 = vmatpush.msra.mxu0 0.0
    %2804 = vmatpush.msra.mxu0 0.0
    %2805 = vmatpush.msra.mxu0 0.0
    %2806 = vmatpush.msra.mxu0 0.0
    %2807 = vmatpush.msra.mxu0 0.0
    %2808 = vmatpush.msra.mxu0 0.0
    %2809 = vmatpush.msra.mxu0 0.0
    %2810 = vmatpush.msra.mxu0 0.0
    %2811 = vmatpush.msra.mxu0 0.0
    %2812 = vmatpush.msra.mxu0 0.0
    %2813 = vmatpush.msra.mxu0 0.0
    %2814 = vmatpush.msra.mxu0 0.0
    %2815 = vmatpush.msra.mxu0 0.0
    %2816 = vmatpush.msra.mxu0 %v2799
    %2817 = vmatmul.f32.gmra.mxu0 %v2797
    %v2818 = vpop.f32.mrf.mxu0
    %v2819 = vadd.f32 0.0, %v2818
    %2820 = vdwg.mxu0
    %2821 = vst [vmem:[#allocation1] ss:$9 sm:$0xff] %v2172
    %s2822 = scalar_lea.vmem [#allocation1], 1
    %2823 = vst [vmem:[%s2822] ss:$9 sm:$0xff] %v2173
    %s2824 = scalar_lea.vmem [#allocation1], 2
    %2825 = vst [vmem:[%s2824] ss:$9 sm:$0xff] %v2174
    %s2826 = scalar_lea.vmem [#allocation1], 3
    %2827 = vst [vmem:[%s2826] ss:$9 sm:$0xff] %v2127
    %s2828 = scalar_lea.vmem [#allocation1], 4
    %2829 = vst [vmem:[%s2828] ss:$9 sm:$0xff] %v2175
    %v2830 = vld [vmem:[#allocation1] sm:$0xff]
    %2831 = vrot.lane.b32.xlu0 %v2830, 64
    %v2832 = vpop.permute.xlu0 %2831
    %v2834 = vsel %vm668, %v2783, 0
    %v2836 = vsel %vm672, %v2832, 0
    %2838 = vmatpush.msra.mxu0 0.0
    %2839 = vmatpush.msra.mxu0 0.0
    %2840 = vmatpush.msra.mxu0 0.0
    %2841 = vmatpush.msra.mxu0 0.0
    %2842 = vmatpush.msra.mxu0 0.0
    %2843 = vmatpush.msra.mxu0 0.0
    %2844 = vmatpush.msra.mxu0 0.0
    %2845 = vmatpush.msra.mxu0 0.0
    %2846 = vmatpush.msra.mxu0 0.0
    %2847 = vmatpush.msra.mxu0 0.0
    %2848 = vmatpush.msra.mxu0 0.0
    %2849 = vmatpush.msra.mxu0 0.0
    %2850 = vmatpush.msra.mxu0 0.0
    %2851 = vmatpush.msra.mxu0 0.0
    %2852 = vmatpush.msra.mxu0 0.0
    %2853 = vmatpush.msra.mxu0 %v2836
    %2854 = vmatmul.f32.gmra.mxu0 %v2834
    %v2855 = vpop.f32.mrf.mxu0
    %v2856 = vadd.f32 0.0, %v2855
    %2857 = vdwg.mxu0
    %v2860 = vrot.slane %v2819, 1
    %v2861 = vrot.slane %v2819, 2
    %v2862 = vrot.slane %v2819, 3
    %v2863 = vrot.slane %v2819, 4
    %v2864 = vrot.slane %v2856, 1
    %v2865 = vrot.slane %v2856, 2
    %v2866 = vrot.slane %v2856, 3
    %v2867 = vrot.slane %v2856, 4
    %2868 = vst [vmem:[#allocation1] ss:$9 sm:$0xff] %v2819
    %s2869 = scalar_lea.vmem [#allocation1], 1
    %2870 = vst [vmem:[%s2869] ss:$9 sm:$0xff] %v2860
    %s2871 = scalar_lea.vmem [#allocation1], 2
    %2872 = vst [vmem:[%s2871] ss:$9 sm:$0xff] %v2861
    %s2873 = scalar_lea.vmem [#allocation1], 3
    %2874 = vst [vmem:[%s2873] ss:$9 sm:$0xff] %v2862
    %s2875 = scalar_lea.vmem [#allocation1], 4
    %2876 = vst [vmem:[%s2875] ss:$9 sm:$0xff] %v2863
    %s2877 = scalar_lea.vmem [#allocation1], 5
    %2878 = vst [vmem:[%s2877] ss:$9 sm:$0xff] %v2856
    %s2879 = scalar_lea.vmem [#allocation1], 6
    %2880 = vst [vmem:[%s2879] ss:$9 sm:$0xff] %v2864
    %s2881 = scalar_lea.vmem [#allocation1], 7
    %2882 = vst [vmem:[%s2881] ss:$9 sm:$0xff] %v2865
    %v2883 = vld [vmem:[#allocation1] sm:$0xff]
    %2884 = vst [vmem:[#allocation1] ss:$9 sm:$0xff] %v2866
    %2885 = vst [vmem:[%s2869] ss:$9 sm:$0xff] %v2867
    %v2886 = vld [vmem:[#allocation1] sm:$0xff]
    %v2887 = vsel %vm564, %v2883, 0
    %v2889 = vsel %vm564, %v2886, 0
    %2891 = vmatpush.msra.mxu0 0.0
    %2892 = vmatpush.msra.mxu0 0.0
    %2893 = vmatpush.msra.mxu0 0.0
    %2894 = vmatpush.msra.mxu0 0.0
    %2895 = vmatpush.msra.mxu0 0.0
    %2896 = vmatpush.msra.mxu0 0.0
    %2897 = vmatpush.msra.mxu0 0.0
    %2898 = vmatpush.msra.mxu0 0.0
    %2899 = vmatpush.msra.mxu0 0.0
    %2900 = vmatpush.msra.mxu0 0.0
    %2901 = vmatpush.msra.mxu0 0.0
    %2902 = vmatpush.msra.mxu0 0.0
    %2903 = vmatpush.msra.mxu0 %v2141
    %2904 = vmatpush.msra.mxu0 %v2140
    %2905 = vmatpush.msra.mxu0 %v2139
    %2906 = vmatpush.msra.mxu0 %v2138
    %2907 = vmatmul.f32.gmra.mxu0 %v2887
    %v2908 = vpop.f32.mrf.mxu0
    %v2909 = vadd.f32 0.0, %v2908
    %2910 = vmatmul.f32.gmra.mxu0 %v2889
    %v2911 = vpop.f32.mrf.mxu0
    %v2912 = vadd.f32 0.0, %v2911
    %2913 = vdwg.mxu0
    %v2914 = vadd.f32 %v2659, %v2909
    %v2915 = vadd.f32 %v2662, %v2912
    %2916 = vst [vmem:[#allocation1] ss:$9 sm:$0xff] %v2078
    %s2917 = scalar_lea.vmem [#allocation1], 1
    %2918 = vst [vmem:[%s2917] ss:$9 sm:$0xff] %v2148
    %s2919 = scalar_lea.vmem [#allocation1], 2
    %2920 = vst [vmem:[%s2919] ss:$9 sm:$0xff] %v2149
    %s2921 = scalar_lea.vmem [#allocation1], 3
    %2922 = vst [vmem:[%s2921] ss:$9 sm:$0xff] %v2150
    %s2923 = scalar_lea.vmem [#allocation1], 4
    %2924 = vst [vmem:[%s2923] ss:$9 sm:$0xff] %v2151
    %v2925 = vld [vmem:[#allocation1] sm:$0xff]
    %2926 = vrot.lane.b32.xlu0 %v2925, 32
    %v2927 = vpop.permute.xlu0 %2926
    %2928 = vst [vmem:[#allocation1] ss:$9 sm:$0xff] %v2101
    %s2929 = scalar_lea.vmem [#allocation1], 1
    %2930 = vst [vmem:[%s2929] ss:$9 sm:$0xff] %v2158
    %s2931 = scalar_lea.vmem [#allocation1], 2
    %2932 = vst [vmem:[%s2931] ss:$9 sm:$0xff] %v2159
    %s2933 = scalar_lea.vmem [#allocation1], 3
    %2934 = vst [vmem:[%s2933] ss:$9 sm:$0xff] %v2160
    %s2935 = scalar_lea.vmem [#allocation1], 4
    %2936 = vst [vmem:[%s2935] ss:$9 sm:$0xff] %v2161
    %v2937 = vld [vmem:[#allocation1] sm:$0xff]
    %2938 = vrot.lane.b32.xlu0 %v2937, 32
    %v2939 = vpop.permute.xlu0 %2938
    %v2940 = vsel %vm564, %v2927, 0
    %v2942 = vsel %vm564, %v2939, 0
    %2944 = vmatpush.xpose.msra.mxu0 0.0
    %2945 = vmatpush.xpose.msra.mxu0 0.0
    %2946 = vmatpush.xpose.msra.mxu0 0.0
    %2947 = vmatpush.xpose.msra.mxu0 0.0
    %2948 = vmatpush.xpose.msra.mxu0 0.0
    %2949 = vmatpush.xpose.msra.mxu0 0.0
    %2950 = vmatpush.xpose.msra.mxu0 0.0
    %2951 = vmatpush.xpose.msra.mxu0 0.0
    %2952 = vmatpush.xpose.msra.mxu0 0.0
    %2953 = vmatpush.xpose.msra.mxu0 0.0
    %2954 = vmatpush.xpose.msra.mxu0 0.0
    %2955 = vmatpush.xpose.msra.mxu0 0.0
    %2956 = vmatpush.xpose.msra.mxu0 0.0
    %2957 = vmatpush.xpose.msra.mxu0 0.0
    %2958 = vmatpush.xpose.msra.mxu0 0.0
    %2959 = vmatpush.xpose.msra.mxu0 %v2942
    %2960 = vmatmul.f32.gmra.mxu0 %v2940
    %v2961 = vpop.f32.mrf.mxu0
    %v2962 = vadd.f32 0.0, %v2961
    %2963 = vdwg.mxu0
    %2964 = vst [vmem:[#allocation1] ss:$9 sm:$0xff] %v2152
    %s2965 = scalar_lea.vmem [#allocation1], 1
    %2966 = vst [vmem:[%s2965] ss:$9 sm:$0xff] %v2153
    %s2967 = scalar_lea.vmem [#allocation1], 2
    %2968 = vst [vmem:[%s2967] ss:$9 sm:$0xff] %v2154
    %s2969 = scalar_lea.vmem [#allocation1], 3
    %2970 = vst [vmem:[%s2969] ss:$9 sm:$0xff] %v2081
    %s2971 = scalar_lea.vmem [#allocation1], 4
    %2972 = vst [vmem:[%s2971] ss:$9 sm:$0xff] %v2155
    %v2973 = vld [vmem:[#allocation1] sm:$0xff]
    %2974 = vrot.lane.b32.xlu0 %v2973, 32
    %v2975 = vpop.permute.xlu0 %2974
    %2976 = vst [vmem:[#allocation1] ss:$9 sm:$0xff] %v2162
    %s2977 = scalar_lea.vmem [#allocation1], 1
    %2978 = vst [vmem:[%s2977] ss:$9 sm:$0xff] %v2163
    %s2979 = scalar_lea.vmem [#allocation1], 2
    %2980 = vst [vmem:[%s2979] ss:$9 sm:$0xff] %v2164
    %s2981 = scalar_lea.vmem [#allocation1], 3
    %2982 = vst [vmem:[%s2981] ss:$9 sm:$0xff] %v2104
    %s2983 = scalar_lea.vmem [#allocation1], 4
    %2984 = vst [vmem:[%s2983] ss:$9 sm:$0xff] %v2165
    %v2985 = vld [vmem:[#allocation1] sm:$0xff]
    %2986 = vrot.lane.b32.xlu0 %v2985, 32
    %v2987 = vpop.permute.xlu0 %2986
    %v2988 = vsel %vm564, %v2975, 0
    %v2990 = vsel %vm564, %v2987, 0
    %2992 = vmatpush.xpose.msra.mxu0 0.0
    %2993 = vmatpush.xpose.msra.mxu0 0.0
    %2994 = vmatpush.xpose.msra.mxu0 0.0
    %2995 = vmatpush.xpose.msra.mxu0 0.0
    %2996 = vmatpush.xpose.msra.mxu0 0.0
    %2997 = vmatpush.xpose.msra.mxu0 0.0
    %2998 = vmatpush.xpose.msra.mxu0 0.0
    %2999 = vmatpush.xpose.msra.mxu0 0.0
    %3000 = vmatpush.xpose.msra.mxu0 0.0
    %3001 = vmatpush.xpose.msra.mxu0 0.0
    %3002 = vmatpush.xpose.msra.mxu0 0.0
    %3003 = vmatpush.xpose.msra.mxu0 0.0
    %3004 = vmatpush.xpose.msra.mxu0 0.0
    %3005 = vmatpush.xpose.msra.mxu0 0.0
    %3006 = vmatpush.xpose.msra.mxu0 0.0
    %3007 = vmatpush.xpose.msra.mxu0 %v2990
    %3008 = vmatmul.f32.gmra.mxu0 %v2988
    %v3009 = vpop.f32.mrf.mxu0
    %v3010 = vadd.f32 0.0, %v3009
    %3011 = vdwg.mxu0
    %v3012 = vmul.f32 %v2962, 0.17677669
    %v3013 = vmul.f32 %v3010, 0.17677669
    %v3014 = vsel %vm635, %v3012, -inf
    %3015 = vmax.xlane.f32.xlu0 %v3014
    %v3016 = vpop.xlane.xlu0 %3015
    %v3017 = vsel %vm635, %v3013, -inf
    %3018 = vmax.xlane.f32.xlu0 %v3017
    %v3019 = vpop.xlane.xlu0 %3018
    %v3020 = vsub.f32 %v3012, %v3016
    %v3021 = vsub.f32 %v3013, %v3019
    %v3022 = vmul.f32 %v3020, 1.442695
    %v3023 = vpow.pop %v3022
    %v3024 = vmul.f32 %v3021, 1.442695
    %v3025 = vpow.pop %v3024
    %v3026 = vsel %vm635, %v3023, 0.0
    %3027 = vadd.xlane.f32.xlu0 %v3026
    %v3028 = vpop.xlane.xlu0 %3027
    %v3029 = vsel %vm635, %v3025, 0.0
    %3030 = vadd.xlane.f32.xlu0 %v3029
    %v3031 = vpop.xlane.xlu0 %3030
    %v3032 = vrcp.pop %v3028
    %v3033 = vrcp.pop %v3031
    %v3034 = vmul.f32 %v3023, %v3032
    %v3035 = vmul.f32 %v3025, %v3033
    %3036 = vst [vmem:[#allocation1] ss:$9 sm:$0xff] %v2124
    %s3037 = scalar_lea.vmem [#allocation1], 1
    %3038 = vst [vmem:[%s3037] ss:$9 sm:$0xff] %v2168
    %s3039 = scalar_lea.vmem [#allocation1], 2
    %3040 = vst [vmem:[%s3039] ss:$9 sm:$0xff] %v2169
    %s3041 = scalar_lea.vmem [#allocation1], 3
    %3042 = vst [vmem:[%s3041] ss:$9 sm:$0xff] %v2170
    %s3043 = scalar_lea.vmem [#allocation1], 4
    %3044 = vst [vmem:[%s3043] ss:$9 sm:$0xff] %v2171
    %v3045 = vld [vmem:[#allocation1] sm:$0xff]
    %3046 = vrot.lane.b32.xlu0 %v3045, 32
    %v3047 = vpop.permute.xlu0 %3046
    %v3049 = vsel %vm668, %v3034, 0
    %v3051 = vsel %vm672, %v3047, 0
    %3053 = vmatpush.msra.mxu0 0.0
    %3054 = vmatpush.msra.mxu0 0.0
    %3055 = vmatpush.msra.mxu0 0.0
    %3056 = vmatpush.msra.mxu0 0.0
    %3057 = vmatpush.msra.mxu0 0.0
    %3058 = vmatpush.msra.mxu0 0.0
    %3059 = vmatpush.msra.mxu0 0.0
    %3060 = vmatpush.msra.mxu0 0.0
    %3061 = vmatpush.msra.mxu0 0.0
    %3062 = vmatpush.msra.mxu0 0.0
    %3063 = vmatpush.msra.mxu0 0.0
    %3064 = vmatpush.msra.mxu0 0.0
    %3065 = vmatpush.msra.mxu0 0.0
    %3066 = vmatpush.msra.mxu0 0.0
    %3067 = vmatpush.msra.mxu0 0.0
    %3068 = vmatpush.msra.mxu0 %v3051
    %3069 = vmatmul.f32.gmra.mxu0 %v3049
    %v3070 = vpop.f32.mrf.mxu0
    %v3071 = vadd.f32 0.0, %v3070
    %3072 = vdwg.mxu0
    %3073 = vst [vmem:[#allocation1] ss:$9 sm:$0xff] %v2172
    %s3074 = scalar_lea.vmem [#allocation1], 1
    %3075 = vst [vmem:[%s3074] ss:$9 sm:$0xff] %v2173
    %s3076 = scalar_lea.vmem [#allocation1], 2
    %3077 = vst [vmem:[%s3076] ss:$9 sm:$0xff] %v2174
    %s3078 = scalar_lea.vmem [#allocation1], 3
    %3079 = vst [vmem:[%s3078] ss:$9 sm:$0xff] %v2127
    %s3080 = scalar_lea.vmem [#allocation1], 4
    %3081 = vst [vmem:[%s3080] ss:$9 sm:$0xff] %v2175
    %v3082 = vld [vmem:[#allocation1] sm:$0xff]
    %3083 = vrot.lane.b32.xlu0 %v3082, 32
    %v3084 = vpop.permute.xlu0 %3083
    %v3086 = vsel %vm668, %v3035, 0
    %v3088 = vsel %vm672, %v3084, 0
    %3090 = vmatpush.msra.mxu0 0.0
    %3091 = vmatpush.msra.mxu0 0.0
    %3092 = vmatpush.msra.mxu0 0.0
    %3093 = vmatpush.msra.mxu0 0.0
    %3094 = vmatpush.msra.mxu0 0.0
    %3095 = vmatpush.msra.mxu0 0.0
    %3096 = vmatpush.msra.mxu0 0.0
    %3097 = vmatpush.msra.mxu0 0.0
    %3098 = vmatpush.msra.mxu0 0.0
    %3099 = vmatpush.msra.mxu0 0.0
    %3100 = vmatpush.msra.mxu0 0.0
    %3101 = vmatpush.msra.mxu0 0.0
    %3102 = vmatpush.msra.mxu0 0.0
    %3103 = vmatpush.msra.mxu0 0.0
    %3104 = vmatpush.msra.mxu0 0.0
    %3105 = vmatpush.msra.mxu0 %v3088
    %3106 = vmatmul.f32.gmra.mxu0 %v3086
    %v3107 = vpop.f32.mrf.mxu0
    %v3108 = vadd.f32 0.0, %v3107
    %3109 = vdwg.mxu0
    %v3112 = vrot.slane %v3071, 1
    %v3113 = vrot.slane %v3071, 2
    %v3114 = vrot.slane %v3071, 3
    %v3115 = vrot.slane %v3071, 4
    %v3116 = vrot.slane %v3108, 1
    %v3117 = vrot.slane %v3108, 2
    %v3118 = vrot.slane %v3108, 3
    %v3119 = vrot.slane %v3108, 4
    %3120 = vst [vmem:[#allocation1] ss:$9 sm:$0xff] %v3071
    %s3121 = scalar_lea.vmem [#allocation1], 1
    %3122 = vst [vmem:[%s3121] ss:$9 sm:$0xff] %v3112
    %s3123 = scalar_lea.vmem [#allocation1], 2
    %3124 = vst [vmem:[%s3123] ss:$9 sm:$0xff] %v3113
    %s3125 = scalar_lea.vmem [#allocation1], 3
    %3126 = vst [vmem:[%s3125] ss:$9 sm:$0xff] %v3114
    %s3127 = scalar_lea.vmem [#allocation1], 4
    %3128 = vst [vmem:[%s3127] ss:$9 sm:$0xff] %v3115
    %s3129 = scalar_lea.vmem [#allocation1], 5
    %3130 = vst [vmem:[%s3129] ss:$9 sm:$0xff] %v3108
    %s3131 = scalar_lea.vmem [#allocation1], 6
    %3132 = vst [vmem:[%s3131] ss:$9 sm:$0xff] %v3116
    %s3133 = scalar_lea.vmem [#allocation1], 7
    %3134 = vst [vmem:[%s3133] ss:$9 sm:$0xff] %v3117
    %v3135 = vld [vmem:[#allocation1] sm:$0xff]
    %3136 = vst [vmem:[#allocation1] ss:$9 sm:$0xff] %v3118
    %3137 = vst [vmem:[%s3121] ss:$9 sm:$0xff] %v3119
    %v3138 = vld [vmem:[#allocation1] sm:$0xff]
    %v3139 = vsel %vm564, %v3135, 0
    %v3141 = vsel %vm564, %v3138, 0
    %3143 = vmatpush.msra.mxu0 0.0
    %3144 = vmatpush.msra.mxu0 0.0
    %3145 = vmatpush.msra.mxu0 0.0
    %3146 = vmatpush.msra.mxu0 0.0
    %3147 = vmatpush.msra.mxu0 0.0
    %3148 = vmatpush.msra.mxu0 0.0
    %3149 = vmatpush.msra.mxu0 0.0
    %3150 = vmatpush.msra.mxu0 0.0
    %3151 = vmatpush.msra.mxu0 0.0
    %3152 = vmatpush.msra.mxu0 0.0
    %3153 = vmatpush.msra.mxu0 0.0
    %3154 = vmatpush.msra.mxu0 0.0
    %3155 = vmatpush.msra.mxu0 %v2145
    %3156 = vmatpush.msra.mxu0 %v2144
    %3157 = vmatpush.msra.mxu0 %v2143
    %3158 = vmatpush.msra.mxu0 %v2142
    %3159 = vmatmul.f32.gmra.mxu0 %v3139
    %v3160 = vpop.f32.mrf.mxu0
    %v3161 = vadd.f32 0.0, %v3160
    %3162 = vmatmul.f32.gmra.mxu0 %v3141
    %v3163 = vpop.f32.mrf.mxu0
    %v3164 = vadd.f32 0.0, %v3163
    %3165 = vdwg.mxu0
    %v3166 = vadd.f32 %v2914, %v3161
    %v3167 = vadd.f32 %v2915, %v3164
    %v3168 = vadd.f32 %v1944, %v3166
    %v3169 = vadd.f32 %v1945, %v3167
    %s3170 = scalar_lea.vmem %s8, 1
    %v3171 = vld [vmem:[%s3170] sm:$0x1]
    %v3173 = vperm.slane %v3171, 0
    %v3175 = vadd.f32 %v3168, %v3173
    %v3176 = vadd.f32 %v3169, %v3173
    %s3177 = scalar_lea.vmem %s9, 1
    %v3178 = vld [vmem:[%s3177] sm:$0x1]
    %s3179 = scalar_lea.vmem %s10, 1
    %v3180 = vld [vmem:[%s3179] sm:$0x1]
    %3181 = vadd.xlane.f32.xlu0 %v3175
    %v3182 = vpop.xlane.xlu0 %3181
    %v3183 = vsel %vm315, %v3176, 0.0
    %3184 = vadd.xlane.f32.xlu0 %v3183
    %v3185 = vpop.xlane.xlu0 %3184
    %v3186 = vmul.f32 %v3182, %v325
    %v3187 = vmul.f32 %v3185, %v325
    %v3188 = vsub.f32 %v3175, %v3186
    %v3189 = vsub.f32 %v3176, %v3187
    %v3190 = vmul.f32 %v3188, %v3188
    %v3191 = vmul.f32 %v3189, %v3189
    %3192 = vadd.xlane.f32.xlu0 %v3190
    %v3193 = vpop.xlane.xlu0 %3192
    %v3194 = vsel %vm315, %v3191, 0.0
    %3195 = vadd.xlane.f32.xlu0 %v3194
    %v3196 = vpop.xlane.xlu0 %3195
    %v3197 = vmul.f32 %v3193, %v325
    %v3198 = vmul.f32 %v3196, %v325
    %v3199 = vadd.f32 %v3197, 1e-06
    %v3200 = vadd.f32 %v3198, 1e-06
    %v3201 = vrsqrt.pop %v3199
    %v3202 = vmul.f32 %v3201, %v3199
    %v3203 = vmul.f32 %v3202, %v3201
    %v3204 = vmul.f32 0.5, %v3203
    %v3205 = vsub.f32 1.5, %v3204
    %v3206 = vmul.f32 %v3201, %v3205
    %vm3207 = vweird.f32 %v3199
    %vm3208 = vweird.f32 %v3201
    %vm3209 = vmor %vm3207, %vm3208
    %v3210 = vsel %vm3209, %v3201, %v3206
    %v3211 = vrsqrt.pop %v3200
    %v3212 = vmul.f32 %v3211, %v3200
    %v3213 = vmul.f32 %v3212, %v3211
    %v3214 = vmul.f32 0.5, %v3213
    %v3215 = vsub.f32 1.5, %v3214
    %v3216 = vmul.f32 %v3211, %v3215
    %vm3217 = vweird.f32 %v3200
    %vm3218 = vweird.f32 %v3211
    %vm3219 = vmor %vm3217, %vm3218
    %v3220 = vsel %vm3219, %v3211, %v3216
    %v3221 = vmul.f32 %v3188, %v3210
    %v3222 = vmul.f32 %v3189, %v3220
    %v3224 = vperm.slane %v3178, 0
    %v3226 = vmul.f32 %v3221, %v3224
    %v3227 = vmul.f32 %v3222, %v3224
    %v3229 = vperm.slane %v3180, 0
    %v3231 = vadd.f32 %v3226, %v3229
    %v3232 = vadd.f32 %v3227, %v3229
    %s3233 = scalar_lea.vmem %s11, 256
    %v3234 = vld [vmem:[%s3233] sm:$0xff]
    %v3235 = vld [vmem:[%s3233 + $0x8] sm:$0xff]
    %v3236 = vld [vmem:[%s3233 + $0x10] sm:$0xff]
    %v3237 = vld [vmem:[%s3233 + $0x18] sm:$0xff]
    %v3238 = vld [vmem:[%s3233 + $0x20] sm:$0xff]
    %v3239 = vld [vmem:[%s3233 + $0x28] sm:$0xff]
    %v3240 = vld [vmem:[%s3233 + $0x30] sm:$0xff]
    %v3241 = vld [vmem:[%s3233 + $0x38] sm:$0xff]
    %v3242 = vld [vmem:[%s3233 + $0x40] sm:$0xff]
    %v3243 = vld [vmem:[%s3233 + $0x48] sm:$0xff]
    %v3244 = vld [vmem:[%s3233 + $0x50] sm:$0xff]
    %v3245 = vld [vmem:[%s3233 + $0x58] sm:$0xff]
    %v3246 = vld [vmem:[%s3233 + $0x60] sm:$0xff]
    %v3247 = vld [vmem:[%s3233 + $0x68] sm:$0xff]
    %v3248 = vld [vmem:[%s3233 + $0x70] sm:$0xff]
    %v3249 = vld [vmem:[%s3233 + $0x78] sm:$0xff]
    %v3250 = vld [vmem:[%s3233 + $0x80] sm:$0xff]
    %v3251 = vld [vmem:[%s3233 + $0x88] sm:$0xff]
    %v3252 = vld [vmem:[%s3233 + $0x90] sm:$0xff]
    %v3253 = vld [vmem:[%s3233 + $0x98] sm:$0xff]
    %v3254 = vld [vmem:[%s3233 + $0xa0] sm:$0xff]
    %v3255 = vld [vmem:[%s3233 + $0xa8] sm:$0xff]
    %v3256 = vld [vmem:[%s3233 + $0xb0] sm:$0xff]
    %v3257 = vld [vmem:[%s3233 + $0xb8] sm:$0xff]
    %v3258 = vld [vmem:[%s3233 + $0xc0] sm:$0xff]
    %v3259 = vld [vmem:[%s3233 + $0xc8] sm:$0xff]
    %v3260 = vld [vmem:[%s3233 + $0xd0] sm:$0xff]
    %v3261 = vld [vmem:[%s3233 + $0xd8] sm:$0xff]
    %v3262 = vld [vmem:[%s3233 + $0xe0] sm:$0xff]
    %v3263 = vld [vmem:[%s3233 + $0xe8] sm:$0xff]
    %v3264 = vld [vmem:[%s3233 + $0xf0] sm:$0xff]
    %v3265 = vld [vmem:[%s3233 + $0xf8] sm:$0xff]
    %s3266 = scalar_lea.vmem %s12, 2
    %v3267 = vld [vmem:[%s3266] sm:$0x3]
    %v3269 = vperm.slane %v3267, 0
    %v3270 = vperm.slane %v3267, 1
    %3273 = vmatpush.msra.mxu0 %v3264
    %3274 = vmatpush.msra.mxu0 %v3262
    %3275 = vmatpush.msra.mxu0 %v3260
    %3276 = vmatpush.msra.mxu0 %v3258
    %3277 = vmatpush.msra.mxu0 %v3256
    %3278 = vmatpush.msra.mxu0 %v3254
    %3279 = vmatpush.msra.mxu0 %v3252
    %3280 = vmatpush.msra.mxu0 %v3250
    %3281 = vmatpush.msra.mxu0 %v3248
    %3282 = vmatpush.msra.mxu0 %v3246
    %3283 = vmatpush.msra.mxu0 %v3244
    %3284 = vmatpush.msra.mxu0 %v3242
    %3285 = vmatpush.msra.mxu0 %v3240
    %3286 = vmatpush.msra.mxu0 %v3238
    %3287 = vmatpush.msra.mxu0 %v3236
    %3288 = vmatpush.msra.mxu0 %v3234
    %3289 = vmatmul.f32.gmra.mxu0 %v3231
    %v3290 = vpop.f32.mrf.mxu0
    %v3291 = vadd.f32 %v3269, %v3290
    %3292 = vmatmul.f32.gmra.mxu0 %v3232
    %v3293 = vpop.f32.mrf.mxu0
    %v3294 = vadd.f32 %v3269, %v3293
    %3295 = vdwg.mxu0
    %3296 = vmatpush.msra.mxu0 %v3265
    %3297 = vmatpush.msra.mxu0 %v3263
    %3298 = vmatpush.msra.mxu0 %v3261
    %3299 = vmatpush.msra.mxu0 %v3259
    %3300 = vmatpush.msra.mxu0 %v3257
    %3301 = vmatpush.msra.mxu0 %v3255
    %3302 = vmatpush.msra.mxu0 %v3253
    %3303 = vmatpush.msra.mxu0 %v3251
    %3304 = vmatpush.msra.mxu0 %v3249
    %3305 = vmatpush.msra.mxu0 %v3247
    %3306 = vmatpush.msra.mxu0 %v3245
    %3307 = vmatpush.msra.mxu0 %v3243
    %3308 = vmatpush.msra.mxu0 %v3241
    %3309 = vmatpush.msra.mxu0 %v3239
    %3310 = vmatpush.msra.mxu0 %v3237
    %3311 = vmatpush.msra.mxu0 %v3235
    %3312 = vmatmul.f32.gmra.mxu0 %v3231
    %v3313 = vpop.f32.mrf.mxu0
    %v3314 = vadd.f32 %v3270, %v3313
    %3315 = vmatmul.f32.gmra.mxu0 %v3232
    %v3316 = vpop.f32.mrf.mxu0
    %v3317 = vadd.f32 %v3270, %v3316
    %3318 = vdwg.mxu0
    %v3319 = vmul.f32 %v3291, 0.5
    %v3320 = vmul.f32 %v3314, 0.5
    %v3321 = vmul.f32 %v3294, 0.5
    %v3322 = vmul.f32 %v3317, 0.5
    %v3323 = vmul.f32 %v3291, 0.70710677
    %v3324 = vmul.f32 %v3314, 0.70710677
    %v3325 = vmul.f32 %v3294, 0.70710677
    %v3326 = vmul.f32 %v3317, 0.70710677
    %v3327 = vmul.f32 %v3323, %v3323
    %v3328 = vmin.f32 16.0, %v3327
    %v3329 = vmul.f32 %v3328, 2.1237322e-06
    %v3330 = vadd.f32 %v3329, 0.00028619796
    %v3331 = vmul.f32 %v3328, %v3330
    %v3332 = vadd.f32 %v3331, 0.0036580483
    %v3333 = vmul.f32 %v3328, %v3332
    %v3334 = vadd.f32 %v3333, 0.05243302
    %v3335 = vmul.f32 %v3328, %v3334
    %v3336 = vadd.f32 %v3335, 0.18741608
    %v3337 = vmul.f32 %v3328, %v3336
    %v3338 = vadd.f32 %v3337, 1.1283791
    %v3339 = vmul.f32 %v3323, %v3338
    %v3340 = vmul.f32 %v3328, 3.8918573e-05
    %v3341 = vadd.f32 %v3340, 0.001143296
    %v3342 = vmul.f32 %v3328, %v3341
    %v3343 = vadd.f32 %v3342, 0.014752088
    %v3344 = vmul.f32 %v3328, %v3343
    %v3345 = vadd.f32 %v3344, 0.112945676
    %v3346 = vmul.f32 %v3328, %v3345
    %v3347 = vadd.f32 %v3346, 0.4994258
    %v3348 = vmul.f32 %v3328, %v3347
    %v3349 = vadd.f32 %v3348, 1.0
    %v3350 = vrcp.pop %v3349
    %v3351 = vmul.f32 %v3349, %v3350
    %v3352 = vsub.f32 1.0, %v3351
    %v3353 = vmul.f32 %v3350, %v3352
    %v3354 = vadd.f32 %v3350, %v3353
    %vm3355 = vweird.f32 %v3349
    %vm3356 = vweird.f32 %v3350
    %vm3357 = vmor %vm3355, %vm3356
    %v3358 = vsel %vm3357, %v3350, %v3354
    %v3359 = vand.u32 2147483647, %v3349
    %vm3360 = vcmp.eq.f32.partialorder %v3359, 8.507059e+37
    %v3361 = vand.u32 %v3349, 2147483648
    %v3362 = vor.u32 1.1754944e-38, %v3361
    %v3363 = vsel %vm3360, %v3362, %v3358
    %v3364 = vmul.f32 %v3339, %v3363
    %v3365 = vmin.f32 %v3364, 1.0
    %v3366 = vmax.f32 %v3365, -1.0
    %v3367 = vmul.f32 %v3324, %v3324
    %v3368 = vmin.f32 16.0, %v3367
    %v3369 = vmul.f32 %v3368, 2.1237322e-06
    %v3370 = vadd.f32 %v3369, 0.00028619796
    %v3371 = vmul.f32 %v3368, %v3370
    %v3372 = vadd.f32 %v3371, 0.0036580483
    %v3373 = vmul.f32 %v3368, %v3372
    %v3374 = vadd.f32 %v3373, 0.05243302
    %v3375 = vmul.f32 %v3368, %v3374
    %v3376 = vadd.f32 %v3375, 0.18741608
    %v3377 = vmul.f32 %v3368, %v3376
    %v3378 = vadd.f32 %v3377, 1.1283791
    %v3379 = vmul.f32 %v3324, %v3378
    %v3380 = vmul.f32 %v3368, 3.8918573e-05
    %v3381 = vadd.f32 %v3380, 0.001143296
    %v3382 = vmul.f32 %v3368, %v3381
    %v3383 = vadd.f32 %v3382, 0.014752088
    %v3384 = vmul.f32 %v3368, %v3383
    %v3385 = vadd.f32 %v3384, 0.112945676
    %v3386 = vmul.f32 %v3368, %v3385
    %v3387 = vadd.f32 %v3386, 0.4994258
    %v3388 = vmul.f32 %v3368, %v3387
    %v3389 = vadd.f32 %v3388, 1.0
    %v3390 = vrcp.pop %v3389
    %v3391 = vmul.f32 %v3389, %v3390
    %v3392 = vsub.f32 1.0, %v3391
    %v3393 = vmul.f32 %v3390, %v3392
    %v3394 = vadd.f32 %v3390, %v3393
    %vm3395 = vweird.f32 %v3389
    %vm3396 = vweird.f32 %v3390
    %vm3397 = vmor %vm3395, %vm3396
    %v3398 = vsel %vm3397, %v3390, %v3394
    %v3399 = vand.u32 2147483647, %v3389
    %vm3400 = vcmp.eq.f32.partialorder %v3399, 8.507059e+37
    %v3401 = vand.u32 %v3389, 2147483648
    %v3402 = vor.u32 1.1754944e-38, %v3401
    %v3403 = vsel %vm3400, %v3402, %v3398
    %v3404 = vmul.f32 %v3379, %v3403
    %v3405 = vmin.f32 %v3404, 1.0
    %v3406 = vmax.f32 %v3405, -1.0
    %v3407 = vmul.f32 %v3325, %v3325
    %v3408 = vmin.f32 16.0, %v3407
    %v3409 = vmul.f32 %v3408, 2.1237322e-06
    %v3410 = vadd.f32 %v3409, 0.00028619796
    %v3411 = vmul.f32 %v3408, %v3410
    %v3412 = vadd.f32 %v3411, 0.0036580483
    %v3413 = vmul.f32 %v3408, %v3412
    %v3414 = vadd.f32 %v3413, 0.05243302
    %v3415 = vmul.f32 %v3408, %v3414
    %v3416 = vadd.f32 %v3415, 0.18741608
    %v3417 = vmul.f32 %v3408, %v3416
    %v3418 = vadd.f32 %v3417, 1.1283791
    %v3419 = vmul.f32 %v3325, %v3418
    %v3420 = vmul.f32 %v3408, 3.8918573e-05
    %v3421 = vadd.f32 %v3420, 0.001143296
    %v3422 = vmul.f32 %v3408, %v3421
    %v3423 = vadd.f32 %v3422, 0.014752088
    %v3424 = vmul.f32 %v3408, %v3423
    %v3425 = vadd.f32 %v3424, 0.112945676
    %v3426 = vmul.f32 %v3408, %v3425
    %v3427 = vadd.f32 %v3426, 0.4994258
    %v3428 = vmul.f32 %v3408, %v3427
    %v3429 = vadd.f32 %v3428, 1.0
    %v3430 = vrcp.pop %v3429
    %v3431 = vmul.f32 %v3429, %v3430
    %v3432 = vsub.f32 1.0, %v3431
    %v3433 = vmul.f32 %v3430, %v3432
    %v3434 = vadd.f32 %v3430, %v3433
    %vm3435 = vweird.f32 %v3429
    %vm3436 = vweird.f32 %v3430
    %vm3437 = vmor %vm3435, %vm3436
    %v3438 = vsel %vm3437, %v3430, %v3434
    %v3439 = vand.u32 2147483647, %v3429
    %vm3440 = vcmp.eq.f32.partialorder %v3439, 8.507059e+37
    %v3441 = vand.u32 %v3429, 2147483648
    %v3442 = vor.u32 1.1754944e-38, %v3441
    %v3443 = vsel %vm3440, %v3442, %v3438
    %v3444 = vmul.f32 %v3419, %v3443
    %v3445 = vmin.f32 %v3444, 1.0
    %v3446 = vmax.f32 %v3445, -1.0
    %v3447 = vmul.f32 %v3326, %v3326
    %v3448 = vmin.f32 16.0, %v3447
    %v3449 = vmul.f32 %v3448, 2.1237322e-06
    %v3450 = vadd.f32 %v3449, 0.00028619796
    %v3451 = vmul.f32 %v3448, %v3450
    %v3452 = vadd.f32 %v3451, 0.0036580483
    %v3453 = vmul.f32 %v3448, %v3452
    %v3454 = vadd.f32 %v3453, 0.05243302
    %v3455 = vmul.f32 %v3448, %v3454
    %v3456 = vadd.f32 %v3455, 0.18741608
    %v3457 = vmul.f32 %v3448, %v3456
    %v3458 = vadd.f32 %v3457, 1.1283791
    %v3459 = vmul.f32 %v3326, %v3458
    %v3460 = vmul.f32 %v3448, 3.8918573e-05
    %v3461 = vadd.f32 %v3460, 0.001143296
    %v3462 = vmul.f32 %v3448, %v3461
    %v3463 = vadd.f32 %v3462, 0.014752088
    %v3464 = vmul.f32 %v3448, %v3463
    %v3465 = vadd.f32 %v3464, 0.112945676
    %v3466 = vmul.f32 %v3448, %v3465
    %v3467 = vadd.f32 %v3466, 0.4994258
    %v3468 = vmul.f32 %v3448, %v3467
    %v3469 = vadd.f32 %v3468, 1.0
    %v3470 = vrcp.pop %v3469
    %v3471 = vmul.f32 %v3469, %v3470
    %v3472 = vsub.f32 1.0, %v3471
    %v3473 = vmul.f32 %v3470, %v3472
    %v3474 = vadd.f32 %v3470, %v3473
    %vm3475 = vweird.f32 %v3469
    %vm3476 = vweird.f32 %v3470
    %vm3477 = vmor %vm3475, %vm3476
    %v3478 = vsel %vm3477, %v3470, %v3474
    %v3479 = vand.u32 2147483647, %v3469
    %vm3480 = vcmp.eq.f32.partialorder %v3479, 8.507059e+37
    %v3481 = vand.u32 %v3469, 2147483648
    %v3482 = vor.u32 1.1754944e-38, %v3481
    %v3483 = vsel %vm3480, %v3482, %v3478
    %v3484 = vmul.f32 %v3459, %v3483
    %v3485 = vmin.f32 %v3484, 1.0
    %v3486 = vmax.f32 %v3485, -1.0
    %v3487 = vadd.f32 %v3366, 1.0
    %v3488 = vadd.f32 %v3406, 1.0
    %v3489 = vadd.f32 %v3446, 1.0
    %v3490 = vadd.f32 %v3486, 1.0
    %v3491 = vmul.f32 %v3319, %v3487
    %v3492 = vmul.f32 %v3320, %v3488
    %v3493 = vmul.f32 %v3321, %v3489
    %v3494 = vmul.f32 %v3322, %v3490
    %s3495 = scalar_lea.vmem %s13, 256
    %v3496 = vld [vmem:[%s3495] sm:$0xff]
    %v3497 = vld [vmem:[%s3495 + $0x8] sm:$0xff]
    %v3498 = vld [vmem:[%s3495 + $0x10] sm:$0xff]
    %v3499 = vld [vmem:[%s3495 + $0x18] sm:$0xff]
    %v3500 = vld [vmem:[%s3495 + $0x20] sm:$0xff]
    %v3501 = vld [vmem:[%s3495 + $0x28] sm:$0xff]
    %v3502 = vld [vmem:[%s3495 + $0x30] sm:$0xff]
    %v3503 = vld [vmem:[%s3495 + $0x38] sm:$0xff]
    %v3504 = vld [vmem:[%s3495 + $0x40] sm:$0xff]
    %v3505 = vld [vmem:[%s3495 + $0x48] sm:$0xff]
    %v3506 = vld [vmem:[%s3495 + $0x50] sm:$0xff]
    %v3507 = vld [vmem:[%s3495 + $0x58] sm:$0xff]
    %v3508 = vld [vmem:[%s3495 + $0x60] sm:$0xff]
    %v3509 = vld [vmem:[%s3495 + $0x68] sm:$0xff]
    %v3510 = vld [vmem:[%s3495 + $0x70] sm:$0xff]
    %v3511 = vld [vmem:[%s3495 + $0x78] sm:$0xff]
    %v3512 = vld [vmem:[%s3495 + $0x80] sm:$0xff]
    %v3513 = vld [vmem:[%s3495 + $0x88] sm:$0xff]
    %v3514 = vld [vmem:[%s3495 + $0x90] sm:$0xff]
    %v3515 = vld [vmem:[%s3495 + $0x98] sm:$0xff]
    %v3516 = vld [vmem:[%s3495 + $0xa0] sm:$0xff]
    %v3517 = vld [vmem:[%s3495 + $0xa8] sm:$0xff]
    %v3518 = vld [vmem:[%s3495 + $0xb0] sm:$0xff]
    %v3519 = vld [vmem:[%s3495 + $0xb8] sm:$0xff]
    %v3520 = vld [vmem:[%s3495 + $0xc0] sm:$0xff]
    %v3521 = vld [vmem:[%s3495 + $0xc8] sm:$0xff]
    %v3522 = vld [vmem:[%s3495 + $0xd0] sm:$0xff]
    %v3523 = vld [vmem:[%s3495 + $0xd8] sm:$0xff]
    %v3524 = vld [vmem:[%s3495 + $0xe0] sm:$0xff]
    %v3525 = vld [vmem:[%s3495 + $0xe8] sm:$0xff]
    %v3526 = vld [vmem:[%s3495 + $0xf0] sm:$0xff]
    %v3527 = vld [vmem:[%s3495 + $0xf8] sm:$0xff]
    %s3528 = scalar_lea.vmem %s14, 1
    %v3529 = vld [vmem:[%s3528] sm:$0x1]
    %v3531 = vperm.slane %v3529, 0
    %3533 = vmatpush.msra.mxu0 %v3511
    %3534 = vmatpush.msra.mxu0 %v3510
    %3535 = vmatpush.msra.mxu0 %v3509
    %3536 = vmatpush.msra.mxu0 %v3508
    %3537 = vmatpush.msra.mxu0 %v3507
    %3538 = vmatpush.msra.mxu0 %v3506
    %3539 = vmatpush.msra.mxu0 %v3505
    %3540 = vmatpush.msra.mxu0 %v3504
    %3541 = vmatpush.msra.mxu0 %v3503
    %3542 = vmatpush.msra.mxu0 %v3502
    %3543 = vmatpush.msra.mxu0 %v3501
    %3544 = vmatpush.msra.mxu0 %v3500
    %3545 = vmatpush.msra.mxu0 %v3499
    %3546 = vmatpush.msra.mxu0 %v3498
    %3547 = vmatpush.msra.mxu0 %v3497
    %3548 = vmatpush.msra.mxu0 %v3496
    %3549 = vmatmul.f32.gmra.mxu0 %v3491
    %v3550 = vpop.f32.mrf.mxu0
    %v3551 = vadd.f32 %v3531, %v3550
    %3552 = vmatmul.f32.gmra.mxu0 %v3493
    %v3553 = vpop.f32.mrf.mxu0
    %3554 = vdwg.mxu0
    %3555 = vmatpush.msra.mxu0 %v3527
    %3556 = vmatpush.msra.mxu0 %v3526
    %3557 = vmatpush.msra.mxu0 %v3525
    %3558 = vmatpush.msra.mxu0 %v3524
    %3559 = vmatpush.msra.mxu0 %v3523
    %3560 = vmatpush.msra.mxu0 %v3522
    %3561 = vmatpush.msra.mxu0 %v3521
    %3562 = vmatpush.msra.mxu0 %v3520
    %3563 = vmatpush.msra.mxu0 %v3519
    %3564 = vmatpush.msra.mxu0 %v3518
    %3565 = vmatpush.msra.mxu0 %v3517
    %3566 = vmatpush.msra.mxu0 %v3516
    %3567 = vmatpush.msra.mxu0 %v3515
    %3568 = vmatpush.msra.mxu0 %v3514
    %3569 = vmatpush.msra.mxu0 %v3513
    %3570 = vmatpush.msra.mxu0 %v3512
    %3571 = vmatmul.f32.gmra.mxu0 %v3492
    %v3572 = vpop.f32.mrf.mxu0
    %v3573 = vadd.f32 %v3551, %v3572
    %3574 = vmatmul.f32.gmra.mxu0 %v3494
    %v3575 = vpop.f32.mrf.mxu0
    %3576 = vdwg.mxu0
    %v3577 = vadd.f32 %v3175, %v3573
    %v3579 = vrot.slane %v3577, 4
    %vm3581 = vcmask 1040384
    %v3582 = vsel %vm3581, %v3577, %v3579
    %v3583 = vld [vmem:[%s15] sm:$0x1]
    %v3584 = vld [vmem:[%s16] sm:$0x1]
    %v3585 = vsel %vm315, %v3582, 0.0
    %3586 = vadd.xlane.f32.xlu0 %v3585
    %v3587 = vpop.xlane.xlu0 %3586
    %v3588 = vmul.f32 %v3587, %v325
    %v3589 = vsub.f32 %v3582, %v3588
    %v3590 = vmul.f32 %v3589, %v3589
    %v3591 = vsel %vm315, %v3590, 0.0
    %3592 = vadd.xlane.f32.xlu0 %v3591
    %v3593 = vpop.xlane.xlu0 %3592
    %v3594 = vmul.f32 %v3593, %v325
    %v3595 = vadd.f32 %v3594, 1e-06
    %v3596 = vrsqrt.pop %v3595
    %v3597 = vmul.f32 %v3596, %v3595
    %v3598 = vmul.f32 %v3597, %v3596
    %v3599 = vmul.f32 0.5, %v3598
    %v3600 = vsub.f32 1.5, %v3599
    %v3601 = vmul.f32 %v3596, %v3600
    %vm3602 = vweird.f32 %v3595
    %vm3603 = vweird.f32 %v3596
    %vm3604 = vmor %vm3602, %vm3603
    %v3605 = vsel %vm3604, %v3596, %v3601
    %v3606 = vmul.f32 %v3589, %v3605
    %v3608 = vperm.slane %v3583, 0
    %v3610 = vmul.f32 %v3606, %v3608
    %v3612 = vperm.slane %v3584, 0
    %v3614 = vadd.f32 %v3610, %v3612
    %v3615 = vld [vmem:[%s17] sm:$0xff]
    %v3616 = vld [vmem:[%s17 + $0x8] sm:$0xff]
    %v3617 = vld [vmem:[%s17 + $0x10] sm:$0xff]
    %v3618 = vld [vmem:[%s17 + $0x18] sm:$0xff]
    %v3619 = vld [vmem:[%s17 + $0x20] sm:$0xff]
    %v3620 = vld [vmem:[%s17 + $0x28] sm:$0xff]
    %v3621 = vld [vmem:[%s17 + $0x30] sm:$0xff]
    %v3622 = vld [vmem:[%s17 + $0x38] sm:$0xff]
    %v3623 = vld [vmem:[%s17 + $0x40] sm:$0xff]
    %v3624 = vld [vmem:[%s17 + $0x48] sm:$0xff]
    %v3625 = vld [vmem:[%s17 + $0x50] sm:$0xff]
    %v3626 = vld [vmem:[%s17 + $0x58] sm:$0xff]
    %v3627 = vld [vmem:[%s17 + $0x60] sm:$0xff]
    %v3628 = vld [vmem:[%s17 + $0x68] sm:$0xff]
    %v3629 = vld [vmem:[%s17 + $0x70] sm:$0xff]
    %v3630 = vld [vmem:[%s17 + $0x78] sm:$0xff]
    %v3631 = vld [vmem:[%s17 + $0x80] sm:$0xff]
    %v3632 = vld [vmem:[%s17 + $0x88] sm:$0xff]
    %v3633 = vld [vmem:[%s17 + $0x90] sm:$0xff]
    %v3634 = vld [vmem:[%s17 + $0x98] sm:$0xff]
    %v3635 = vld [vmem:[%s17 + $0xa0] sm:$0xff]
    %v3636 = vld [vmem:[%s17 + $0xa8] sm:$0xff]
    %v3637 = vld [vmem:[%s17 + $0xb0] sm:$0xff]
    %v3638 = vld [vmem:[%s17 + $0xb8] sm:$0xff]
    %v3639 = vld [vmem:[%s17 + $0xc0] sm:$0xff]
    %v3640 = vld [vmem:[%s17 + $0xc8] sm:$0xff]
    %v3641 = vld [vmem:[%s17 + $0xd0] sm:$0xff]
    %v3642 = vld [vmem:[%s17 + $0xd8] sm:$0xff]
    %v3643 = vld [vmem:[%s17 + $0xe0] sm:$0xff]
    %v3644 = vld [vmem:[%s17 + $0xe8] sm:$0xff]
    %v3645 = vld [vmem:[%s17 + $0xf0] sm:$0xff]
    %v3646 = vld [vmem:[%s17 + $0xf8] sm:$0xff]
    %v3647 = vld [vmem:[%s17 + $0x100] sm:$0xff]
    %v3648 = vld [vmem:[%s17 + $0x108] sm:$0xff]
    %v3649 = vld [vmem:[%s17 + $0x110] sm:$0xff]
    %v3650 = vld [vmem:[%s17 + $0x118] sm:$0xff]
    %v3651 = vld [vmem:[%s17 + $0x120] sm:$0xff]
    %v3652 = vld [vmem:[%s17 + $0x128] sm:$0xff]
    %v3653 = vld [vmem:[%s17 + $0x130] sm:$0xff]
    %v3654 = vld [vmem:[%s17 + $0x138] sm:$0xff]
    %v3655 = vld [vmem:[%s17 + $0x140] sm:$0xff]
    %v3656 = vld [vmem:[%s17 + $0x148] sm:$0xff]
    %v3657 = vld [vmem:[%s17 + $0x150] sm:$0xff]
    %v3658 = vld [vmem:[%s17 + $0x158] sm:$0xff]
    %v3659 = vld [vmem:[%s17 + $0x160] sm:$0xff]
    %v3660 = vld [vmem:[%s17 + $0x168] sm:$0xff]
    %v3661 = vld [vmem:[%s17 + $0x170] sm:$0xff]
    %v3662 = vld [vmem:[%s17 + $0x178] sm:$0xff]
    %v3663 = vld [vmem:[%s17 + $0x180] sm:$0xff]
    %v3664 = vld [vmem:[%s17 + $0x188] sm:$0xff]
    %v3665 = vld [vmem:[%s17 + $0x190] sm:$0xff]
    %v3666 = vld [vmem:[%s17 + $0x198] sm:$0xff]
    %v3667 = vld [vmem:[%s17 + $0x1a0] sm:$0xff]
    %v3668 = vld [vmem:[%s17 + $0x1a8] sm:$0xff]
    %v3669 = vld [vmem:[%s17 + $0x1b0] sm:$0xff]
    %v3670 = vld [vmem:[%s17 + $0x1b8] sm:$0xff]
    %v3671 = vld [vmem:[%s17 + $0x1c0] sm:$0xff]
    %v3672 = vld [vmem:[%s17 + $0x1c8] sm:$0xff]
    %v3673 = vld [vmem:[%s17 + $0x1d0] sm:$0xff]
    %v3674 = vld [vmem:[%s17 + $0x1d8] sm:$0xff]
    %v3675 = vld [vmem:[%s17 + $0x1e0] sm:$0xff]
    %v3676 = vld [vmem:[%s17 + $0x1e8] sm:$0xff]
    %v3677 = vld [vmem:[%s17 + $0x1f0] sm:$0xff]
    %v3678 = vld [vmem:[%s17 + $0x1f8] sm:$0xff]
    %v3679 = vld [vmem:[%s17 + $0x200] sm:$0xff]
    %v3680 = vld [vmem:[%s17 + $0x208] sm:$0xff]
    %v3681 = vld [vmem:[%s17 + $0x210] sm:$0xff]
    %v3682 = vld [vmem:[%s17 + $0x218] sm:$0xff]
    %v3683 = vld [vmem:[%s17 + $0x220] sm:$0xff]
    %v3684 = vld [vmem:[%s17 + $0x228] sm:$0xff]
    %v3685 = vld [vmem:[%s17 + $0x230] sm:$0xff]
    %v3686 = vld [vmem:[%s17 + $0x238] sm:$0xff]
    %v3687 = vld [vmem:[%s17 + $0x240] sm:$0xff]
    %v3688 = vld [vmem:[%s17 + $0x248] sm:$0xff]
    %v3689 = vld [vmem:[%s17 + $0x250] sm:$0xff]
    %v3690 = vld [vmem:[%s17 + $0x258] sm:$0xff]
    %v3691 = vld [vmem:[%s17 + $0x260] sm:$0xff]
    %v3692 = vld [vmem:[%s17 + $0x268] sm:$0xff]
    %v3693 = vld [vmem:[%s17 + $0x270] sm:$0xff]
    %v3694 = vld [vmem:[%s17 + $0x278] sm:$0xff]
    %v3695 = vld [vmem:[%s17 + $0x280] sm:$0xff]
    %v3696 = vld [vmem:[%s17 + $0x288] sm:$0xff]
    %v3697 = vld [vmem:[%s17 + $0x290] sm:$0xff]
    %v3698 = vld [vmem:[%s17 + $0x298] sm:$0xff]
    %v3699 = vld [vmem:[%s17 + $0x2a0] sm:$0xff]
    %v3700 = vld [vmem:[%s17 + $0x2a8] sm:$0xff]
    %v3701 = vld [vmem:[%s17 + $0x2b0] sm:$0xff]
    %v3702 = vld [vmem:[%s17 + $0x2b8] sm:$0xff]
    %v3703 = vld [vmem:[%s17 + $0x2c0] sm:$0xff]
    %v3704 = vld [vmem:[%s17 + $0x2c8] sm:$0xff]
    %v3705 = vld [vmem:[%s17 + $0x2d0] sm:$0xff]
    %v3706 = vld [vmem:[%s17 + $0x2d8] sm:$0xff]
    %v3707 = vld [vmem:[%s17 + $0x2e0] sm:$0xff]
    %v3708 = vld [vmem:[%s17 + $0x2e8] sm:$0xff]
    %v3709 = vld [vmem:[%s17 + $0x2f0] sm:$0xff]
    %v3710 = vld [vmem:[%s17 + $0x2f8] sm:$0xff]
    %v3711 = vld [vmem:[%s17 + $0x300] sm:$0xff]
    %v3712 = vld [vmem:[%s17 + $0x308] sm:$0xff]
    %v3713 = vld [vmem:[%s17 + $0x310] sm:$0xff]
    %v3714 = vld [vmem:[%s17 + $0x318] sm:$0xff]
    %v3715 = vld [vmem:[%s17 + $0x320] sm:$0xff]
    %v3716 = vld [vmem:[%s17 + $0x328] sm:$0xff]
    %v3717 = vld [vmem:[%s17 + $0x330] sm:$0xff]
    %v3718 = vld [vmem:[%s17 + $0x338] sm:$0xff]
    %v3719 = vld [vmem:[%s17 + $0x340] sm:$0xff]
    %v3720 = vld [vmem:[%s17 + $0x348] sm:$0xff]
    %v3721 = vld [vmem:[%s17 + $0x350] sm:$0xff]
    %v3722 = vld [vmem:[%s17 + $0x358] sm:$0xff]
    %v3723 = vld [vmem:[%s17 + $0x360] sm:$0xff]
    %v3724 = vld [vmem:[%s17 + $0x368] sm:$0xff]
    %v3725 = vld [vmem:[%s17 + $0x370] sm:$0xff]
    %v3726 = vld [vmem:[%s17 + $0x378] sm:$0xff]
    %v3727 = vld [vmem:[%s17 + $0x380] sm:$0xff]
    %v3728 = vld [vmem:[%s17 + $0x388] sm:$0xff]
    %v3729 = vld [vmem:[%s17 + $0x390] sm:$0xff]
    %v3730 = vld [vmem:[%s17 + $0x398] sm:$0xff]
    %v3731 = vld [vmem:[%s17 + $0x3a0] sm:$0xff]
    %v3732 = vld [vmem:[%s17 + $0x3a8] sm:$0xff]
    %v3733 = vld [vmem:[%s17 + $0x3b0] sm:$0xff]
    %v3734 = vld [vmem:[%s17 + $0x3b8] sm:$0xff]
    %v3735 = vld [vmem:[%s17 + $0x3c0] sm:$0xff]
    %v3736 = vld [vmem:[%s17 + $0x3c8] sm:$0xff]
    %v3737 = vld [vmem:[%s17 + $0x3d0] sm:$0xff]
    %v3738 = vld [vmem:[%s17 + $0x3d8] sm:$0xff]
    %v3739 = vld [vmem:[%s17 + $0x3e0] sm:$0xff]
    %v3740 = vld [vmem:[%s17 + $0x3e8] sm:$0xff]
    %v3741 = vld [vmem:[%s17 + $0x3f0] sm:$0xff]
    %v3742 = vld [vmem:[%s17 + $0x3f8] sm:$0xff]
    %v3743 = vld [vmem:[%s18] sm:$0xff]
    %v3745 = vperm.slane %v3743, 0
    %v3746 = vperm.slane %v3743, 1
    %v3747 = vperm.slane %v3743, 2
    %v3748 = vperm.slane %v3743, 3
    %v3749 = vperm.slane %v3743, 4
    %v3750 = vperm.slane %v3743, 5
    %v3751 = vperm.slane %v3743, 6
    %v3752 = vperm.slane %v3743, 7
    %3761 = vmatpush.msra.mxu0 %v3735
    %3762 = vmatpush.msra.mxu0 %v3727
    %3763 = vmatpush.msra.mxu0 %v3719
    %3764 = vmatpush.msra.mxu0 %v3711
    %3765 = vmatpush.msra.mxu0 %v3703
    %3766 = vmatpush.msra.mxu0 %v3695
    %3767 = vmatpush.msra.mxu0 %v3687
    %3768 = vmatpush.msra.mxu0 %v3679
    %3769 = vmatpush.msra.mxu0 %v3671
    %3770 = vmatpush.msra.mxu0 %v3663
    %3771 = vmatpush.msra.mxu0 %v3655
    %3772 = vmatpush.msra.mxu0 %v3647
    %3773 = vmatpush.msra.mxu0 %v3639
    %3774 = vmatpush.msra.mxu0 %v3631
    %3775 = vmatpush.msra.mxu0 %v3623
    %3776 = vmatpush.msra.mxu0 %v3615
    %3777 = vmatmul.f32.gmra.mxu0 %v3614
    %v3778 = vpop.f32.mrf.mxu0
    %v3779 = vadd.f32 %v3745, %v3778
    %3780 = vdwg.mxu0
    %3781 = vmatpush.msra.mxu0 %v3736
    %3782 = vmatpush.msra.mxu0 %v3728
    %3783 = vmatpush.msra.mxu0 %v3720
    %3784 = vmatpush.msra.mxu0 %v3712
    %3785 = vmatpush.msra.mxu0 %v3704
    %3786 = vmatpush.msra.mxu0 %v3696
    %3787 = vmatpush.msra.mxu0 %v3688
    %3788 = vmatpush.msra.mxu0 %v3680
    %3789 = vmatpush.msra.mxu0 %v3672
    %3790 = vmatpush.msra.mxu0 %v3664
    %3791 = vmatpush.msra.mxu0 %v3656
    %3792 = vmatpush.msra.mxu0 %v3648
    %3793 = vmatpush.msra.mxu0 %v3640
    %3794 = vmatpush.msra.mxu0 %v3632
    %3795 = vmatpush.msra.mxu0 %v3624
    %3796 = vmatpush.msra.mxu0 %v3616
    %3797 = vmatmul.f32.gmra.mxu0 %v3614
    %v3798 = vpop.f32.mrf.mxu0
    %v3799 = vadd.f32 %v3746, %v3798
    %3800 = vdwg.mxu0
    %3801 = vmatpush.msra.mxu0 %v3737
    %3802 = vmatpush.msra.mxu0 %v3729
    %3803 = vmatpush.msra.mxu0 %v3721
    %3804 = vmatpush.msra.mxu0 %v3713
    %3805 = vmatpush.msra.mxu0 %v3705
    %3806 = vmatpush.msra.mxu0 %v3697
    %3807 = vmatpush.msra.mxu0 %v3689
    %3808 = vmatpush.msra.mxu0 %v3681
    %3809 = vmatpush.msra.mxu0 %v3673
    %3810 = vmatpush.msra.mxu0 %v3665
    %3811 = vmatpush.msra.mxu0 %v3657
    %3812 = vmatpush.msra.mxu0 %v3649
    %3813 = vmatpush.msra.mxu0 %v3641
    %3814 = vmatpush.msra.mxu0 %v3633
    %3815 = vmatpush.msra.mxu0 %v3625
    %3816 = vmatpush.msra.mxu0 %v3617
    %3817 = vmatmul.f32.gmra.mxu0 %v3614
    %v3818 = vpop.f32.mrf.mxu0
    %v3819 = vadd.f32 %v3747, %v3818
    %3820 = vdwg.mxu0
    %3821 = vmatpush.msra.mxu0 %v3738
    %3822 = vmatpush.msra.mxu0 %v3730
    %3823 = vmatpush.msra.mxu0 %v3722
    %3824 = vmatpush.msra.mxu0 %v3714
    %3825 = vmatpush.msra.mxu0 %v3706
    %3826 = vmatpush.msra.mxu0 %v3698
    %3827 = vmatpush.msra.mxu0 %v3690
    %3828 = vmatpush.msra.mxu0 %v3682
    %3829 = vmatpush.msra.mxu0 %v3674
    %3830 = vmatpush.msra.mxu0 %v3666
    %3831 = vmatpush.msra.mxu0 %v3658
    %3832 = vmatpush.msra.mxu0 %v3650
    %3833 = vmatpush.msra.mxu0 %v3642
    %3834 = vmatpush.msra.mxu0 %v3634
    %3835 = vmatpush.msra.mxu0 %v3626
    %3836 = vmatpush.msra.mxu0 %v3618
    %3837 = vmatmul.f32.gmra.mxu0 %v3614
    %v3838 = vpop.f32.mrf.mxu0
    %v3839 = vadd.f32 %v3748, %v3838
    %3840 = vdwg.mxu0
    %3841 = vmatpush.msra.mxu0 %v3739
    %3842 = vmatpush.msra.mxu0 %v3731
    %3843 = vmatpush.msra.mxu0 %v3723
    %3844 = vmatpush.msra.mxu0 %v3715
    %3845 = vmatpush.msra.mxu0 %v3707
    %3846 = vmatpush.msra.mxu0 %v3699
    %3847 = vmatpush.msra.mxu0 %v3691
    %3848 = vmatpush.msra.mxu0 %v3683
    %3849 = vmatpush.msra.mxu0 %v3675
    %3850 = vmatpush.msra.mxu0 %v3667
    %3851 = vmatpush.msra.mxu0 %v3659
    %3852 = vmatpush.msra.mxu0 %v3651
    %3853 = vmatpush.msra.mxu0 %v3643
    %3854 = vmatpush.msra.mxu0 %v3635
    %3855 = vmatpush.msra.mxu0 %v3627
    %3856 = vmatpush.msra.mxu0 %v3619
    %3857 = vmatmul.f32.gmra.mxu0 %v3614
    %v3858 = vpop.f32.mrf.mxu0
    %v3859 = vadd.f32 %v3749, %v3858
    %3860 = vdwg.mxu0
    %3861 = vmatpush.msra.mxu0 %v3740
    %3862 = vmatpush.msra.mxu0 %v3732
    %3863 = vmatpush.msra.mxu0 %v3724
    %3864 = vmatpush.msra.mxu0 %v3716
    %3865 = vmatpush.msra.mxu0 %v3708
    %3866 = vmatpush.msra.mxu0 %v3700
    %3867 = vmatpush.msra.mxu0 %v3692
    %3868 = vmatpush.msra.mxu0 %v3684
    %3869 = vmatpush.msra.mxu0 %v3676
    %3870 = vmatpush.msra.mxu0 %v3668
    %3871 = vmatpush.msra.mxu0 %v3660
    %3872 = vmatpush.msra.mxu0 %v3652
    %3873 = vmatpush.msra.mxu0 %v3644
    %3874 = vmatpush.msra.mxu0 %v3636
    %3875 = vmatpush.msra.mxu0 %v3628
    %3876 = vmatpush.msra.mxu0 %v3620
    %3877 = vmatmul.f32.gmra.mxu0 %v3614
    %v3878 = vpop.f32.mrf.mxu0
    %v3879 = vadd.f32 %v3750, %v3878
    %3880 = vdwg.mxu0
    %3881 = vmatpush.msra.mxu0 %v3741
    %3882 = vmatpush.msra.mxu0 %v3733
    %3883 = vmatpush.msra.mxu0 %v3725
    %3884 = vmatpush.msra.mxu0 %v3717
    %3885 = vmatpush.msra.mxu0 %v3709
    %3886 = vmatpush.msra.mxu0 %v3701
    %3887 = vmatpush.msra.mxu0 %v3693
    %3888 = vmatpush.msra.mxu0 %v3685
    %3889 = vmatpush.msra.mxu0 %v3677
    %3890 = vmatpush.msra.mxu0 %v3669
    %3891 = vmatpush.msra.mxu0 %v3661
    %3892 = vmatpush.msra.mxu0 %v3653
    %3893 = vmatpush.msra.mxu0 %v3645
    %3894 = vmatpush.msra.mxu0 %v3637
    %3895 = vmatpush.msra.mxu0 %v3629
    %3896 = vmatpush.msra.mxu0 %v3621
    %3897 = vmatmul.f32.gmra.mxu0 %v3614
    %v3898 = vpop.f32.mrf.mxu0
    %v3899 = vadd.f32 %v3751, %v3898
    %3900 = vdwg.mxu0
    %3901 = vmatpush.msra.mxu0 %v3742
    %3902 = vmatpush.msra.mxu0 %v3734
    %3903 = vmatpush.msra.mxu0 %v3726
    %3904 = vmatpush.msra.mxu0 %v3718
    %3905 = vmatpush.msra.mxu0 %v3710
    %3906 = vmatpush.msra.mxu0 %v3702
    %3907 = vmatpush.msra.mxu0 %v3694
    %3908 = vmatpush.msra.mxu0 %v3686
    %3909 = vmatpush.msra.mxu0 %v3678
    %3910 = vmatpush.msra.mxu0 %v3670
    %3911 = vmatpush.msra.mxu0 %v3662
    %3912 = vmatpush.msra.mxu0 %v3654
    %3913 = vmatpush.msra.mxu0 %v3646
    %3914 = vmatpush.msra.mxu0 %v3638
    %3915 = vmatpush.msra.mxu0 %v3630
    %3916 = vmatpush.msra.mxu0 %v3622
    %3917 = vmatmul.f32.gmra.mxu0 %v3614
    %v3918 = vpop.f32.mrf.mxu0
    %v3919 = vadd.f32 %v3752, %v3918
    %3920 = vdwg.mxu0
    %v3929 = vrot.slane %v3799, 6
    %v3930 = vrot.slane %v3819, 4
    %v3931 = vrot.slane %v3839, 2
    %v3932 = vrot.slane %v3879, 6
    %v3933 = vrot.slane %v3899, 4
    %v3934 = vrot.slane %v3919, 2
    %v3935 = vsel %vm315, %v3779, %v3929
    %vm3936 = vcmask 1045508
    %v3937 = vsel %vm3936, %v3930, %v3931
    %vm3938 = vcmask 1043456
    %v3939 = vsel %vm3938, %v3935, %v3937
    %v3940 = vsel %vm315, %v3859, %v3932
    %v3941 = vsel %vm3936, %v3933, %v3934
    %v3942 = vsel %vm3938, %v3940, %v3941
    %3945 = vst [vmem:[#allocation2] sm:$0xff] %v3939
    %3946 = vst [vmem:[#allocation2 + $0x8] sm:$0xff] %v3942
    // Predicated region
    $region78: #{vit_forward.1} parent=1 // pred_check
      _
    $region79: #{vit_forward.1} parent=1 // pred_check_branch
      %3948 = sbr.rel (0) target = $region81
    $region80: #{vit_forward.1} parent=1 // pred_region
      %3950 = vsyncadd [#allocation3], 0
      %s3952 = sshll.u32 [#allocation2], 4
      %s3953 = int_to_ptr.vmem [resolvable:$true] %s3952
      %s3954 = sshll.u32 %s19, 4
      %s3955 = int_to_ptr.hbm [resolvable:$true] %s3954
      %3957 = dma.vmem_to_hbm [thread:$0]  %s3953, 256, %s3955, [#allocation3]
    $region81: #{vit_forward.1} parent=1 // pred_fallthru
      _
    // Predicated region
    $region82: #{vit_forward.1} parent=1 // pred_check
      _
    $region83: #{vit_forward.1} parent=1 // pred_check_branch
      %3959 = sbr.rel (0) target = $region85
    $region84: #{vit_forward.1} parent=1 // pred_region
      %3961 = dma.done [#allocation3], 256
    $region85: #{vit_forward.1} parent=1 // pred_fallthru
      _
    %3962 = vsyncpa [#allocation3], 1

</llo_original>
